<compile_context>
chip_gen: v6e
topology: v6e:2x2x1
jax: 0.10.0
libtpu: 0.0.40
codegen_flags: <defaults>
</compile_context>

<pallas_src>
import functools
import jax
import jax.numpy as jnp
from jax.experimental import pallas as pl
from jax.experimental.pallas import tpu as pltpu

# ---- small synthetic configuration (real model: CF=512, FEAT_DIM=2048) ------
B = 2            # batch
CIN = 3          # image channels
H = W = 16       # spatial
CF = 32          # stand-in for resnet34 fe_out_planes
FEAT_DIM = 64    # feat_dim, must be divisible by 8
HDIM_T = 32      # config['hyper_dim_t']
HDIM_R = 32      # config['hyper_dim_rot']
DROPRATE = 0.5

K_PAD = ((CIN * 9 + 7) // 8) * 8            # pad im2col K (27 -> 32)
TILE_M = 256                                # patch-row tile (grid axis)
N_BLK = 8                                   # hyper output blocks (3 trans + 4 rot + 1 pad)
HP_T = ((HDIM_T + 1 + 127) // 128) * 128    # lane-aligned hyper block width (translation)
HP_R = ((HDIM_R + 1 + 127) // 128) * 128    # lane-aligned hyper block width (rotation)


def _swish(v):
    # x * sigmoid(x), kept in f32 (v5e has no bf16 VPU/EUP)
    return v * (1.0 / (1.0 + jnp.exp(-v)))


def hyper_atloc_kernel(
    # streamed conv inputs
    patches_ref, pool_ref,
    # backbone stand-in
    conv_w_ref, conv_b_ref, fe_w_ref, fe_b_ref,
    # AttentionBlock
    g_w_ref, g_b_ref, th_w_ref, th_b_ref, ph_w_ref, ph_b_ref, aw_w_ref, aw_b_ref,
    # translation hyper branch
    tproj_w_ref, tproj_b_ref, tfc2_w_ref, tfc2_b_ref, th2_w_ref, th2_b_ref,
    int_w_ref, int_b_ref,
    # rotation hyper branch
    rproj_w_ref, rproj_b_ref, rfc2_w_ref, rfc2_b_ref, rh2_w_ref, rh2_b_ref,
    inr_w_ref, inr_b_ref,
    # fused direct regressor head + dropout mask
    head_w_ref, head_b_ref, dropmask_ref,
    out_ref, pooled_acc,
    *, droprate):
    step = pl.program_id(0)

    @pl.when(step == 0)
    def _init():
        pooled_acc[...] = jnp.zeros_like(pooled_acc)

    # ---- feature_extractor stand-in: 3x3 conv (im2col, bf16 in / f32 acc) + ReLU
    #      + AdaptiveAvgPool2d(1) done as a pooling-matrix matmul, accumulated.
    # TODO(synk): the pretrained ResNet34 conv trunk is not reproduced; only the
    # head structure (conv / ReLU / global-avg-pool / fc) is modeled here.
    conv = jnp.dot(patches_ref[...], conv_w_ref[...],
                   preferred_element_type=jnp.float32) + conv_b_ref[...]
    conv = jnp.maximum(conv, 0.0)
    # pool has 1/(H*W) on this sample's rows and 0 on padding rows.
    pooled_acc[...] += jnp.dot(pool_ref[...], conv, preferred_element_type=jnp.float32)

    @pl.when(step == pl.num_programs(0) - 1)
    def _head():
        def dot(a, w_ref, b_ref):
            return jnp.dot(a, w_ref[...], preferred_element_type=jnp.float32) + b_ref[...]

        bsz = pooled_acc.shape[0]

        # ---- fe.fc + F.relu -------------------------------------------------
        x = jnp.dot(pooled_acc[...].astype(jnp.bfloat16), fe_w_ref[...],
                    preferred_element_type=jnp.float32) + fe_b_ref[...]
        x = jnp.maximum(x, 0.0)

        # ---- AttentionBlock --------------------------------------------------
        xb = x.astype(jnp.bfloat16)
        g = jnp.dot(xb, g_w_ref[...], preferred_element_type=jnp.float32) + g_b_ref[...]
        th = jnp.dot(xb, th_w_ref[...], preferred_element_type=jnp.float32) + th_b_ref[...]
        ph = jnp.dot(xb, ph_w_ref[...], preferred_element_type=jnp.float32) + ph_b_ref[...]
        f = ph[:, :, None] * th[:, None, :]                  # (B, D/8, D/8) outer product
        f = f - jnp.max(f, axis=-1, keepdims=True)
        e = jnp.exp(f)
        f_div_c = e / jnp.sum(e, axis=-1, keepdims=True)     # softmax over last dim
        y = jnp.einsum('bij,bjk->bik', f_div_c, g[:, :, None],
                       preferred_element_type=jnp.float32)[:, :, 0]       # (B, D/8)
        x = jnp.dot(y.astype(jnp.bfloat16), aw_w_ref[...],
                    preferred_element_type=jnp.float32) + aw_b_ref[...] + x

        # ---- translation hypernetwork branch ---------------------------------
        t_input = dot(x, tproj_w_ref, tproj_b_ref)
        h2_t = _swish(dot(t_input, tfc2_w_ref, tfc2_b_ref))
        w_o_t = dot(h2_t, th2_w_ref, th2_b_ref)              # (B, N_BLK*HP_T), aligned blocks
        x_in_t = dot(x, int_w_ref, int_b_ref)                # (B, HP_T); col HDIM_T == 1.0
        hp_t = x_in_t.shape[1]
        # per-sample hyper linear: p[b, j] = sum_i x_in_ext[b, i] * w_o[b, j, i]
        p_t = jnp.sum(w_o_t.reshape(bsz, -1, hp_t) * x_in_t[:, None, :], axis=-1)   # (B, 8)

        # ---- rotation hypernetwork branch -------------------------------------
        r_input = dot(x, rproj_w_ref, rproj_b_ref)
        h2_r = _swish(dot(r_input, rfc2_w_ref, rfc2_b_ref))
        w_o_r = dot(h2_r, rh2_w_ref, rh2_b_ref)
        x_in_r = dot(x, inr_w_ref, inr_b_ref)
        hp_r = x_in_r.shape[1]
        p_r = jnp.sum(w_o_r.reshape(bsz, -1, hp_r) * x_in_r[:, None, :], axis=-1)   # (B, 8)

        # ---- dropout (torch F.dropout defaults to training=True) --------------
        # TODO(synk): torch's dropout RNG stream cannot be reproduced; the wrapper
        # draws a deterministic keep mask with jax.random instead of on-chip PRNG.
        if droprate > 0.0:
            x = x * dropmask_ref[...]

        # ---- fused fc_xyz / fc_wpqr head (cols 0-2 xyz, 3-6 wpqr, 7 zero pad) ---
        head = jnp.dot(x, head_w_ref[...], preferred_element_type=jnp.float32) + head_b_ref[...]
        out_ref[...] = head + p_t + p_r


# ---------------------------- parameter setup (glue) --------------------------
def _lin(k, fan_in, fan_out):
    # kaiming_normal_ on a torch Linear weight (fan_in = in_features); bias = 0.
    # Stored pre-transposed as (in_features, out_features).
    w = jax.random.normal(k, (fan_in, fan_out), jnp.float32) * jnp.sqrt(2.0 / fan_in)
    return w, jnp.zeros((1, fan_out), jnp.float32)


def _pad_hyper(w, bias, hdim, n_out, hp, block_off):
    """Re-lay out the hypernet head from torch's w_o.view(B, hdim+1, n_out) column
    order (i*n_out + j) into N_BLK lane-aligned blocks of width hp: column
    block_off*hp + j*hp + i holds output j's weight for input i (i == hdim is its
    bias row); all padding columns are zero."""
    perm = jnp.array([i * n_out + j for j in range(n_out) for i in range(hdim + 1)],
                     dtype=jnp.int32)
    wp = w[:, perm].reshape(w.shape[0], n_out, hdim + 1)
    bp = bias[:, perm].reshape(1, n_out, hdim + 1)
    pad = ((0, 0), (block_off, N_BLK - n_out - block_off), (0, hp - (hdim + 1)))
    return (jnp.pad(wp, pad).reshape(w.shape[0], N_BLK * hp),
            jnp.pad(bp, pad).reshape(1, N_BLK * hp))


def _pad_in(w, bias, hdim, hp):
    """Pad hyper_in_* so its output is [x_in, 1.0, 0, ...]: the trailing 1 supplies
    the per-output bias lane of the hyper linear; padding lanes stay 0."""
    wp = jnp.pad(w, ((0, 0), (0, hp - hdim)))
    bp = jnp.pad(bias, ((0, 0), (0, hp - hdim))).at[0, hdim].set(1.0)
    return wp, bp


def init_params(key):
    keys = jax.random.split(key, 16)

    conv_w, conv_b = _lin(keys[0], CIN * 9, CF)
    conv_w = jnp.pad(conv_w, ((0, K_PAD - CIN * 9), (0, 0))).astype(jnp.bfloat16)

    def bf16_lin(k, fi, fo):
        w, b = _lin(k, fi, fo)
        return w.astype(jnp.bfloat16), b

    xyz_w, xyz_b = _lin(keys[14], FEAT_DIM, 3)
    wpqr_w, wpqr_b = _lin(keys[15], FEAT_DIM, 4)
    head_w = jnp.concatenate([xyz_w, wpqr_w, jnp.zeros((FEAT_DIM, 1), jnp.float32)], axis=1)
    head_b = jnp.concatenate([xyz_b, wpqr_b, jnp.zeros((1, 1), jnp.float32)], axis=1)

    return {
        'conv':      (conv_w, conv_b),
        'fe_fc':     bf16_lin(keys[1], CF, FEAT_DIM),
        'att_g':     bf16_lin(keys[2], FEAT_DIM, FEAT_DIM // 8),
        'att_theta': bf16_lin(keys[3], FEAT_DIM, FEAT_DIM // 8),
        'att_phi':   bf16_lin(keys[4], FEAT_DIM, FEAT_DIM // 8),
        'att_W':     bf16_lin(keys[5], FEAT_DIM // 8, FEAT_DIM),
        't_proj':    _lin(keys[6], FEAT_DIM, HDIM_T),
        't_fc2':     _lin(keys[7], HDIM_T, HDIM_T),
        't_h2':      _pad_hyper(*_lin(keys[8], HDIM_T, 3 * (HDIM_T + 1)), HDIM_T, 3, HP_T, 0),
        'in_t':      _pad_in(*_lin(keys[9], FEAT_DIM, HDIM_T), HDIM_T, HP_T),
        'r_proj':    _lin(keys[10], FEAT_DIM, HDIM_R),
        'r_fc2':     _lin(keys[11], HDIM_R, HDIM_R),
        'r_h2':      _pad_hyper(*_lin(keys[12], HDIM_R, 4 * (HDIM_R + 1)), HDIM_R, 4, HP_R, 3),
        'in_r':      _pad_in(*_lin(keys[13], FEAT_DIM, HDIM_R), HDIM_R, HP_R),
        'head':      (head_w, head_b),
    }


def im2col_3x3(x):
    # x: (B, C, H, W) NCHW; 3x3 conv, stride 1, pad 1; rows ordered (b, h, w).
    b, c, h, w = x.shape
    xp = jnp.pad(x, ((0, 0), (0, 0), (1, 1), (1, 1)))
    pats = jnp.stack([xp[:, :, dh:dh + h, dw:dw + w]
                      for dh in range(3) for dw in range(3)], axis=2)   # (B, C, 9, H, W)
    return pats.transpose(0, 3, 4, 1, 2).reshape(b * h * w, c * 9)      # (B*H*W, C*9)


@jax.jit
def hyper_atloc_forward(x, params, drop_key):
    b, _, h, w = x.shape
    hw = h * w
    patches = im2col_3x3(x)
    m, k = patches.shape
    m_pad = ((m + TILE_M - 1) // TILE_M) * TILE_M
    patches = jnp.pad(patches, ((0, m_pad - m), (0, K_PAD - k))).astype(jnp.bfloat16)

    # global-average-pool as a matmul: pool[i, r] = 1/hw iff row r belongs to sample i
    row_batch = jnp.arange(m_pad) // hw
    pool = (row_batch[None, :] == jnp.arange(b)[:, None]).astype(jnp.float32) * (1.0 / hw)

    if DROPRATE > 0.0:
        keep = jax.random.bernoulli(drop_key, 1.0 - DROPRATE, (b, FEAT_DIM))
        dropmask = keep.astype(jnp.float32) * (1.0 / (1.0 - DROPRATE))
    else:
        dropmask = jnp.ones((b, FEAT_DIM), jnp.float32)

    inputs = [
        patches, pool,
        *params['conv'], *params['fe_fc'],
        *params['att_g'], *params['att_theta'], *params['att_phi'], *params['att_W'],
        *params['t_proj'], *params['t_fc2'], *params['t_h2'], *params['in_t'],
        *params['r_proj'], *params['r_fc2'], *params['r_h2'], *params['in_r'],
        *params['head'], dropmask,
    ]

    def resident(a):   # weight / bias / mask: full block, same index every grid step
        nd = a.ndim
        return pl.BlockSpec(a.shape, lambda step, _nd=nd: (0,) * _nd)

    in_specs = ([pl.BlockSpec((TILE_M, K_PAD), lambda step: (step, 0)),
                 pl.BlockSpec((b, TILE_M), lambda step: (0, step))]
                + [resident(a) for a in inputs[2:]])

    out = pl.pallas_call(
        functools.partial(hyper_atloc_kernel, droprate=DROPRATE),
        out_shape=jax.ShapeDtypeStruct((b, 8), jnp.float32),
        grid=(m_pad // TILE_M,),
        in_specs=in_specs,
        out_specs=pl.BlockSpec((b, 8), lambda step: (0, 0)),
        scratch_shapes=[pltpu.VMEM((b, CF), jnp.float32)],
        compiler_params=pltpu.CompilerParams(
            dimension_semantics=("arbitrary",),   # row tiles accumulate into scratch
            vmem_limit_bytes=48 * 1024 * 1024),
    )(*inputs)
    return out[:, :7]


if __name__ == "__main__":
    key = jax.random.PRNGKey(0)
    kx, kp, kd = jax.random.split(key, 3)
    x = jax.random.normal(kx, (B, CIN, H, W), jnp.float32)
    params = init_params(kp)
    out = jax.block_until_ready(hyper_atloc_forward(x, params, kd))
    assert out.shape == (B, 7) and out.dtype == jnp.float32
    print("KERNEL_OK")
</pallas_src>

<mosaic_0001>
module attributes {stable_mosaic.version = 11 : i64} {
  func.func @hyper_atloc_kernel(%arg0: i32, %arg1: memref<256x32xbf16, #tpu.memory_space<vmem>>, %arg2: memref<2x256xf32, #tpu.memory_space<vmem>>, %arg3: memref<32x32xbf16, #tpu.memory_space<vmem>>, %arg4: memref<1x32xf32, #tpu.memory_space<vmem>>, %arg5: memref<32x64xbf16, #tpu.memory_space<vmem>>, %arg6: memref<1x64xf32, #tpu.memory_space<vmem>>, %arg7: memref<64x8xbf16, #tpu.memory_space<vmem>>, %arg8: memref<1x8xf32, #tpu.memory_space<vmem>>, %arg9: memref<64x8xbf16, #tpu.memory_space<vmem>>, %arg10: memref<1x8xf32, #tpu.memory_space<vmem>>, %arg11: memref<64x8xbf16, #tpu.memory_space<vmem>>, %arg12: memref<1x8xf32, #tpu.memory_space<vmem>>, %arg13: memref<8x64xbf16, #tpu.memory_space<vmem>>, %arg14: memref<1x64xf32, #tpu.memory_space<vmem>>, %arg15: memref<64x32xf32, #tpu.memory_space<vmem>>, %arg16: memref<1x32xf32, #tpu.memory_space<vmem>>, %arg17: memref<32x32xf32, #tpu.memory_space<vmem>>, %arg18: memref<1x32xf32, #tpu.memory_space<vmem>>, %arg19: memref<32x1024xf32, #tpu.memory_space<vmem>>, %arg20: memref<1x1024xf32, #tpu.memory_space<vmem>>, %arg21: memref<64x128xf32, #tpu.memory_space<vmem>>, %arg22: memref<1x128xf32, #tpu.memory_space<vmem>>, %arg23: memref<64x32xf32, #tpu.memory_space<vmem>>, %arg24: memref<1x32xf32, #tpu.memory_space<vmem>>, %arg25: memref<32x32xf32, #tpu.memory_space<vmem>>, %arg26: memref<1x32xf32, #tpu.memory_space<vmem>>, %arg27: memref<32x1024xf32, #tpu.memory_space<vmem>>, %arg28: memref<1x1024xf32, #tpu.memory_space<vmem>>, %arg29: memref<64x128xf32, #tpu.memory_space<vmem>>, %arg30: memref<1x128xf32, #tpu.memory_space<vmem>>, %arg31: memref<64x8xf32, #tpu.memory_space<vmem>>, %arg32: memref<1x8xf32, #tpu.memory_space<vmem>>, %arg33: memref<2x64xf32, #tpu.memory_space<vmem>>, %arg34: memref<2x8xf32, #tpu.memory_space<vmem>>, %arg35: memref<2x32xf32, #tpu.memory_space<vmem>>) attributes {dimension_semantics = [#tpu.dimension_semantics<arbitrary>], iteration_bounds = array<i64: 2>, scalar_prefetch = 0 : i64, scratch_operands = 1 : i64, tpu.core_type = #tpu.core_type<tc>, window_params = [{transform_indices = @transform_0, window_bounds = array<i64: 256, 32>}, {transform_indices = @transform_1, window_bounds = array<i64: 2, 256>}, {pipeline_mode = #tpu.pipeline_mode<synchronous>, transform_indices = @transform_2, window_bounds = array<i64: 32, 32>}, {pipeline_mode = #tpu.pipeline_mode<synchronous>, transform_indices = @transform_3, window_bounds = array<i64: 1, 32>}, {pipeline_mode = #tpu.pipeline_mode<synchronous>, transform_indices = @transform_4, window_bounds = array<i64: 32, 64>}, {pipeline_mode = #tpu.pipeline_mode<synchronous>, transform_indices = @transform_5, window_bounds = array<i64: 1, 64>}, {pipeline_mode = #tpu.pipeline_mode<synchronous>, transform_indices = @transform_6, window_bounds = array<i64: 64, 8>}, {pipeline_mode = #tpu.pipeline_mode<synchronous>, transform_indices = @transform_7, window_bounds = array<i64: 1, 8>}, {pipeline_mode = #tpu.pipeline_mode<synchronous>, transform_indices = @transform_8, window_bounds = array<i64: 64, 8>}, {pipeline_mode = #tpu.pipeline_mode<synchronous>, transform_indices = @transform_9, window_bounds = array<i64: 1, 8>}, {pipeline_mode = #tpu.pipeline_mode<synchronous>, transform_indices = @transform_10, window_bounds = array<i64: 64, 8>}, {pipeline_mode = #tpu.pipeline_mode<synchronous>, transform_indices = @transform_11, window_bounds = array<i64: 1, 8>}, {pipeline_mode = #tpu.pipeline_mode<synchronous>, transform_indices = @transform_12, window_bounds = array<i64: 8, 64>}, {pipeline_mode = #tpu.pipeline_mode<synchronous>, transform_indices = @transform_13, window_bounds = array<i64: 1, 64>}, {pipeline_mode = #tpu.pipeline_mode<synchronous>, transform_indices = @transform_14, window_bounds = array<i64: 64, 32>}, {pipeline_mode = #tpu.pipeline_mode<synchronous>, transform_indices = @transform_15, window_bounds = array<i64: 1, 32>}, {pipeline_mode = #tpu.pipeline_mode<synchronous>, transform_indices = @transform_16, window_bounds = array<i64: 32, 32>}, {pipeline_mode = #tpu.pipeline_mode<synchronous>, transform_indices = @transform_17, window_bounds = array<i64: 1, 32>}, {pipeline_mode = #tpu.pipeline_mode<synchronous>, transform_indices = @transform_18, window_bounds = array<i64: 32, 1024>}, {pipeline_mode = #tpu.pipeline_mode<synchronous>, transform_indices = @transform_19, window_bounds = array<i64: 1, 1024>}, {pipeline_mode = #tpu.pipeline_mode<synchronous>, transform_indices = @transform_20, window_bounds = array<i64: 64, 128>}, {pipeline_mode = #tpu.pipeline_mode<synchronous>, transform_indices = @transform_21, window_bounds = array<i64: 1, 128>}, {pipeline_mode = #tpu.pipeline_mode<synchronous>, transform_indices = @transform_22, window_bounds = array<i64: 64, 32>}, {pipeline_mode = #tpu.pipeline_mode<synchronous>, transform_indices = @transform_23, window_bounds = array<i64: 1, 32>}, {pipeline_mode = #tpu.pipeline_mode<synchronous>, transform_indices = @transform_24, window_bounds = array<i64: 32, 32>}, {pipeline_mode = #tpu.pipeline_mode<synchronous>, transform_indices = @transform_25, window_bounds = array<i64: 1, 32>}, {pipeline_mode = #tpu.pipeline_mode<synchronous>, transform_indices = @transform_26, window_bounds = array<i64: 32, 1024>}, {pipeline_mode = #tpu.pipeline_mode<synchronous>, transform_indices = @transform_27, window_bounds = array<i64: 1, 1024>}, {pipeline_mode = #tpu.pipeline_mode<synchronous>, transform_indices = @transform_28, window_bounds = array<i64: 64, 128>}, {pipeline_mode = #tpu.pipeline_mode<synchronous>, transform_indices = @transform_29, window_bounds = array<i64: 1, 128>}, {pipeline_mode = #tpu.pipeline_mode<synchronous>, transform_indices = @transform_30, window_bounds = array<i64: 64, 8>}, {pipeline_mode = #tpu.pipeline_mode<synchronous>, transform_indices = @transform_31, window_bounds = array<i64: 1, 8>}, {pipeline_mode = #tpu.pipeline_mode<synchronous>, transform_indices = @transform_32, window_bounds = array<i64: 2, 64>}, {pipeline_mode = #tpu.pipeline_mode<synchronous>, transform_indices = @transform_33, window_bounds = array<i64: 2, 8>}]} {
    %c0_i32 = arith.constant 0 : i32
    %0 = arith.cmpi eq, %arg0, %c0_i32 : i32
    %1 = arith.extui %0 : i1 to i32
    %c0_i32_0 = arith.constant 0 : i32
    %2 = arith.cmpi ne, %1, %c0_i32_0 : i32
    scf.if %2 {
      %cst_15 = arith.constant 0.000000e+00 : f32
      %19 = vector.broadcast %cst_15 : f32 to vector<2x32xf32>
      %c0_16 = arith.constant 0 : index
      %c0_17 = arith.constant 0 : index
      %20 = vector.load %arg35[%c0_16, %c0_17] : memref<2x32xf32, #tpu.memory_space<vmem>>, vector<2x32xf32>
      tpu.vector_store %arg35[%c0_16, %c0_17], %19 {strides = array<i32>} : memref<2x32xf32, #tpu.memory_space<vmem>>, vector<2x32xf32>,
    } else {
    }
    %c0 = arith.constant 0 : index
    %c0_1 = arith.constant 0 : index
    %3 = vector.load %arg1[%c0, %c0_1] : memref<256x32xbf16, #tpu.memory_space<vmem>>, vector<256x32xbf16>
    %c0_2 = arith.constant 0 : index
    %c0_3 = arith.constant 0 : index
    %4 = vector.load %arg3[%c0_2, %c0_3] : memref<32x32xbf16, #tpu.memory_space<vmem>>, vector<32x32xbf16>
    %cst = arith.constant dense<0.000000e+00> : vector<256x32xf32>
    %5 = tpu.matmul %3, %4, %cst {dimension_numbers = #tpu.dot_dimension_numbers<[1], [0], [0], [1], [0, 0, 1, 1], [], []>} : vector<256x32xbf16>, vector<32x32xbf16>, vector<256x32xf32> -> vector<256x32xf32>
    %c0_4 = arith.constant 0 : index
    %c0_5 = arith.constant 0 : index
    %6 = vector.load %arg4[%c0_4, %c0_5] : memref<1x32xf32, #tpu.memory_space<vmem>>, vector<1x32xf32>
    %7 = vector.broadcast %6 : vector<1x32xf32> to vector<256x32xf32>
    %8 = arith.addf %5, %7 : vector<256x32xf32>
    %cst_6 = arith.constant 0.000000e+00 : f32
    %9 = vector.broadcast %cst_6 : f32 to vector<256x32xf32>
    %10 = arith.maximumf %8, %9 : vector<256x32xf32>
    %c0_7 = arith.constant 0 : index
    %c0_8 = arith.constant 0 : index
    %11 = vector.load %arg35[%c0_7, %c0_8] : memref<2x32xf32, #tpu.memory_space<vmem>>, vector<2x32xf32>
    %c0_9 = arith.constant 0 : index
    %c0_10 = arith.constant 0 : index
    %12 = vector.load %arg2[%c0_9, %c0_10] : memref<2x256xf32, #tpu.memory_space<vmem>>, vector<2x256xf32>
    %cst_11 = arith.constant dense<0.000000e+00> : vector<2x32xf32>
    %13 = tpu.matmul %12, %10, %cst_11 {dimension_numbers = #tpu.dot_dimension_numbers<[1], [0], [0], [1], [0, 0, 1, 1], [], []>} : vector<2x256xf32>, vector<256x32xf32>, vector<2x32xf32> -> vector<2x32xf32>
    %14 = arith.addf %11, %13 : vector<2x32xf32>
    %c0_12 = arith.constant 0 : index
    %c0_13 = arith.constant 0 : index
    %15 = vector.load %arg35[%c0_12, %c0_13] : memref<2x32xf32, #tpu.memory_space<vmem>>, vector<2x32xf32>
    tpu.vector_store %arg35[%c0_12, %c0_13], %14 {strides = array<i32>} : memref<2x32xf32, #tpu.memory_space<vmem>>, vector<2x32xf32>,
    %c1_i32 = arith.constant 1 : i32
    %16 = arith.cmpi eq, %arg0, %c1_i32 : i32
    %17 = arith.extui %16 : i1 to i32
    %c0_i32_14 = arith.constant 0 : i32
    %18 = arith.cmpi ne, %17, %c0_i32_14 : i32
    scf.if %18 {
      %c0_15 = arith.constant 0 : index
      %c0_16 = arith.constant 0 : index
      %19 = vector.load %arg35[%c0_15, %c0_16] : memref<2x32xf32, #tpu.memory_space<vmem>>, vector<2x32xf32>
      %20 = arith.truncf %19 : vector<2x32xf32> to vector<2x32xbf16>
      %c0_17 = arith.constant 0 : index
      %c0_18 = arith.constant 0 : index
      %21 = vector.load %arg5[%c0_17, %c0_18] : memref<32x64xbf16, #tpu.memory_space<vmem>>, vector<32x64xbf16>
      %cst_19 = arith.constant dense<0.000000e+00> : vector<2x64xf32>
      %22 = tpu.matmul %20, %21, %cst_19 {dimension_numbers = #tpu.dot_dimension_numbers<[1], [0], [0], [1], [0, 0, 1, 1], [], []>} : vector<2x32xbf16>, vector<32x64xbf16>, vector<2x64xf32> -> vector<2x64xf32>
      %c0_20 = arith.constant 0 : index
      %c0_21 = arith.constant 0 : index
      %23 = vector.load %arg6[%c0_20, %c0_21] : memref<1x64xf32, #tpu.memory_space<vmem>>, vector<1x64xf32>
      %24 = vector.broadcast %23 : vector<1x64xf32> to vector<2x64xf32>
      %25 = arith.addf %22, %24 : vector<2x64xf32>
      %cst_22 = arith.constant 0.000000e+00 : f32
      %26 = vector.broadcast %cst_22 : f32 to vector<2x64xf32>
      %27 = arith.maximumf %25, %26 : vector<2x64xf32>
      %28 = arith.truncf %27 : vector<2x64xf32> to vector<2x64xbf16>
      %c0_23 = arith.constant 0 : index
      %c0_24 = arith.constant 0 : index
      %29 = vector.load %arg7[%c0_23, %c0_24] : memref<64x8xbf16, #tpu.memory_space<vmem>>, vector<64x8xbf16>
      %cst_25 = arith.constant dense<0.000000e+00> : vector<2x8xf32>
      %30 = tpu.matmul %28, %29, %cst_25 {dimension_numbers = #tpu.dot_dimension_numbers<[1], [0], [0], [1], [0, 0, 1, 1], [], []>} : vector<2x64xbf16>, vector<64x8xbf16>, vector<2x8xf32> -> vector<2x8xf32>
      %c0_26 = arith.constant 0 : index
      %c0_27 = arith.constant 0 : index
      %31 = vector.load %arg8[%c0_26, %c0_27] : memref<1x8xf32, #tpu.memory_space<vmem>>, vector<1x8xf32>
      %32 = vector.broadcast %31 : vector<1x8xf32> to vector<2x8xf32>
      %33 = arith.addf %30, %32 : vector<2x8xf32>
      %c0_28 = arith.constant 0 : index
      %c0_29 = arith.constant 0 : index
      %34 = vector.load %arg9[%c0_28, %c0_29] : memref<64x8xbf16, #tpu.memory_space<vmem>>, vector<64x8xbf16>
      %cst_30 = arith.constant dense<0.000000e+00> : vector<2x8xf32>
      %35 = tpu.matmul %28, %34, %cst_30 {dimension_numbers = #tpu.dot_dimension_numbers<[1], [0], [0], [1], [0, 0, 1, 1], [], []>} : vector<2x64xbf16>, vector<64x8xbf16>, vector<2x8xf32> -> vector<2x8xf32>
      %c0_31 = arith.constant 0 : index
      %c0_32 = arith.constant 0 : index
      %36 = vector.load %arg10[%c0_31, %c0_32] : memref<1x8xf32, #tpu.memory_space<vmem>>, vector<1x8xf32>
      %37 = vector.broadcast %36 : vector<1x8xf32> to vector<2x8xf32>
      %38 = arith.addf %35, %37 : vector<2x8xf32>
      %c0_33 = arith.constant 0 : index
      %c0_34 = arith.constant 0 : index
      %39 = vector.load %arg11[%c0_33, %c0_34] : memref<64x8xbf16, #tpu.memory_space<vmem>>, vector<64x8xbf16>
      %cst_35 = arith.constant dense<0.000000e+00> : vector<2x8xf32>
      %40 = tpu.matmul %28, %39, %cst_35 {dimension_numbers = #tpu.dot_dimension_numbers<[1], [0], [0], [1], [0, 0, 1, 1], [], []>} : vector<2x64xbf16>, vector<64x8xbf16>, vector<2x8xf32> -> vector<2x8xf32>
      %c0_36 = arith.constant 0 : index
      %c0_37 = arith.constant 0 : index
      %41 = vector.load %arg12[%c0_36, %c0_37] : memref<1x8xf32, #tpu.memory_space<vmem>>, vector<1x8xf32>
      %42 = vector.broadcast %41 : vector<1x8xf32> to vector<2x8xf32>
      %43 = arith.addf %40, %42 : vector<2x8xf32>
      %44 = vector.shape_cast %43 : vector<2x8xf32> to vector<2x8x1xf32>
      %45 = vector.shape_cast %38 : vector<2x8xf32> to vector<2x1x8xf32>
      %46 = vector.broadcast %44 : vector<2x8x1xf32> to vector<2x8x8xf32>
      %47 = vector.broadcast %45 : vector<2x1x8xf32> to vector<2x8x8xf32>
      %48 = arith.mulf %46, %47 : vector<2x8x8xf32>
      %cst_38 = arith.constant dense<0xFF800000> : vector<2x8xf32>
      %49 = vector.multi_reduction <maximumf>, %48, %cst_38 [2] : vector<2x8x8xf32> to vector<2x8xf32>
      %50 = vector.shape_cast %49 : vector<2x8xf32> to vector<2x8x1xf32>
      %51 = vector.broadcast %50 : vector<2x8x1xf32> to vector<2x8x8xf32>
      %52 = arith.subf %48, %51 : vector<2x8x8xf32>
      %53 = math.exp %52 : vector<2x8x8xf32>
      %cst_39 = arith.constant dense<0.000000e+00> : vector<2x8xf32>
      %54 = vector.multi_reduction <add>, %53, %cst_39 [2] : vector<2x8x8xf32> to vector<2x8xf32>
      %55 = vector.shape_cast %54 : vector<2x8xf32> to vector<2x8x1xf32>
      %56 = vector.broadcast %55 : vector<2x8x1xf32> to vector<2x8x8xf32>
      %57 = arith.divf %53, %56 : vector<2x8x8xf32>
      %58 = vector.shape_cast %33 : vector<2x8xf32> to vector<2x8x1xf32>
      "tpu.trace_start"() <{level = 10 : i32, message = "bij,bjk->bik"}> : () -> ()
      %cst_40 = arith.constant dense<0.000000e+00> : vector<2x8x1xf32>
      %59 = tpu.matmul %57, %58, %cst_40 {dimension_numbers = #tpu.dot_dimension_numbers<[2], [1], [1], [2], [0, 0, 0, 1, 1, 2], [0], [0]>} : vector<2x8x8xf32>, vector<2x8x1xf32>, vector<2x8x1xf32> -> vector<2x8x1xf32>
      "tpu.trace_stop"() : () -> ()
      %60 = vector.shape_cast %59 : vector<2x8x1xf32> to vector<2x8xf32>
      %61 = arith.truncf %60 : vector<2x8xf32> to vector<2x8xbf16>
      %c0_41 = arith.constant 0 : index
      %c0_42 = arith.constant 0 : index
      %62 = vector.load %arg13[%c0_41, %c0_42] : memref<8x64xbf16, #tpu.memory_space<vmem>>, vector<8x64xbf16>
      %cst_43 = arith.constant dense<0.000000e+00> : vector<2x64xf32>
      %63 = tpu.matmul %61, %62, %cst_43 {dimension_numbers = #tpu.dot_dimension_numbers<[1], [0], [0], [1], [0, 0, 1, 1], [], []>} : vector<2x8xbf16>, vector<8x64xbf16>, vector<2x64xf32> -> vector<2x64xf32>
      %c0_44 = arith.constant 0 : index
      %c0_45 = arith.constant 0 : index
      %64 = vector.load %arg14[%c0_44, %c0_45] : memref<1x64xf32, #tpu.memory_space<vmem>>, vector<1x64xf32>
      %65 = vector.broadcast %64 : vector<1x64xf32> to vector<2x64xf32>
      %66 = arith.addf %63, %65 : vector<2x64xf32>
      %67 = arith.addf %66, %27 : vector<2x64xf32>
      %c0_46 = arith.constant 0 : index
      %c0_47 = arith.constant 0 : index
      %68 = vector.load %arg15[%c0_46, %c0_47] : memref<64x32xf32, #tpu.memory_space<vmem>>, vector<64x32xf32>
      %cst_48 = arith.constant dense<0.000000e+00> : vector<2x32xf32>
      %69 = tpu.matmul %67, %68, %cst_48 {dimension_numbers = #tpu.dot_dimension_numbers<[1], [0], [0], [1], [0, 0, 1, 1], [], []>} : vector<2x64xf32>, vector<64x32xf32>, vector<2x32xf32> -> vector<2x32xf32>
      %c0_49 = arith.constant 0 : index
      %c0_50 = arith.constant 0 : index
      %70 = vector.load %arg16[%c0_49, %c0_50] : memref<1x32xf32, #tpu.memory_space<vmem>>, vector<1x32xf32>
      %71 = vector.broadcast %70 : vector<1x32xf32> to vector<2x32xf32>
      %72 = arith.addf %69, %71 : vector<2x32xf32>
      %c0_51 = arith.constant 0 : index
      %c0_52 = arith.constant 0 : index
      %73 = vector.load %arg17[%c0_51, %c0_52] : memref<32x32xf32, #tpu.memory_space<vmem>>, vector<32x32xf32>
      %cst_53 = arith.constant dense<0.000000e+00> : vector<2x32xf32>
      %74 = tpu.matmul %72, %73, %cst_53 {dimension_numbers = #tpu.dot_dimension_numbers<[1], [0], [0], [1], [0, 0, 1, 1], [], []>} : vector<2x32xf32>, vector<32x32xf32>, vector<2x32xf32> -> vector<2x32xf32>
      %c0_54 = arith.constant 0 : index
      %c0_55 = arith.constant 0 : index
      %75 = vector.load %arg18[%c0_54, %c0_55] : memref<1x32xf32, #tpu.memory_space<vmem>>, vector<1x32xf32>
      %76 = vector.broadcast %75 : vector<1x32xf32> to vector<2x32xf32>
      %77 = arith.addf %74, %76 : vector<2x32xf32>
      %cst_56 = arith.constant 0.000000e+00 : f32
      %78 = vector.broadcast %cst_56 : f32 to vector<2x32xf32>
      %79 = arith.subf %78, %77 : vector<2x32xf32>
      %80 = math.exp %79 : vector<2x32xf32>
      %cst_57 = arith.constant 1.000000e+00 : f32
      %81 = vector.broadcast %cst_57 : f32 to vector<2x32xf32>
      %82 = arith.addf %81, %80 : vector<2x32xf32>
      %cst_58 = arith.constant 1.000000e+00 : f32
      %83 = vector.broadcast %cst_58 : f32 to vector<2x32xf32>
      %84 = arith.divf %83, %82 : vector<2x32xf32>
      %85 = arith.mulf %77, %84 : vector<2x32xf32>
      %c0_59 = arith.constant 0 : index
      %c0_60 = arith.constant 0 : index
      %86 = vector.load %arg19[%c0_59, %c0_60] : memref<32x1024xf32, #tpu.memory_space<vmem>>, vector<32x1024xf32>
      %cst_61 = arith.constant dense<0.000000e+00> : vector<2x1024xf32>
      %87 = tpu.matmul %85, %86, %cst_61 {dimension_numbers = #tpu.dot_dimension_numbers<[1], [0], [0], [1], [0, 0, 1, 1], [], []>} : vector<2x32xf32>, vector<32x1024xf32>, vector<2x1024xf32> -> vector<2x1024xf32>
      %c0_62 = arith.constant 0 : index
      %c0_63 = arith.constant 0 : index
      %88 = vector.load %arg20[%c0_62, %c0_63] : memref<1x1024xf32, #tpu.memory_space<vmem>>, vector<1x1024xf32>
      %89 = vector.broadcast %88 : vector<1x1024xf32> to vector<2x1024xf32>
      %90 = arith.addf %87, %89 : vector<2x1024xf32>
      %c0_64 = arith.constant 0 : index
      %c0_65 = arith.constant 0 : index
      %91 = vector.load %arg21[%c0_64, %c0_65] : memref<64x128xf32, #tpu.memory_space<vmem>>, vector<64x128xf32>
      %cst_66 = arith.constant dense<0.000000e+00> : vector<2x128xf32>
      %92 = tpu.matmul %67, %91, %cst_66 {dimension_numbers = #tpu.dot_dimension_numbers<[1], [0], [0], [1], [0, 0, 1, 1], [], []>} : vector<2x64xf32>, vector<64x128xf32>, vector<2x128xf32> -> vector<2x128xf32>
      %c0_67 = arith.constant 0 : index
      %c0_68 = arith.constant 0 : index
      %93 = vector.load %arg22[%c0_67, %c0_68] : memref<1x128xf32, #tpu.memory_space<vmem>>, vector<1x128xf32>
      %94 = vector.broadcast %93 : vector<1x128xf32> to vector<2x128xf32>
      %95 = arith.addf %92, %94 : vector<2x128xf32>
      %96 = vector.shape_cast %90 : vector<2x1024xf32> to vector<2x8x128xf32>
      %97 = vector.shape_cast %95 : vector<2x128xf32> to vector<2x1x128xf32>
      %98 = vector.broadcast %97 : vector<2x1x128xf32> to vector<2x8x128xf32>
      %99 = arith.mulf %96, %98 : vector<2x8x128xf32>
      %cst_69 = arith.constant dense<0.000000e+00> : vector<2x8xf32>
      %100 = vector.multi_reduction <add>, %99, %cst_69 [2] : vector<2x8x128xf32> to vector<2x8xf32>
      %c0_70 = arith.constant 0 : index
      %c0_71 = arith.constant 0 : index
      %101 = vector.load %arg23[%c0_70, %c0_71] : memref<64x32xf32, #tpu.memory_space<vmem>>, vector<64x32xf32>
      %cst_72 = arith.constant dense<0.000000e+00> : vector<2x32xf32>
      %102 = tpu.matmul %67, %101, %cst_72 {dimension_numbers = #tpu.dot_dimension_numbers<[1], [0], [0], [1], [0, 0, 1, 1], [], []>} : vector<2x64xf32>, vector<64x32xf32>, vector<2x32xf32> -> vector<2x32xf32>
      %c0_73 = arith.constant 0 : index
      %c0_74 = arith.constant 0 : index
      %103 = vector.load %arg24[%c0_73, %c0_74] : memref<1x32xf32, #tpu.memory_space<vmem>>, vector<1x32xf32>
      %104 = vector.broadcast %103 : vector<1x32xf32> to vector<2x32xf32>
      %105 = arith.addf %102, %104 : vector<2x32xf32>
      %c0_75 = arith.constant 0 : index
      %c0_76 = arith.constant 0 : index
      %106 = vector.load %arg25[%c0_75, %c0_76] : memref<32x32xf32, #tpu.memory_space<vmem>>, vector<32x32xf32>
      %cst_77 = arith.constant dense<0.000000e+00> : vector<2x32xf32>
      %107 = tpu.matmul %105, %106, %cst_77 {dimension_numbers = #tpu.dot_dimension_numbers<[1], [0], [0], [1], [0, 0, 1, 1], [], []>} : vector<2x32xf32>, vector<32x32xf32>, vector<2x32xf32> -> vector<2x32xf32>
      %c0_78 = arith.constant 0 : index
      %c0_79 = arith.constant 0 : index
      %108 = vector.load %arg26[%c0_78, %c0_79] : memref<1x32xf32, #tpu.memory_space<vmem>>, vector<1x32xf32>
      %109 = vector.broadcast %108 : vector<1x32xf32> to vector<2x32xf32>
      %110 = arith.addf %107, %109 : vector<2x32xf32>
      %cst_80 = arith.constant 0.000000e+00 : f32
      %111 = vector.broadcast %cst_80 : f32 to vector<2x32xf32>
      %112 = arith.subf %111, %110 : vector<2x32xf32>
      %113 = math.exp %112 : vector<2x32xf32>
      %cst_81 = arith.constant 1.000000e+00 : f32
      %114 = vector.broadcast %cst_81 : f32 to vector<2x32xf32>
      %115 = arith.addf %114, %113 : vector<2x32xf32>
      %cst_82 = arith.constant 1.000000e+00 : f32
      %116 = vector.broadcast %cst_82 : f32 to vector<2x32xf32>
      %117 = arith.divf %116, %115 : vector<2x32xf32>
      %118 = arith.mulf %110, %117 : vector<2x32xf32>
      %c0_83 = arith.constant 0 : index
      %c0_84 = arith.constant 0 : index
      %119 = vector.load %arg27[%c0_83, %c0_84] : memref<32x1024xf32, #tpu.memory_space<vmem>>, vector<32x1024xf32>
      %cst_85 = arith.constant dense<0.000000e+00> : vector<2x1024xf32>
      %120 = tpu.matmul %118, %119, %cst_85 {dimension_numbers = #tpu.dot_dimension_numbers<[1], [0], [0], [1], [0, 0, 1, 1], [], []>} : vector<2x32xf32>, vector<32x1024xf32>, vector<2x1024xf32> -> vector<2x1024xf32>
      %c0_86 = arith.constant 0 : index
      %c0_87 = arith.constant 0 : index
      %121 = vector.load %arg28[%c0_86, %c0_87] : memref<1x1024xf32, #tpu.memory_space<vmem>>, vector<1x1024xf32>
      %122 = vector.broadcast %121 : vector<1x1024xf32> to vector<2x1024xf32>
      %123 = arith.addf %120, %122 : vector<2x1024xf32>
      %c0_88 = arith.constant 0 : index
      %c0_89 = arith.constant 0 : index
      %124 = vector.load %arg29[%c0_88, %c0_89] : memref<64x128xf32, #tpu.memory_space<vmem>>, vector<64x128xf32>
      %cst_90 = arith.constant dense<0.000000e+00> : vector<2x128xf32>
      %125 = tpu.matmul %67, %124, %cst_90 {dimension_numbers = #tpu.dot_dimension_numbers<[1], [0], [0], [1], [0, 0, 1, 1], [], []>} : vector<2x64xf32>, vector<64x128xf32>, vector<2x128xf32> -> vector<2x128xf32>
      %c0_91 = arith.constant 0 : index
      %c0_92 = arith.constant 0 : index
      %126 = vector.load %arg30[%c0_91, %c0_92] : memref<1x128xf32, #tpu.memory_space<vmem>>, vector<1x128xf32>
      %127 = vector.broadcast %126 : vector<1x128xf32> to vector<2x128xf32>
      %128 = arith.addf %125, %127 : vector<2x128xf32>
      %129 = vector.shape_cast %123 : vector<2x1024xf32> to vector<2x8x128xf32>
      %130 = vector.shape_cast %128 : vector<2x128xf32> to vector<2x1x128xf32>
      %131 = vector.broadcast %130 : vector<2x1x128xf32> to vector<2x8x128xf32>
      %132 = arith.mulf %129, %131 : vector<2x8x128xf32>
      %cst_93 = arith.constant dense<0.000000e+00> : vector<2x8xf32>
      %133 = vector.multi_reduction <add>, %132, %cst_93 [2] : vector<2x8x128xf32> to vector<2x8xf32>
      %c0_94 = arith.constant 0 : index
      %c0_95 = arith.constant 0 : index
      %134 = vector.load %arg33[%c0_94, %c0_95] : memref<2x64xf32, #tpu.memory_space<vmem>>, vector<2x64xf32>
      %135 = arith.mulf %67, %134 : vector<2x64xf32>
      %c0_96 = arith.constant 0 : index
      %c0_97 = arith.constant 0 : index
      %136 = vector.load %arg31[%c0_96, %c0_97] : memref<64x8xf32, #tpu.memory_space<vmem>>, vector<64x8xf32>
      %cst_98 = arith.constant dense<0.000000e+00> : vector<2x8xf32>
      %137 = tpu.matmul %135, %136, %cst_98 {dimension_numbers = #tpu.dot_dimension_numbers<[1], [0], [0], [1], [0, 0, 1, 1], [], []>} : vector<2x64xf32>, vector<64x8xf32>, vector<2x8xf32> -> vector<2x8xf32>
      %c0_99 = arith.constant 0 : index
      %c0_100 = arith.constant 0 : index
      %138 = vector.load %arg32[%c0_99, %c0_100] : memref<1x8xf32, #tpu.memory_space<vmem>>, vector<1x8xf32>
      %139 = vector.broadcast %138 : vector<1x8xf32> to vector<2x8xf32>
      %140 = arith.addf %137, %139 : vector<2x8xf32>
      %141 = arith.addf %140, %100 : vector<2x8xf32>
      %142 = arith.addf %141, %133 : vector<2x8xf32>
      %c0_101 = arith.constant 0 : index
      %c0_102 = arith.constant 0 : index
      %143 = vector.load %arg34[%c0_101, %c0_102] : memref<2x8xf32, #tpu.memory_space<vmem>>, vector<2x8xf32>
      tpu.vector_store %arg34[%c0_101, %c0_102], %142 {strides = array<i32>} : memref<2x8xf32, #tpu.memory_space<vmem>>, vector<2x8xf32>,
    } else {
    }
    return
  }
  func.func @transform_0(%arg0: i32) -> (i32, i32) {
    %c0_i32 = arith.constant 0 : i32
    %c0_i32_0 = arith.constant 0 : i32
    return %arg0, %c0_i32 : i32, i32
  }
  func.func @transform_1(%arg0: i32) -> (i32, i32) {
    %c0_i32 = arith.constant 0 : i32
    %c0_i32_0 = arith.constant 0 : i32
    return %c0_i32, %arg0 : i32, i32
  }
  func.func @transform_2(%arg0: i32) -> (i32, i32) {
    %c0_i32 = arith.constant 0 : i32
    %c0_i32_0 = arith.constant 0 : i32
    %c0_i32_1 = arith.constant 0 : i32
    return %c0_i32, %c0_i32_0 : i32, i32
  }
  func.func @transform_3(%arg0: i32) -> (i32, i32) {
    %c0_i32 = arith.constant 0 : i32
    %c0_i32_0 = arith.constant 0 : i32
    %c0_i32_1 = arith.constant 0 : i32
    return %c0_i32, %c0_i32_0 : i32, i32
  }
  func.func @transform_4(%arg0: i32) -> (i32, i32) {
    %c0_i32 = arith.constant 0 : i32
    %c0_i32_0 = arith.constant 0 : i32
    %c0_i32_1 = arith.constant 0 : i32
    return %c0_i32, %c0_i32_0 : i32, i32
  }
  func.func @transform_5(%arg0: i32) -> (i32, i32) {
    %c0_i32 = arith.constant 0 : i32
    %c0_i32_0 = arith.constant 0 : i32
    %c0_i32_1 = arith.constant 0 : i32
    return %c0_i32, %c0_i32_0 : i32, i32
  }
  func.func @transform_6(%arg0: i32) -> (i32, i32) {
    %c0_i32 = arith.constant 0 : i32
    %c0_i32_0 = arith.constant 0 : i32
    %c0_i32_1 = arith.constant 0 : i32
    return %c0_i32, %c0_i32_0 : i32, i32
  }
  func.func @transform_7(%arg0: i32) -> (i32, i32) {
    %c0_i32 = arith.constant 0 : i32
    %c0_i32_0 = arith.constant 0 : i32
    %c0_i32_1 = arith.constant 0 : i32
    return %c0_i32, %c0_i32_0 : i32, i32
  }
  func.func @transform_8(%arg0: i32) -> (i32, i32) {
    %c0_i32 = arith.constant 0 : i32
    %c0_i32_0 = arith.constant 0 : i32
    %c0_i32_1 = arith.constant 0 : i32
    return %c0_i32, %c0_i32_0 : i32, i32
  }
  func.func @transform_9(%arg0: i32) -> (i32, i32) {
    %c0_i32 = arith.constant 0 : i32
    %c0_i32_0 = arith.constant 0 : i32
    %c0_i32_1 = arith.constant 0 : i32
    return %c0_i32, %c0_i32_0 : i32, i32
  }
  func.func @transform_10(%arg0: i32) -> (i32, i32) {
    %c0_i32 = arith.constant 0 : i32
    %c0_i32_0 = arith.constant 0 : i32
    %c0_i32_1 = arith.constant 0 : i32
    return %c0_i32, %c0_i32_0 : i32, i32
  }
  func.func @transform_11(%arg0: i32) -> (i32, i32) {
    %c0_i32 = arith.constant 0 : i32
    %c0_i32_0 = arith.constant 0 : i32
    %c0_i32_1 = arith.constant 0 : i32
    return %c0_i32, %c0_i32_0 : i32, i32
  }
  func.func @transform_12(%arg0: i32) -> (i32, i32) {
    %c0_i32 = arith.constant 0 : i32
    %c0_i32_0 = arith.constant 0 : i32
    %c0_i32_1 = arith.constant 0 : i32
    return %c0_i32, %c0_i32_0 : i32, i32
  }
  func.func @transform_13(%arg0: i32) -> (i32, i32) {
    %c0_i32 = arith.constant 0 : i32
    %c0_i32_0 = arith.constant 0 : i32
    %c0_i32_1 = arith.constant 0 : i32
    return %c0_i32, %c0_i32_0 : i32, i32
  }
  func.func @transform_14(%arg0: i32) -> (i32, i32) {
    %c0_i32 = arith.constant 0 : i32
    %c0_i32_0 = arith.constant 0 : i32
    %c0_i32_1 = arith.constant 0 : i32
    return %c0_i32, %c0_i32_0 : i32, i32
  }
  func.func @transform_15(%arg0: i32) -> (i32, i32) {
    %c0_i32 = arith.constant 0 : i32
    %c0_i32_0 = arith.constant 0 : i32
    %c0_i32_1 = arith.constant 0 : i32
    return %c0_i32, %c0_i32_0 : i32, i32
  }
  func.func @transform_16(%arg0: i32) -> (i32, i32) {
    %c0_i32 = arith.constant 0 : i32
    %c0_i32_0 = arith.constant 0 : i32
    %c0_i32_1 = arith.constant 0 : i32
    return %c0_i32, %c0_i32_0 : i32, i32
  }
  func.func @transform_17(%arg0: i32) -> (i32, i32) {
    %c0_i32 = arith.constant 0 : i32
    %c0_i32_0 = arith.constant 0 : i32
    %c0_i32_1 = arith.constant 0 : i32
    return %c0_i32, %c0_i32_0 : i32, i32
  }
  func.func @transform_18(%arg0: i32) -> (i32, i32) {
    %c0_i32 = arith.constant 0 : i32
    %c0_i32_0 = arith.constant 0 : i32
    %c0_i32_1 = arith.constant 0 : i32
    return %c0_i32, %c0_i32_0 : i32, i32
  }
  func.func @transform_19(%arg0: i32) -> (i32, i32) {
    %c0_i32 = arith.constant 0 : i32
    %c0_i32_0 = arith.constant 0 : i32
    %c0_i32_1 = arith.constant 0 : i32
    return %c0_i32, %c0_i32_0 : i32, i32
  }
  func.func @transform_20(%arg0: i32) -> (i32, i32) {
    %c0_i32 = arith.constant 0 : i32
    %c0_i32_0 = arith.constant 0 : i32
    %c0_i32_1 = arith.constant 0 : i32
    return %c0_i32, %c0_i32_0 : i32, i32
  }
  func.func @transform_21(%arg0: i32) -> (i32, i32) {
    %c0_i32 = arith.constant 0 : i32
    %c0_i32_0 = arith.constant 0 : i32
    %c0_i32_1 = arith.constant 0 : i32
    return %c0_i32, %c0_i32_0 : i32, i32
  }
  func.func @transform_22(%arg0: i32) -> (i32, i32) {
    %c0_i32 = arith.constant 0 : i32
    %c0_i32_0 = arith.constant 0 : i32
    %c0_i32_1 = arith.constant 0 : i32
    return %c0_i32, %c0_i32_0 : i32, i32
  }
  func.func @transform_23(%arg0: i32) -> (i32, i32) {
    %c0_i32 = arith.constant 0 : i32
    %c0_i32_0 = arith.constant 0 : i32
    %c0_i32_1 = arith.constant 0 : i32
    return %c0_i32, %c0_i32_0 : i32, i32
  }
  func.func @transform_24(%arg0: i32) -> (i32, i32) {
    %c0_i32 = arith.constant 0 : i32
    %c0_i32_0 = arith.constant 0 : i32
    %c0_i32_1 = arith.constant 0 : i32
    return %c0_i32, %c0_i32_0 : i32, i32
  }
  func.func @transform_25(%arg0: i32) -> (i32, i32) {
    %c0_i32 = arith.constant 0 : i32
    %c0_i32_0 = arith.constant 0 : i32
    %c0_i32_1 = arith.constant 0 : i32
    return %c0_i32, %c0_i32_0 : i32, i32
  }
  func.func @transform_26(%arg0: i32) -> (i32, i32) {
    %c0_i32 = arith.constant 0 : i32
    %c0_i32_0 = arith.constant 0 : i32
    %c0_i32_1 = arith.constant 0 : i32
    return %c0_i32, %c0_i32_0 : i32, i32
  }
  func.func @transform_27(%arg0: i32) -> (i32, i32) {
    %c0_i32 = arith.constant 0 : i32
    %c0_i32_0 = arith.constant 0 : i32
    %c0_i32_1 = arith.constant 0 : i32
    return %c0_i32, %c0_i32_0 : i32, i32
  }
  func.func @transform_28(%arg0: i32) -> (i32, i32) {
    %c0_i32 = arith.constant 0 : i32
    %c0_i32_0 = arith.constant 0 : i32
    %c0_i32_1 = arith.constant 0 : i32
    return %c0_i32, %c0_i32_0 : i32, i32
  }
  func.func @transform_29(%arg0: i32) -> (i32, i32) {
    %c0_i32 = arith.constant 0 : i32
    %c0_i32_0 = arith.constant 0 : i32
    %c0_i32_1 = arith.constant 0 : i32
    return %c0_i32, %c0_i32_0 : i32, i32
  }
  func.func @transform_30(%arg0: i32) -> (i32, i32) {
    %c0_i32 = arith.constant 0 : i32
    %c0_i32_0 = arith.constant 0 : i32
    %c0_i32_1 = arith.constant 0 : i32
    return %c0_i32, %c0_i32_0 : i32, i32
  }
  func.func @transform_31(%arg0: i32) -> (i32, i32) {
    %c0_i32 = arith.constant 0 : i32
    %c0_i32_0 = arith.constant 0 : i32
    %c0_i32_1 = arith.constant 0 : i32
    return %c0_i32, %c0_i32_0 : i32, i32
  }
  func.func @transform_32(%arg0: i32) -> (i32, i32) {
    %c0_i32 = arith.constant 0 : i32
    %c0_i32_0 = arith.constant 0 : i32
    %c0_i32_1 = arith.constant 0 : i32
    return %c0_i32, %c0_i32_0 : i32, i32
  }
  func.func @transform_33(%arg0: i32) -> (i32, i32) {
    %c0_i32 = arith.constant 0 : i32
    %c0_i32_0 = arith.constant 0 : i32
    %c0_i32_1 = arith.constant 0 : i32
    return %c0_i32, %c0_i32_0 : i32, i32
  }
}

</mosaic_0001>

<llo_original>
// kernel: hyper_atloc_forward.1
$region0: #{hyper_atloc_forward.1}
  #allocation0 [shape = 'u32[]', space=smem, size = 0x4, offset = 0x4, fixed_abs, tag = 'smem constant byte address 0x4 - core index']
  #allocation1 [shape = 'u32[144,128]{1,0:T(1,128)}', space=vmem, size = 0x12000, scoped, tag = 'internal scratch']
  #allocation2 [shape = 'f32[2,32]{1,0:T(2,128)}', space=vmem, size = 0x400, scoped, tag = 'scratch operand']
  %s0 = inlined_call_operand.smem [shape: u32[34], index: -1, kind: input, shape index: {}]
  %s1 = sld [smem:[%s0]]
  %s2 = scalar_lea.smem %s0, 1
  %s3 = sld [smem:[%s2]]
  %s4 = scalar_lea.smem %s0, 2
  %s5 = sld [smem:[%s4]]
  %s6 = scalar_lea.smem %s0, 3
  %s7 = sld [smem:[%s6]]
  %s8 = scalar_lea.smem %s0, 4
  %s9 = sld [smem:[%s8]]
  %s10 = scalar_lea.smem %s0, 5
  %s11 = sld [smem:[%s10]]
  %s12 = scalar_lea.smem %s0, 6
  %s13 = sld [smem:[%s12]]
  %s14 = scalar_lea.smem %s0, 7
  %s15 = sld [smem:[%s14]]
  %s16 = scalar_lea.smem %s0, 8
  %s17 = sld [smem:[%s16]]
  %s18 = scalar_lea.smem %s0, 9
  %s19 = sld [smem:[%s18]]
  %s20 = scalar_lea.smem %s0, 10
  %s21 = sld [smem:[%s20]]
  %s22 = scalar_lea.smem %s0, 11
  %s23 = sld [smem:[%s22]]
  %s24 = scalar_lea.smem %s0, 12
  %s25 = sld [smem:[%s24]]
  %s26 = scalar_lea.smem %s0, 13
  %s27 = sld [smem:[%s26]]
  %s28 = scalar_lea.smem %s0, 14
  %s29 = sld [smem:[%s28]]
  %s30 = scalar_lea.smem %s0, 15
  %s31 = sld [smem:[%s30]]
  %s32 = scalar_lea.smem %s0, 16
  %s33 = sld [smem:[%s32]]
  %s34 = scalar_lea.smem %s0, 17
  %s35 = sld [smem:[%s34]]
  %s36 = scalar_lea.smem %s0, 18
  %s37 = sld [smem:[%s36]]
  %s38 = scalar_lea.smem %s0, 19
  %s39 = sld [smem:[%s38]]
  %s40 = scalar_lea.smem %s0, 20
  %s41 = sld [smem:[%s40]]
  %s42 = scalar_lea.smem %s0, 21
  %s43 = sld [smem:[%s42]]
  %s44 = scalar_lea.smem %s0, 22
  %s45 = sld [smem:[%s44]]
  %s46 = scalar_lea.smem %s0, 23
  %s47 = sld [smem:[%s46]]
  %s48 = scalar_lea.smem %s0, 24
  %s49 = sld [smem:[%s48]]
  %s50 = scalar_lea.smem %s0, 25
  %s51 = sld [smem:[%s50]]
  %s52 = scalar_lea.smem %s0, 26
  %s53 = sld [smem:[%s52]]
  %s54 = scalar_lea.smem %s0, 27
  %s55 = sld [smem:[%s54]]
  %s56 = scalar_lea.smem %s0, 28
  %s57 = sld [smem:[%s56]]
  %s58 = scalar_lea.smem %s0, 29
  %s59 = sld [smem:[%s58]]
  %s60 = scalar_lea.smem %s0, 30
  %s61 = sld [smem:[%s60]]
  %s62 = scalar_lea.smem %s0, 31
  %s63 = sld [smem:[%s62]]
  %s64 = scalar_lea.smem %s0, 32
  %s65 = sld [smem:[%s64]]
  %s66 = scalar_lea.smem %s0, 33
  %s67 = sld [smem:[%s66]]
  %s68 = sld [smem:[#allocation0]]
  $region173: #{hyper_atloc_forward.1} parent=0
    _
  %s70 = ssub.s32 1, %s68
  %s71 = scalar_select 0, %s70, %s68
  $region1: #{hyper_atloc_forward.1} parent=0
    #allocation3 [shape = 'u8[1024]{0}', space=vmem, size = 0x400, scoped, tag = 'output window, operand 0, single buffered']
    #allocation4 [shape = 's32[2]{0}', space=sflag, size = 0x8, scoped, tag = 'scoped memory for hyper_atloc_forward.1']
    %72 = vsyncpa [#allocation4], 0
    loop: start=0, step=1, limit=4
    $region2: #{hyper_atloc_forward.1} parent=1 // loop_pre_header
      _
    $region3: #{hyper_atloc_forward.1} parent=1 // loop_header
      %s74 = sphi 0, %s78
      %p75 = scmp.ge.s32.totalorder %s74, 4
      %s84 = sphi 0, %s86
      %s87 = sphi 0, %s84
      %s88 = sphi 0, %s87
      %s104 = sphi 0, %s88
      %s110 = sphi 0, %s112
      %s113 = sphi 0, %s110
      %s114 = sphi 0, %s113
      %s130 = sphi 0, %s114
      %s134 = sphi 0, %s134
      %s136 = sphi 0, %s134
      %s137 = sphi 0, %s136
      %s151 = sphi 0, %s137
      %s155 = sphi 0, %s155
      %s157 = sphi 0, %s155
      %s158 = sphi 0, %s157
      %s172 = sphi 0, %s158
      %s176 = sphi 0, %s176
      %s178 = sphi 0, %s176
      %s179 = sphi 0, %s178
      %s193 = sphi 0, %s179
      %s197 = sphi 0, %s197
      %s199 = sphi 0, %s197
      %s200 = sphi 0, %s199
      %s214 = sphi 0, %s200
      %s218 = sphi 0, %s218
      %s220 = sphi 0, %s218
      %s221 = sphi 0, %s220
      %s235 = sphi 0, %s221
      %s239 = sphi 0, %s239
      %s241 = sphi 0, %s239
      %s242 = sphi 0, %s241
      %s256 = sphi 0, %s242
      %s260 = sphi 0, %s260
      %s262 = sphi 0, %s260
      %s263 = sphi 0, %s262
      %s277 = sphi 0, %s263
      %s281 = sphi 0, %s281
      %s283 = sphi 0, %s281
      %s284 = sphi 0, %s283
      %s298 = sphi 0, %s284
      %s302 = sphi 0, %s302
      %s304 = sphi 0, %s302
      %s305 = sphi 0, %s304
      %s319 = sphi 0, %s305
      %s323 = sphi 0, %s323
      %s325 = sphi 0, %s323
      %s326 = sphi 0, %s325
      %s340 = sphi 0, %s326
      %s344 = sphi 0, %s344
      %s346 = sphi 0, %s344
      %s347 = sphi 0, %s346
      %s361 = sphi 0, %s347
      %s365 = sphi 0, %s365
      %s367 = sphi 0, %s365
      %s368 = sphi 0, %s367
      %s382 = sphi 0, %s368
      %s386 = sphi 0, %s386
      %s388 = sphi 0, %s386
      %s389 = sphi 0, %s388
      %s403 = sphi 0, %s389
      %s407 = sphi 0, %s407
      %s409 = sphi 0, %s407
      %s410 = sphi 0, %s409
      %s424 = sphi 0, %s410
      %s428 = sphi 0, %s428
      %s430 = sphi 0, %s428
      %s431 = sphi 0, %s430
      %s445 = sphi 0, %s431
      %s449 = sphi 0, %s449
      %s451 = sphi 0, %s449
      %s452 = sphi 0, %s451
      %s466 = sphi 0, %s452
      %s470 = sphi 0, %s470
      %s472 = sphi 0, %s470
      %s473 = sphi 0, %s472
      %s487 = sphi 0, %s473
      %s491 = sphi 0, %s491
      %s493 = sphi 0, %s491
      %s494 = sphi 0, %s493
      %s508 = sphi 0, %s494
      %s512 = sphi 0, %s512
      %s514 = sphi 0, %s512
      %s515 = sphi 0, %s514
      %s529 = sphi 0, %s515
      %s533 = sphi 0, %s533
      %s535 = sphi 0, %s533
      %s536 = sphi 0, %s535
      %s550 = sphi 0, %s536
      %s554 = sphi 0, %s554
      %s556 = sphi 0, %s554
      %s557 = sphi 0, %s556
      %s571 = sphi 0, %s557
      %s575 = sphi 0, %s575
      %s577 = sphi 0, %s575
      %s578 = sphi 0, %s577
      %s592 = sphi 0, %s578
      %s596 = sphi 0, %s596
      %s598 = sphi 0, %s596
      %s599 = sphi 0, %s598
      %s613 = sphi 0, %s599
      %s617 = sphi 0, %s617
      %s619 = sphi 0, %s617
      %s620 = sphi 0, %s619
      %s634 = sphi 0, %s620
      %s638 = sphi 0, %s638
      %s640 = sphi 0, %s638
      %s641 = sphi 0, %s640
      %s655 = sphi 0, %s641
      %s659 = sphi 0, %s659
      %s661 = sphi 0, %s659
      %s662 = sphi 0, %s661
      %s676 = sphi 0, %s662
      %s680 = sphi 0, %s680
      %s682 = sphi 0, %s680
      %s683 = sphi 0, %s682
      %s697 = sphi 0, %s683
      %s701 = sphi 0, %s701
      %s703 = sphi 0, %s701
      %s704 = sphi 0, %s703
      %s718 = sphi 0, %s704
      %s722 = sphi 0, %s722
      %s724 = sphi 0, %s722
      %s725 = sphi 0, %s724
      %s739 = sphi 0, %s725
      %s743 = sphi 0, %s743
      %s745 = sphi 0, %s743
      %s746 = sphi 0, %s745
      %s760 = sphi 0, %s746
      %s764 = sphi 0, %s764
      %s766 = sphi 0, %s764
      %s767 = sphi 0, %s766
      %s781 = sphi 0, %s767
      %s785 = sphi 0, %s785
      %s787 = sphi 0, %s785
      %s788 = sphi 0, %s787
      %s802 = sphi 0, %s788
    $region4: #{hyper_atloc_forward.1} parent=1 // loop_header_branch
      %77 = sbr.rel (%p75) target = $region8
    $region5: #{hyper_atloc_forward.1} parent=1 // loop_body
      %s79 = ssub.s32 %s74, 1
      %s80 = ssub.s32 %s74, 2
      %s81 = sadd.s32 %s74, 1
      %s82 = ssub.s32 %s74, %s81
      %p83 = scmp.eq.s32.totalorder %s82, 0
      %s85 = sadd.s32 %s84, 1
      %s86 = scalar_select %p83, %s84, %s85
      %p89 = pneg %p83
      %p90 = scmp.eq.s32.totalorder %s74, 1
      %p91 = por %p89, %p90
      %p92 = scmp.ne.s32.totalorder %s84, %s87
      %p93 = scmp.eq.s32.totalorder %s74, 0
      %p94 = por %p92, %p93
      %p95 = scmp.ne.s32.totalorder %s84, %s87
      %p96 = scmp.eq.s32.totalorder %s79, 1
      %p97 = por %p95, %p96
      %p98 = scmp.ne.s32.totalorder %s87, %s88
      %p99 = scmp.eq.s32.totalorder %s79, 0
      %p100 = por %p98, %p99
      %p101 = scmp.ne.s32.totalorder %s87, %s88
      %p102 = scmp.eq.s32.totalorder %s80, 1
      %p103 = por %p101, %p102
      %p105 = scmp.ne.s32.totalorder %s88, %s104
      %p106 = scmp.eq.s32.totalorder %s80, 0
      %p107 = por %p105, %p106
      %s108 = ssub.s32 %s74, %s81
      %p109 = scmp.eq.s32.totalorder %s108, 0
      %s111 = sadd.s32 %s110, 1
      %s112 = scalar_select %p109, %s110, %s111
      %p115 = pneg %p109
      %p116 = scmp.eq.s32.totalorder %s74, 1
      %p117 = por %p115, %p116
      %p118 = scmp.ne.s32.totalorder %s110, %s113
      %p119 = scmp.eq.s32.totalorder %s74, 0
      %p120 = por %p118, %p119
      %p121 = scmp.ne.s32.totalorder %s110, %s113
      %p122 = scmp.eq.s32.totalorder %s79, 1
      %p123 = por %p121, %p122
      %p124 = scmp.ne.s32.totalorder %s113, %s114
      %p125 = scmp.eq.s32.totalorder %s79, 0
      %p126 = por %p124, %p125
      %p127 = scmp.ne.s32.totalorder %s113, %s114
      %p128 = scmp.eq.s32.totalorder %s80, 1
      %p129 = por %p127, %p128
      %p131 = scmp.ne.s32.totalorder %s114, %s130
      %p132 = scmp.eq.s32.totalorder %s80, 0
      %p133 = por %p131, %p132
      %s135 = sadd.s32 %s134, 1
      %p138 = scmp.eq.s32.totalorder %s74, 1
      %p139 = scmp.ne.s32.totalorder %s134, %s136
      %p140 = scmp.eq.s32.totalorder %s74, 0
      %p141 = por %p139, %p140
      %p142 = scmp.ne.s32.totalorder %s134, %s136
      %p143 = scmp.eq.s32.totalorder %s79, 1
      %p144 = por %p142, %p143
      %p145 = scmp.ne.s32.totalorder %s136, %s137
      %p146 = scmp.eq.s32.totalorder %s79, 0
      %p147 = por %p145, %p146
      %p148 = scmp.ne.s32.totalorder %s136, %s137
      %p149 = scmp.eq.s32.totalorder %s80, 1
      %p150 = por %p148, %p149
      %p152 = scmp.ne.s32.totalorder %s137, %s151
      %p153 = scmp.eq.s32.totalorder %s80, 0
      %p154 = por %p152, %p153
      %s156 = sadd.s32 %s155, 1
      %p159 = scmp.eq.s32.totalorder %s74, 1
      %p160 = scmp.ne.s32.totalorder %s155, %s157
      %p161 = scmp.eq.s32.totalorder %s74, 0
      %p162 = por %p160, %p161
      %p163 = scmp.ne.s32.totalorder %s155, %s157
      %p164 = scmp.eq.s32.totalorder %s79, 1
      %p165 = por %p163, %p164
      %p166 = scmp.ne.s32.totalorder %s157, %s158
      %p167 = scmp.eq.s32.totalorder %s79, 0
      %p168 = por %p166, %p167
      %p169 = scmp.ne.s32.totalorder %s157, %s158
      %p170 = scmp.eq.s32.totalorder %s80, 1
      %p171 = por %p169, %p170
      %p173 = scmp.ne.s32.totalorder %s158, %s172
      %p174 = scmp.eq.s32.totalorder %s80, 0
      %p175 = por %p173, %p174
      %s177 = sadd.s32 %s176, 1
      %p180 = scmp.eq.s32.totalorder %s74, 1
      %p181 = scmp.ne.s32.totalorder %s176, %s178
      %p182 = scmp.eq.s32.totalorder %s74, 0
      %p183 = por %p181, %p182
      %p184 = scmp.ne.s32.totalorder %s176, %s178
      %p185 = scmp.eq.s32.totalorder %s79, 1
      %p186 = por %p184, %p185
      %p187 = scmp.ne.s32.totalorder %s178, %s179
      %p188 = scmp.eq.s32.totalorder %s79, 0
      %p189 = por %p187, %p188
      %p190 = scmp.ne.s32.totalorder %s178, %s179
      %p191 = scmp.eq.s32.totalorder %s80, 1
      %p192 = por %p190, %p191
      %p194 = scmp.ne.s32.totalorder %s179, %s193
      %p195 = scmp.eq.s32.totalorder %s80, 0
      %p196 = por %p194, %p195
      %s198 = sadd.s32 %s197, 1
      %p201 = scmp.eq.s32.totalorder %s74, 1
      %p202 = scmp.ne.s32.totalorder %s197, %s199
      %p203 = scmp.eq.s32.totalorder %s74, 0
      %p204 = por %p202, %p203
      %p205 = scmp.ne.s32.totalorder %s197, %s199
      %p206 = scmp.eq.s32.totalorder %s79, 1
      %p207 = por %p205, %p206
      %p208 = scmp.ne.s32.totalorder %s199, %s200
      %p209 = scmp.eq.s32.totalorder %s79, 0
      %p210 = por %p208, %p209
      %p211 = scmp.ne.s32.totalorder %s199, %s200
      %p212 = scmp.eq.s32.totalorder %s80, 1
      %p213 = por %p211, %p212
      %p215 = scmp.ne.s32.totalorder %s200, %s214
      %p216 = scmp.eq.s32.totalorder %s80, 0
      %p217 = por %p215, %p216
      %s219 = sadd.s32 %s218, 1
      %p222 = scmp.eq.s32.totalorder %s74, 1
      %p223 = scmp.ne.s32.totalorder %s218, %s220
      %p224 = scmp.eq.s32.totalorder %s74, 0
      %p225 = por %p223, %p224
      %p226 = scmp.ne.s32.totalorder %s218, %s220
      %p227 = scmp.eq.s32.totalorder %s79, 1
      %p228 = por %p226, %p227
      %p229 = scmp.ne.s32.totalorder %s220, %s221
      %p230 = scmp.eq.s32.totalorder %s79, 0
      %p231 = por %p229, %p230
      %p232 = scmp.ne.s32.totalorder %s220, %s221
      %p233 = scmp.eq.s32.totalorder %s80, 1
      %p234 = por %p232, %p233
      %p236 = scmp.ne.s32.totalorder %s221, %s235
      %p237 = scmp.eq.s32.totalorder %s80, 0
      %p238 = por %p236, %p237
      %s240 = sadd.s32 %s239, 1
      %p243 = scmp.eq.s32.totalorder %s74, 1
      %p244 = scmp.ne.s32.totalorder %s239, %s241
      %p245 = scmp.eq.s32.totalorder %s74, 0
      %p246 = por %p244, %p245
      %p247 = scmp.ne.s32.totalorder %s239, %s241
      %p248 = scmp.eq.s32.totalorder %s79, 1
      %p249 = por %p247, %p248
      %p250 = scmp.ne.s32.totalorder %s241, %s242
      %p251 = scmp.eq.s32.totalorder %s79, 0
      %p252 = por %p250, %p251
      %p253 = scmp.ne.s32.totalorder %s241, %s242
      %p254 = scmp.eq.s32.totalorder %s80, 1
      %p255 = por %p253, %p254
      %p257 = scmp.ne.s32.totalorder %s242, %s256
      %p258 = scmp.eq.s32.totalorder %s80, 0
      %p259 = por %p257, %p258
      %s261 = sadd.s32 %s260, 1
      %p264 = scmp.eq.s32.totalorder %s74, 1
      %p265 = scmp.ne.s32.totalorder %s260, %s262
      %p266 = scmp.eq.s32.totalorder %s74, 0
      %p267 = por %p265, %p266
      %p268 = scmp.ne.s32.totalorder %s260, %s262
      %p269 = scmp.eq.s32.totalorder %s79, 1
      %p270 = por %p268, %p269
      %p271 = scmp.ne.s32.totalorder %s262, %s263
      %p272 = scmp.eq.s32.totalorder %s79, 0
      %p273 = por %p271, %p272
      %p274 = scmp.ne.s32.totalorder %s262, %s263
      %p275 = scmp.eq.s32.totalorder %s80, 1
      %p276 = por %p274, %p275
      %p278 = scmp.ne.s32.totalorder %s263, %s277
      %p279 = scmp.eq.s32.totalorder %s80, 0
      %p280 = por %p278, %p279
      %s282 = sadd.s32 %s281, 1
      %p285 = scmp.eq.s32.totalorder %s74, 1
      %p286 = scmp.ne.s32.totalorder %s281, %s283
      %p287 = scmp.eq.s32.totalorder %s74, 0
      %p288 = por %p286, %p287
      %p289 = scmp.ne.s32.totalorder %s281, %s283
      %p290 = scmp.eq.s32.totalorder %s79, 1
      %p291 = por %p289, %p290
      %p292 = scmp.ne.s32.totalorder %s283, %s284
      %p293 = scmp.eq.s32.totalorder %s79, 0
      %p294 = por %p292, %p293
      %p295 = scmp.ne.s32.totalorder %s283, %s284
      %p296 = scmp.eq.s32.totalorder %s80, 1
      %p297 = por %p295, %p296
      %p299 = scmp.ne.s32.totalorder %s284, %s298
      %p300 = scmp.eq.s32.totalorder %s80, 0
      %p301 = por %p299, %p300
      %s303 = sadd.s32 %s302, 1
      %p306 = scmp.eq.s32.totalorder %s74, 1
      %p307 = scmp.ne.s32.totalorder %s302, %s304
      %p308 = scmp.eq.s32.totalorder %s74, 0
      %p309 = por %p307, %p308
      %p310 = scmp.ne.s32.totalorder %s302, %s304
      %p311 = scmp.eq.s32.totalorder %s79, 1
      %p312 = por %p310, %p311
      %p313 = scmp.ne.s32.totalorder %s304, %s305
      %p314 = scmp.eq.s32.totalorder %s79, 0
      %p315 = por %p313, %p314
      %p316 = scmp.ne.s32.totalorder %s304, %s305
      %p317 = scmp.eq.s32.totalorder %s80, 1
      %p318 = por %p316, %p317
      %p320 = scmp.ne.s32.totalorder %s305, %s319
      %p321 = scmp.eq.s32.totalorder %s80, 0
      %p322 = por %p320, %p321
      %s324 = sadd.s32 %s323, 1
      %p327 = scmp.eq.s32.totalorder %s74, 1
      %p328 = scmp.ne.s32.totalorder %s323, %s325
      %p329 = scmp.eq.s32.totalorder %s74, 0
      %p330 = por %p328, %p329
      %p331 = scmp.ne.s32.totalorder %s323, %s325
      %p332 = scmp.eq.s32.totalorder %s79, 1
      %p333 = por %p331, %p332
      %p334 = scmp.ne.s32.totalorder %s325, %s326
      %p335 = scmp.eq.s32.totalorder %s79, 0
      %p336 = por %p334, %p335
      %p337 = scmp.ne.s32.totalorder %s325, %s326
      %p338 = scmp.eq.s32.totalorder %s80, 1
      %p339 = por %p337, %p338
      %p341 = scmp.ne.s32.totalorder %s326, %s340
      %p342 = scmp.eq.s32.totalorder %s80, 0
      %p343 = por %p341, %p342
      %s345 = sadd.s32 %s344, 1
      %p348 = scmp.eq.s32.totalorder %s74, 1
      %p349 = scmp.ne.s32.totalorder %s344, %s346
      %p350 = scmp.eq.s32.totalorder %s74, 0
      %p351 = por %p349, %p350
      %p352 = scmp.ne.s32.totalorder %s344, %s346
      %p353 = scmp.eq.s32.totalorder %s79, 1
      %p354 = por %p352, %p353
      %p355 = scmp.ne.s32.totalorder %s346, %s347
      %p356 = scmp.eq.s32.totalorder %s79, 0
      %p357 = por %p355, %p356
      %p358 = scmp.ne.s32.totalorder %s346, %s347
      %p359 = scmp.eq.s32.totalorder %s80, 1
      %p360 = por %p358, %p359
      %p362 = scmp.ne.s32.totalorder %s347, %s361
      %p363 = scmp.eq.s32.totalorder %s80, 0
      %p364 = por %p362, %p363
      %s366 = sadd.s32 %s365, 1
      %p369 = scmp.eq.s32.totalorder %s74, 1
      %p370 = scmp.ne.s32.totalorder %s365, %s367
      %p371 = scmp.eq.s32.totalorder %s74, 0
      %p372 = por %p370, %p371
      %p373 = scmp.ne.s32.totalorder %s365, %s367
      %p374 = scmp.eq.s32.totalorder %s79, 1
      %p375 = por %p373, %p374
      %p376 = scmp.ne.s32.totalorder %s367, %s368
      %p377 = scmp.eq.s32.totalorder %s79, 0
      %p378 = por %p376, %p377
      %p379 = scmp.ne.s32.totalorder %s367, %s368
      %p380 = scmp.eq.s32.totalorder %s80, 1
      %p381 = por %p379, %p380
      %p383 = scmp.ne.s32.totalorder %s368, %s382
      %p384 = scmp.eq.s32.totalorder %s80, 0
      %p385 = por %p383, %p384
      %s387 = sadd.s32 %s386, 1
      %p390 = scmp.eq.s32.totalorder %s74, 1
      %p391 = scmp.ne.s32.totalorder %s386, %s388
      %p392 = scmp.eq.s32.totalorder %s74, 0
      %p393 = por %p391, %p392
      %p394 = scmp.ne.s32.totalorder %s386, %s388
      %p395 = scmp.eq.s32.totalorder %s79, 1
      %p396 = por %p394, %p395
      %p397 = scmp.ne.s32.totalorder %s388, %s389
      %p398 = scmp.eq.s32.totalorder %s79, 0
      %p399 = por %p397, %p398
      %p400 = scmp.ne.s32.totalorder %s388, %s389
      %p401 = scmp.eq.s32.totalorder %s80, 1
      %p402 = por %p400, %p401
      %p404 = scmp.ne.s32.totalorder %s389, %s403
      %p405 = scmp.eq.s32.totalorder %s80, 0
      %p406 = por %p404, %p405
      %s408 = sadd.s32 %s407, 1
      %p411 = scmp.eq.s32.totalorder %s74, 1
      %p412 = scmp.ne.s32.totalorder %s407, %s409
      %p413 = scmp.eq.s32.totalorder %s74, 0
      %p414 = por %p412, %p413
      %p415 = scmp.ne.s32.totalorder %s407, %s409
      %p416 = scmp.eq.s32.totalorder %s79, 1
      %p417 = por %p415, %p416
      %p418 = scmp.ne.s32.totalorder %s409, %s410
      %p419 = scmp.eq.s32.totalorder %s79, 0
      %p420 = por %p418, %p419
      %p421 = scmp.ne.s32.totalorder %s409, %s410
      %p422 = scmp.eq.s32.totalorder %s80, 1
      %p423 = por %p421, %p422
      %p425 = scmp.ne.s32.totalorder %s410, %s424
      %p426 = scmp.eq.s32.totalorder %s80, 0
      %p427 = por %p425, %p426
      %s429 = sadd.s32 %s428, 1
      %p432 = scmp.eq.s32.totalorder %s74, 1
      %p433 = scmp.ne.s32.totalorder %s428, %s430
      %p434 = scmp.eq.s32.totalorder %s74, 0
      %p435 = por %p433, %p434
      %p436 = scmp.ne.s32.totalorder %s428, %s430
      %p437 = scmp.eq.s32.totalorder %s79, 1
      %p438 = por %p436, %p437
      %p439 = scmp.ne.s32.totalorder %s430, %s431
      %p440 = scmp.eq.s32.totalorder %s79, 0
      %p441 = por %p439, %p440
      %p442 = scmp.ne.s32.totalorder %s430, %s431
      %p443 = scmp.eq.s32.totalorder %s80, 1
      %p444 = por %p442, %p443
      %p446 = scmp.ne.s32.totalorder %s431, %s445
      %p447 = scmp.eq.s32.totalorder %s80, 0
      %p448 = por %p446, %p447
      %s450 = sadd.s32 %s449, 1
      %p453 = scmp.eq.s32.totalorder %s74, 1
      %p454 = scmp.ne.s32.totalorder %s449, %s451
      %p455 = scmp.eq.s32.totalorder %s74, 0
      %p456 = por %p454, %p455
      %p457 = scmp.ne.s32.totalorder %s449, %s451
      %p458 = scmp.eq.s32.totalorder %s79, 1
      %p459 = por %p457, %p458
      %p460 = scmp.ne.s32.totalorder %s451, %s452
      %p461 = scmp.eq.s32.totalorder %s79, 0
      %p462 = por %p460, %p461
      %p463 = scmp.ne.s32.totalorder %s451, %s452
      %p464 = scmp.eq.s32.totalorder %s80, 1
      %p465 = por %p463, %p464
      %p467 = scmp.ne.s32.totalorder %s452, %s466
      %p468 = scmp.eq.s32.totalorder %s80, 0
      %p469 = por %p467, %p468
      %s471 = sadd.s32 %s470, 1
      %p474 = scmp.eq.s32.totalorder %s74, 1
      %p475 = scmp.ne.s32.totalorder %s470, %s472
      %p476 = scmp.eq.s32.totalorder %s74, 0
      %p477 = por %p475, %p476
      %p478 = scmp.ne.s32.totalorder %s470, %s472
      %p479 = scmp.eq.s32.totalorder %s79, 1
      %p480 = por %p478, %p479
      %p481 = scmp.ne.s32.totalorder %s472, %s473
      %p482 = scmp.eq.s32.totalorder %s79, 0
      %p483 = por %p481, %p482
      %p484 = scmp.ne.s32.totalorder %s472, %s473
      %p485 = scmp.eq.s32.totalorder %s80, 1
      %p486 = por %p484, %p485
      %p488 = scmp.ne.s32.totalorder %s473, %s487
      %p489 = scmp.eq.s32.totalorder %s80, 0
      %p490 = por %p488, %p489
      %s492 = sadd.s32 %s491, 1
      %p495 = scmp.eq.s32.totalorder %s74, 1
      %p496 = scmp.ne.s32.totalorder %s491, %s493
      %p497 = scmp.eq.s32.totalorder %s74, 0
      %p498 = por %p496, %p497
      %p499 = scmp.ne.s32.totalorder %s491, %s493
      %p500 = scmp.eq.s32.totalorder %s79, 1
      %p501 = por %p499, %p500
      %p502 = scmp.ne.s32.totalorder %s493, %s494
      %p503 = scmp.eq.s32.totalorder %s79, 0
      %p504 = por %p502, %p503
      %p505 = scmp.ne.s32.totalorder %s493, %s494
      %p506 = scmp.eq.s32.totalorder %s80, 1
      %p507 = por %p505, %p506
      %p509 = scmp.ne.s32.totalorder %s494, %s508
      %p510 = scmp.eq.s32.totalorder %s80, 0
      %p511 = por %p509, %p510
      %s513 = sadd.s32 %s512, 1
      %p516 = scmp.eq.s32.totalorder %s74, 1
      %p517 = scmp.ne.s32.totalorder %s512, %s514
      %p518 = scmp.eq.s32.totalorder %s74, 0
      %p519 = por %p517, %p518
      %p520 = scmp.ne.s32.totalorder %s512, %s514
      %p521 = scmp.eq.s32.totalorder %s79, 1
      %p522 = por %p520, %p521
      %p523 = scmp.ne.s32.totalorder %s514, %s515
      %p524 = scmp.eq.s32.totalorder %s79, 0
      %p525 = por %p523, %p524
      %p526 = scmp.ne.s32.totalorder %s514, %s515
      %p527 = scmp.eq.s32.totalorder %s80, 1
      %p528 = por %p526, %p527
      %p530 = scmp.ne.s32.totalorder %s515, %s529
      %p531 = scmp.eq.s32.totalorder %s80, 0
      %p532 = por %p530, %p531
      %s534 = sadd.s32 %s533, 1
      %p537 = scmp.eq.s32.totalorder %s74, 1
      %p538 = scmp.ne.s32.totalorder %s533, %s535
      %p539 = scmp.eq.s32.totalorder %s74, 0
      %p540 = por %p538, %p539
      %p541 = scmp.ne.s32.totalorder %s533, %s535
      %p542 = scmp.eq.s32.totalorder %s79, 1
      %p543 = por %p541, %p542
      %p544 = scmp.ne.s32.totalorder %s535, %s536
      %p545 = scmp.eq.s32.totalorder %s79, 0
      %p546 = por %p544, %p545
      %p547 = scmp.ne.s32.totalorder %s535, %s536
      %p548 = scmp.eq.s32.totalorder %s80, 1
      %p549 = por %p547, %p548
      %p551 = scmp.ne.s32.totalorder %s536, %s550
      %p552 = scmp.eq.s32.totalorder %s80, 0
      %p553 = por %p551, %p552
      %s555 = sadd.s32 %s554, 1
      %p558 = scmp.eq.s32.totalorder %s74, 1
      %p559 = scmp.ne.s32.totalorder %s554, %s556
      %p560 = scmp.eq.s32.totalorder %s74, 0
      %p561 = por %p559, %p560
      %p562 = scmp.ne.s32.totalorder %s554, %s556
      %p563 = scmp.eq.s32.totalorder %s79, 1
      %p564 = por %p562, %p563
      %p565 = scmp.ne.s32.totalorder %s556, %s557
      %p566 = scmp.eq.s32.totalorder %s79, 0
      %p567 = por %p565, %p566
      %p568 = scmp.ne.s32.totalorder %s556, %s557
      %p569 = scmp.eq.s32.totalorder %s80, 1
      %p570 = por %p568, %p569
      %p572 = scmp.ne.s32.totalorder %s557, %s571
      %p573 = scmp.eq.s32.totalorder %s80, 0
      %p574 = por %p572, %p573
      %s576 = sadd.s32 %s575, 1
      %p579 = scmp.eq.s32.totalorder %s74, 1
      %p580 = scmp.ne.s32.totalorder %s575, %s577
      %p581 = scmp.eq.s32.totalorder %s74, 0
      %p582 = por %p580, %p581
      %p583 = scmp.ne.s32.totalorder %s575, %s577
      %p584 = scmp.eq.s32.totalorder %s79, 1
      %p585 = por %p583, %p584
      %p586 = scmp.ne.s32.totalorder %s577, %s578
      %p587 = scmp.eq.s32.totalorder %s79, 0
      %p588 = por %p586, %p587
      %p589 = scmp.ne.s32.totalorder %s577, %s578
      %p590 = scmp.eq.s32.totalorder %s80, 1
      %p591 = por %p589, %p590
      %p593 = scmp.ne.s32.totalorder %s578, %s592
      %p594 = scmp.eq.s32.totalorder %s80, 0
      %p595 = por %p593, %p594
      %s597 = sadd.s32 %s596, 1
      %p600 = scmp.eq.s32.totalorder %s74, 1
      %p601 = scmp.ne.s32.totalorder %s596, %s598
      %p602 = scmp.eq.s32.totalorder %s74, 0
      %p603 = por %p601, %p602
      %p604 = scmp.ne.s32.totalorder %s596, %s598
      %p605 = scmp.eq.s32.totalorder %s79, 1
      %p606 = por %p604, %p605
      %p607 = scmp.ne.s32.totalorder %s598, %s599
      %p608 = scmp.eq.s32.totalorder %s79, 0
      %p609 = por %p607, %p608
      %p610 = scmp.ne.s32.totalorder %s598, %s599
      %p611 = scmp.eq.s32.totalorder %s80, 1
      %p612 = por %p610, %p611
      %p614 = scmp.ne.s32.totalorder %s599, %s613
      %p615 = scmp.eq.s32.totalorder %s80, 0
      %p616 = por %p614, %p615
      %s618 = sadd.s32 %s617, 1
      %p621 = scmp.eq.s32.totalorder %s74, 1
      %p622 = scmp.ne.s32.totalorder %s617, %s619
      %p623 = scmp.eq.s32.totalorder %s74, 0
      %p624 = por %p622, %p623
      %p625 = scmp.ne.s32.totalorder %s617, %s619
      %p626 = scmp.eq.s32.totalorder %s79, 1
      %p627 = por %p625, %p626
      %p628 = scmp.ne.s32.totalorder %s619, %s620
      %p629 = scmp.eq.s32.totalorder %s79, 0
      %p630 = por %p628, %p629
      %p631 = scmp.ne.s32.totalorder %s619, %s620
      %p632 = scmp.eq.s32.totalorder %s80, 1
      %p633 = por %p631, %p632
      %p635 = scmp.ne.s32.totalorder %s620, %s634
      %p636 = scmp.eq.s32.totalorder %s80, 0
      %p637 = por %p635, %p636
      %s639 = sadd.s32 %s638, 1
      %p642 = scmp.eq.s32.totalorder %s74, 1
      %p643 = scmp.ne.s32.totalorder %s638, %s640
      %p644 = scmp.eq.s32.totalorder %s74, 0
      %p645 = por %p643, %p644
      %p646 = scmp.ne.s32.totalorder %s638, %s640
      %p647 = scmp.eq.s32.totalorder %s79, 1
      %p648 = por %p646, %p647
      %p649 = scmp.ne.s32.totalorder %s640, %s641
      %p650 = scmp.eq.s32.totalorder %s79, 0
      %p651 = por %p649, %p650
      %p652 = scmp.ne.s32.totalorder %s640, %s641
      %p653 = scmp.eq.s32.totalorder %s80, 1
      %p654 = por %p652, %p653
      %p656 = scmp.ne.s32.totalorder %s641, %s655
      %p657 = scmp.eq.s32.totalorder %s80, 0
      %p658 = por %p656, %p657
      %s660 = sadd.s32 %s659, 1
      %p663 = scmp.eq.s32.totalorder %s74, 1
      %p664 = scmp.ne.s32.totalorder %s659, %s661
      %p665 = scmp.eq.s32.totalorder %s74, 0
      %p666 = por %p664, %p665
      %p667 = scmp.ne.s32.totalorder %s659, %s661
      %p668 = scmp.eq.s32.totalorder %s79, 1
      %p669 = por %p667, %p668
      %p670 = scmp.ne.s32.totalorder %s661, %s662
      %p671 = scmp.eq.s32.totalorder %s79, 0
      %p672 = por %p670, %p671
      %p673 = scmp.ne.s32.totalorder %s661, %s662
      %p674 = scmp.eq.s32.totalorder %s80, 1
      %p675 = por %p673, %p674
      %p677 = scmp.ne.s32.totalorder %s662, %s676
      %p678 = scmp.eq.s32.totalorder %s80, 0
      %p679 = por %p677, %p678
      %s681 = sadd.s32 %s680, 1
      %p684 = scmp.eq.s32.totalorder %s74, 1
      %p685 = scmp.ne.s32.totalorder %s680, %s682
      %p686 = scmp.eq.s32.totalorder %s74, 0
      %p687 = por %p685, %p686
      %p688 = scmp.ne.s32.totalorder %s680, %s682
      %p689 = scmp.eq.s32.totalorder %s79, 1
      %p690 = por %p688, %p689
      %p691 = scmp.ne.s32.totalorder %s682, %s683
      %p692 = scmp.eq.s32.totalorder %s79, 0
      %p693 = por %p691, %p692
      %p694 = scmp.ne.s32.totalorder %s682, %s683
      %p695 = scmp.eq.s32.totalorder %s80, 1
      %p696 = por %p694, %p695
      %p698 = scmp.ne.s32.totalorder %s683, %s697
      %p699 = scmp.eq.s32.totalorder %s80, 0
      %p700 = por %p698, %p699
      %s702 = sadd.s32 %s701, 1
      %p705 = scmp.eq.s32.totalorder %s74, 1
      %p706 = scmp.ne.s32.totalorder %s701, %s703
      %p707 = scmp.eq.s32.totalorder %s74, 0
      %p708 = por %p706, %p707
      %p709 = scmp.ne.s32.totalorder %s701, %s703
      %p710 = scmp.eq.s32.totalorder %s79, 1
      %p711 = por %p709, %p710
      %p712 = scmp.ne.s32.totalorder %s703, %s704
      %p713 = scmp.eq.s32.totalorder %s79, 0
      %p714 = por %p712, %p713
      %p715 = scmp.ne.s32.totalorder %s703, %s704
      %p716 = scmp.eq.s32.totalorder %s80, 1
      %p717 = por %p715, %p716
      %p719 = scmp.ne.s32.totalorder %s704, %s718
      %p720 = scmp.eq.s32.totalorder %s80, 0
      %p721 = por %p719, %p720
      %s723 = sadd.s32 %s722, 1
      %p726 = scmp.eq.s32.totalorder %s74, 1
      %p727 = scmp.ne.s32.totalorder %s722, %s724
      %p728 = scmp.eq.s32.totalorder %s74, 0
      %p729 = por %p727, %p728
      %p730 = scmp.ne.s32.totalorder %s722, %s724
      %p731 = scmp.eq.s32.totalorder %s79, 1
      %p732 = por %p730, %p731
      %p733 = scmp.ne.s32.totalorder %s724, %s725
      %p734 = scmp.eq.s32.totalorder %s79, 0
      %p735 = por %p733, %p734
      %p736 = scmp.ne.s32.totalorder %s724, %s725
      %p737 = scmp.eq.s32.totalorder %s80, 1
      %p738 = por %p736, %p737
      %p740 = scmp.ne.s32.totalorder %s725, %s739
      %p741 = scmp.eq.s32.totalorder %s80, 0
      %p742 = por %p740, %p741
      %s744 = sadd.s32 %s743, 1
      %p747 = scmp.eq.s32.totalorder %s74, 1
      %p748 = scmp.ne.s32.totalorder %s743, %s745
      %p749 = scmp.eq.s32.totalorder %s74, 0
      %p750 = por %p748, %p749
      %p751 = scmp.ne.s32.totalorder %s743, %s745
      %p752 = scmp.eq.s32.totalorder %s79, 1
      %p753 = por %p751, %p752
      %p754 = scmp.ne.s32.totalorder %s745, %s746
      %p755 = scmp.eq.s32.totalorder %s79, 0
      %p756 = por %p754, %p755
      %p757 = scmp.ne.s32.totalorder %s745, %s746
      %p758 = scmp.eq.s32.totalorder %s80, 1
      %p759 = por %p757, %p758
      %p761 = scmp.ne.s32.totalorder %s746, %s760
      %p762 = scmp.eq.s32.totalorder %s80, 0
      %p763 = por %p761, %p762
      %s765 = sadd.s32 %s764, 1
      %p768 = scmp.eq.s32.totalorder %s74, 1
      %p769 = scmp.ne.s32.totalorder %s764, %s766
      %p770 = scmp.eq.s32.totalorder %s74, 0
      %p771 = por %p769, %p770
      %p772 = scmp.ne.s32.totalorder %s764, %s766
      %p773 = scmp.eq.s32.totalorder %s79, 1
      %p774 = por %p772, %p773
      %p775 = scmp.ne.s32.totalorder %s766, %s767
      %p776 = scmp.eq.s32.totalorder %s79, 0
      %p777 = por %p775, %p776
      %p778 = scmp.ne.s32.totalorder %s766, %s767
      %p779 = scmp.eq.s32.totalorder %s80, 1
      %p780 = por %p778, %p779
      %p782 = scmp.ne.s32.totalorder %s767, %s781
      %p783 = scmp.eq.s32.totalorder %s80, 0
      %p784 = por %p782, %p783
      %s786 = sadd.s32 %s785, 1
      %p789 = scmp.eq.s32.totalorder %s74, 1
      %p790 = scmp.ne.s32.totalorder %s785, %s787
      %p791 = scmp.eq.s32.totalorder %s74, 0
      %p792 = por %p790, %p791
      %p793 = scmp.ne.s32.totalorder %s785, %s787
      %p794 = scmp.eq.s32.totalorder %s79, 1
      %p795 = por %p793, %p794
      %p796 = scmp.ne.s32.totalorder %s787, %s788
      %p797 = scmp.eq.s32.totalorder %s79, 0
      %p798 = por %p796, %p797
      %p799 = scmp.ne.s32.totalorder %s787, %s788
      %p800 = scmp.eq.s32.totalorder %s80, 1
      %p801 = por %p799, %p800
      %p803 = scmp.ne.s32.totalorder %s788, %s802
      %p804 = scmp.eq.s32.totalorder %s80, 0
      %p805 = por %p803, %p804
      %p806 = scmp.le.s32.totalorder 1, %s74
      %p807 = scmp.lt.s32.totalorder %s74, 3
      %p808 = pnand %p806, %p807
      %p809 = pneg %p808
      // Predicated region
      $region9: #{hyper_atloc_forward.1} parent=5 // pred_check
        _
      $region10: #{hyper_atloc_forward.1} parent=5 // pred_check_branch
        %811 = sbr.rel (%p808) target = $region12
      $region11: #{hyper_atloc_forward.1} parent=5 // pred_region
        %s812 = ssub.s32 %s74, 1
        // Predicated region
        $region13: #{hyper_atloc_forward.1} parent=11 // pred_check
          %p813 = pneg %p147
        $region14: #{hyper_atloc_forward.1} parent=11 // pred_check_branch
          %815 = sbr.rel (%p813) target = $region16
        $region15: #{hyper_atloc_forward.1} parent=11 // pred_region
          _
        $region16: #{hyper_atloc_forward.1} parent=11 // pred_fallthru
          _
        // Predicated region
        $region17: #{hyper_atloc_forward.1} parent=11 // pred_check
          %p816 = pneg %p168
        $region18: #{hyper_atloc_forward.1} parent=11 // pred_check_branch
          %818 = sbr.rel (%p816) target = $region20
        $region19: #{hyper_atloc_forward.1} parent=11 // pred_region
          _
        $region20: #{hyper_atloc_forward.1} parent=11 // pred_fallthru
          _
        // Predicated region
        $region21: #{hyper_atloc_forward.1} parent=11 // pred_check
          %p819 = pneg %p189
        $region22: #{hyper_atloc_forward.1} parent=11 // pred_check_branch
          %821 = sbr.rel (%p819) target = $region24
        $region23: #{hyper_atloc_forward.1} parent=11 // pred_region
          _
        $region24: #{hyper_atloc_forward.1} parent=11 // pred_fallthru
          _
        // Predicated region
        $region25: #{hyper_atloc_forward.1} parent=11 // pred_check
          %p822 = pneg %p210
        $region26: #{hyper_atloc_forward.1} parent=11 // pred_check_branch
          %824 = sbr.rel (%p822) target = $region28
        $region27: #{hyper_atloc_forward.1} parent=11 // pred_region
          _
        $region28: #{hyper_atloc_forward.1} parent=11 // pred_fallthru
          _
        // Predicated region
        $region29: #{hyper_atloc_forward.1} parent=11 // pred_check
          %p825 = pneg %p231
        $region30: #{hyper_atloc_forward.1} parent=11 // pred_check_branch
          %827 = sbr.rel (%p825) target = $region32
        $region31: #{hyper_atloc_forward.1} parent=11 // pred_region
          _
        $region32: #{hyper_atloc_forward.1} parent=11 // pred_fallthru
          _
        // Predicated region
        $region33: #{hyper_atloc_forward.1} parent=11 // pred_check
          %p828 = pneg %p252
        $region34: #{hyper_atloc_forward.1} parent=11 // pred_check_branch
          %830 = sbr.rel (%p828) target = $region36
        $region35: #{hyper_atloc_forward.1} parent=11 // pred_region
          _
        $region36: #{hyper_atloc_forward.1} parent=11 // pred_fallthru
          _
        // Predicated region
        $region37: #{hyper_atloc_forward.1} parent=11 // pred_check
          %p831 = pneg %p273
        $region38: #{hyper_atloc_forward.1} parent=11 // pred_check_branch
          %833 = sbr.rel (%p831) target = $region40
        $region39: #{hyper_atloc_forward.1} parent=11 // pred_region
          _
        $region40: #{hyper_atloc_forward.1} parent=11 // pred_fallthru
          _
        // Predicated region
        $region41: #{hyper_atloc_forward.1} parent=11 // pred_check
          %p834 = pneg %p294
        $region42: #{hyper_atloc_forward.1} parent=11 // pred_check_branch
          %836 = sbr.rel (%p834) target = $region44
        $region43: #{hyper_atloc_forward.1} parent=11 // pred_region
          _
        $region44: #{hyper_atloc_forward.1} parent=11 // pred_fallthru
          _
        // Predicated region
        $region45: #{hyper_atloc_forward.1} parent=11 // pred_check
          %p837 = pneg %p315
        $region46: #{hyper_atloc_forward.1} parent=11 // pred_check_branch
          %839 = sbr.rel (%p837) target = $region48
        $region47: #{hyper_atloc_forward.1} parent=11 // pred_region
          _
        $region48: #{hyper_atloc_forward.1} parent=11 // pred_fallthru
          _
        // Predicated region
        $region49: #{hyper_atloc_forward.1} parent=11 // pred_check
          %p840 = pneg %p336
        $region50: #{hyper_atloc_forward.1} parent=11 // pred_check_branch
          %842 = sbr.rel (%p840) target = $region52
        $region51: #{hyper_atloc_forward.1} parent=11 // pred_region
          _
        $region52: #{hyper_atloc_forward.1} parent=11 // pred_fallthru
          _
        // Predicated region
        $region53: #{hyper_atloc_forward.1} parent=11 // pred_check
          %p843 = pneg %p357
        $region54: #{hyper_atloc_forward.1} parent=11 // pred_check_branch
          %845 = sbr.rel (%p843) target = $region56
        $region55: #{hyper_atloc_forward.1} parent=11 // pred_region
          _
        $region56: #{hyper_atloc_forward.1} parent=11 // pred_fallthru
          _
        // Predicated region
        $region57: #{hyper_atloc_forward.1} parent=11 // pred_check
          %p846 = pneg %p378
        $region58: #{hyper_atloc_forward.1} parent=11 // pred_check_branch
          %848 = sbr.rel (%p846) target = $region60
        $region59: #{hyper_atloc_forward.1} parent=11 // pred_region
          _
        $region60: #{hyper_atloc_forward.1} parent=11 // pred_fallthru
          _
        // Predicated region
        $region61: #{hyper_atloc_forward.1} parent=11 // pred_check
          %p849 = pneg %p399
        $region62: #{hyper_atloc_forward.1} parent=11 // pred_check_branch
          %851 = sbr.rel (%p849) target = $region64
        $region63: #{hyper_atloc_forward.1} parent=11 // pred_region
          _
        $region64: #{hyper_atloc_forward.1} parent=11 // pred_fallthru
          _
        // Predicated region
        $region65: #{hyper_atloc_forward.1} parent=11 // pred_check
          %p852 = pneg %p420
        $region66: #{hyper_atloc_forward.1} parent=11 // pred_check_branch
          %854 = sbr.rel (%p852) target = $region68
        $region67: #{hyper_atloc_forward.1} parent=11 // pred_region
          _
        $region68: #{hyper_atloc_forward.1} parent=11 // pred_fallthru
          _
        // Predicated region
        $region69: #{hyper_atloc_forward.1} parent=11 // pred_check
          %p855 = pneg %p441
        $region70: #{hyper_atloc_forward.1} parent=11 // pred_check_branch
          %857 = sbr.rel (%p855) target = $region72
        $region71: #{hyper_atloc_forward.1} parent=11 // pred_region
          _
        $region72: #{hyper_atloc_forward.1} parent=11 // pred_fallthru
          _
        // Predicated region
        $region73: #{hyper_atloc_forward.1} parent=11 // pred_check
          %p858 = pneg %p462
        $region74: #{hyper_atloc_forward.1} parent=11 // pred_check_branch
          %860 = sbr.rel (%p858) target = $region76
        $region75: #{hyper_atloc_forward.1} parent=11 // pred_region
          _
        $region76: #{hyper_atloc_forward.1} parent=11 // pred_fallthru
          _
        // Predicated region
        $region77: #{hyper_atloc_forward.1} parent=11 // pred_check
          %p861 = pneg %p483
        $region78: #{hyper_atloc_forward.1} parent=11 // pred_check_branch
          %863 = sbr.rel (%p861) target = $region80
        $region79: #{hyper_atloc_forward.1} parent=11 // pred_region
          _
        $region80: #{hyper_atloc_forward.1} parent=11 // pred_fallthru
          _
        // Predicated region
        $region81: #{hyper_atloc_forward.1} parent=11 // pred_check
          %p864 = pneg %p504
        $region82: #{hyper_atloc_forward.1} parent=11 // pred_check_branch
          %866 = sbr.rel (%p864) target = $region84
        $region83: #{hyper_atloc_forward.1} parent=11 // pred_region
          _
        $region84: #{hyper_atloc_forward.1} parent=11 // pred_fallthru
          _
        // Predicated region
        $region85: #{hyper_atloc_forward.1} parent=11 // pred_check
          %p867 = pneg %p525
        $region86: #{hyper_atloc_forward.1} parent=11 // pred_check_branch
          %869 = sbr.rel (%p867) target = $region88
        $region87: #{hyper_atloc_forward.1} parent=11 // pred_region
          _
        $region88: #{hyper_atloc_forward.1} parent=11 // pred_fallthru
          _
        // Predicated region
        $region89: #{hyper_atloc_forward.1} parent=11 // pred_check
          %p870 = pneg %p546
        $region90: #{hyper_atloc_forward.1} parent=11 // pred_check_branch
          %872 = sbr.rel (%p870) target = $region92
        $region91: #{hyper_atloc_forward.1} parent=11 // pred_region
          _
        $region92: #{hyper_atloc_forward.1} parent=11 // pred_fallthru
          _
        // Predicated region
        $region93: #{hyper_atloc_forward.1} parent=11 // pred_check
          %p873 = pneg %p567
        $region94: #{hyper_atloc_forward.1} parent=11 // pred_check_branch
          %875 = sbr.rel (%p873) target = $region96
        $region95: #{hyper_atloc_forward.1} parent=11 // pred_region
          _
        $region96: #{hyper_atloc_forward.1} parent=11 // pred_fallthru
          _
        // Predicated region
        $region97: #{hyper_atloc_forward.1} parent=11 // pred_check
          %p876 = pneg %p588
        $region98: #{hyper_atloc_forward.1} parent=11 // pred_check_branch
          %878 = sbr.rel (%p876) target = $region100
        $region99: #{hyper_atloc_forward.1} parent=11 // pred_region
          _
        $region100: #{hyper_atloc_forward.1} parent=11 // pred_fallthru
          _
        // Predicated region
        $region101: #{hyper_atloc_forward.1} parent=11 // pred_check
          %p879 = pneg %p609
        $region102: #{hyper_atloc_forward.1} parent=11 // pred_check_branch
          %881 = sbr.rel (%p879) target = $region104
        $region103: #{hyper_atloc_forward.1} parent=11 // pred_region
          _
        $region104: #{hyper_atloc_forward.1} parent=11 // pred_fallthru
          _
        // Predicated region
        $region105: #{hyper_atloc_forward.1} parent=11 // pred_check
          %p882 = pneg %p630
        $region106: #{hyper_atloc_forward.1} parent=11 // pred_check_branch
          %884 = sbr.rel (%p882) target = $region108
        $region107: #{hyper_atloc_forward.1} parent=11 // pred_region
          _
        $region108: #{hyper_atloc_forward.1} parent=11 // pred_fallthru
          _
        // Predicated region
        $region109: #{hyper_atloc_forward.1} parent=11 // pred_check
          %p885 = pneg %p651
        $region110: #{hyper_atloc_forward.1} parent=11 // pred_check_branch
          %887 = sbr.rel (%p885) target = $region112
        $region111: #{hyper_atloc_forward.1} parent=11 // pred_region
          _
        $region112: #{hyper_atloc_forward.1} parent=11 // pred_fallthru
          _
        // Predicated region
        $region113: #{hyper_atloc_forward.1} parent=11 // pred_check
          %p888 = pneg %p672
        $region114: #{hyper_atloc_forward.1} parent=11 // pred_check_branch
          %890 = sbr.rel (%p888) target = $region116
        $region115: #{hyper_atloc_forward.1} parent=11 // pred_region
          _
        $region116: #{hyper_atloc_forward.1} parent=11 // pred_fallthru
          _
        // Predicated region
        $region117: #{hyper_atloc_forward.1} parent=11 // pred_check
          %p891 = pneg %p693
        $region118: #{hyper_atloc_forward.1} parent=11 // pred_check_branch
          %893 = sbr.rel (%p891) target = $region120
        $region119: #{hyper_atloc_forward.1} parent=11 // pred_region
          _
        $region120: #{hyper_atloc_forward.1} parent=11 // pred_fallthru
          _
        // Predicated region
        $region121: #{hyper_atloc_forward.1} parent=11 // pred_check
          %p894 = pneg %p714
        $region122: #{hyper_atloc_forward.1} parent=11 // pred_check_branch
          %896 = sbr.rel (%p894) target = $region124
        $region123: #{hyper_atloc_forward.1} parent=11 // pred_region
          _
        $region124: #{hyper_atloc_forward.1} parent=11 // pred_fallthru
          _
        // Predicated region
        $region125: #{hyper_atloc_forward.1} parent=11 // pred_check
          %p897 = pneg %p735
        $region126: #{hyper_atloc_forward.1} parent=11 // pred_check_branch
          %899 = sbr.rel (%p897) target = $region128
        $region127: #{hyper_atloc_forward.1} parent=11 // pred_region
          _
        $region128: #{hyper_atloc_forward.1} parent=11 // pred_fallthru
          _
        // Predicated region
        $region129: #{hyper_atloc_forward.1} parent=11 // pred_check
          %p900 = pneg %p756
        $region130: #{hyper_atloc_forward.1} parent=11 // pred_check_branch
          %902 = sbr.rel (%p900) target = $region132
        $region131: #{hyper_atloc_forward.1} parent=11 // pred_region
          _
        $region132: #{hyper_atloc_forward.1} parent=11 // pred_fallthru
          _
        // Predicated region
        $region133: #{hyper_atloc_forward.1} parent=11 // pred_check
          %p903 = pneg %p777
        $region134: #{hyper_atloc_forward.1} parent=11 // pred_check_branch
          %905 = sbr.rel (%p903) target = $region136
        $region135: #{hyper_atloc_forward.1} parent=11 // pred_region
          _
        $region136: #{hyper_atloc_forward.1} parent=11 // pred_fallthru
          _
      $region12: #{hyper_atloc_forward.1} parent=5 // pred_fallthru
        _
      %p906 = scmp.lt.s32.totalorder %s74, 2
      // Predicated region
      $region137: #{hyper_atloc_forward.1} parent=5 // pred_check
        %p907 = pneg %p906
      $region138: #{hyper_atloc_forward.1} parent=5 // pred_check_branch
        %909 = sbr.rel (%p907) target = $region140
      $region139: #{hyper_atloc_forward.1} parent=5 // pred_region
        // Predicated region
        $region141: #{hyper_atloc_forward.1} parent=139 // pred_check
          %p910 = pneg %p94
        $region142: #{hyper_atloc_forward.1} parent=139 // pred_check_branch
          %912 = sbr.rel (%p910) target = $region144
        $region143: #{hyper_atloc_forward.1} parent=139 // pred_region
          %s913 = smul.u32 32, %s74
          %p914 = scmp.lt.s32.totalorder %s913, 63
          %s915 = scalar_select %p914, %s913, 63
          %s916 = smul.addr %s915, 4
          %s917 = scalar_lea.vmem %s1, %s916
          %s918 = smul.u32 32, %s74
        $region144: #{hyper_atloc_forward.1} parent=139 // pred_fallthru
          _
        // Predicated region
        $region145: #{hyper_atloc_forward.1} parent=139 // pred_check
          %p919 = pneg %p120
        $region146: #{hyper_atloc_forward.1} parent=139 // pred_check_branch
          %921 = sbr.rel (%p919) target = $region148
        $region147: #{hyper_atloc_forward.1} parent=139 // pred_region
          %s922 = smul.u32 2, %s74
          %p923 = scmp.lt.s32.totalorder %s922, 3
          %s924 = scalar_select %p923, %s922, 3
          %s925 = smul.addr %s924, 2
          %s926 = scalar_lea.vmem %s3, %s925
          %s927 = smul.u32 2, %s74
        $region148: #{hyper_atloc_forward.1} parent=139 // pred_fallthru
          _
      $region140: #{hyper_atloc_forward.1} parent=5 // pred_fallthru
        _
      %p928 = scmp.le.s32.totalorder 1, %s74
      %p929 = scmp.lt.s32.totalorder %s74, 3
      %p930 = pnand %p928, %p929
      %p931 = pneg %p930
      // Predicated region
      $region149: #{hyper_atloc_forward.1} parent=5 // pred_check
        _
      $region150: #{hyper_atloc_forward.1} parent=5 // pred_check_branch
        %933 = sbr.rel (%p930) target = $region152
      $region151: #{hyper_atloc_forward.1} parent=5 // pred_region
        %s934 = ssub.s32 %s74, 1
        %s935 = smul.u32 32, %s79
        %p936 = scmp.lt.s32.totalorder %s935, 63
        %s937 = scalar_select %p936, %s935, 63
        %s938 = smul.addr %s937, 4
        %s939 = scalar_lea.vmem %s1, %s938
        %p940 = pneg %p100
        %p941 = pneg %p97
        %s942 = smul.u32 2, %s79
        %p943 = scmp.lt.s32.totalorder %s942, 3
        %s944 = scalar_select %p943, %s942, 3
        %s945 = smul.addr %s944, 2
        %s946 = scalar_lea.vmem %s3, %s945
        %p947 = pneg %p126
        %p948 = pneg %p123
        %p949 = pneg %p147
        %p950 = pneg %p144
        %p951 = pneg %p168
        %p952 = pneg %p165
        %p953 = pneg %p189
        %p954 = pneg %p186
        %p955 = pneg %p210
        %p956 = pneg %p207
        %p957 = pneg %p231
        %p958 = pneg %p228
        %p959 = pneg %p252
        %p960 = pneg %p249
        %p961 = pneg %p273
        %p962 = pneg %p270
        %p963 = pneg %p294
        %p964 = pneg %p291
        %p965 = pneg %p315
        %p966 = pneg %p312
        %p967 = pneg %p336
        %p968 = pneg %p333
        %p969 = pneg %p357
        %p970 = pneg %p354
        %p971 = pneg %p378
        %p972 = pneg %p375
        %p973 = pneg %p399
        %p974 = pneg %p396
        %p975 = pneg %p420
        %p976 = pneg %p417
        %p977 = pneg %p441
        %p978 = pneg %p438
        %p979 = pneg %p462
        %p980 = pneg %p459
        %p981 = pneg %p483
        %p982 = pneg %p480
        %p983 = pneg %p504
        %p984 = pneg %p501
        %p985 = pneg %p525
        %p986 = pneg %p522
        %p987 = pneg %p546
        %p988 = pneg %p543
        %p989 = pneg %p567
        %p990 = pneg %p564
        %p991 = pneg %p588
        %p992 = pneg %p585
        %p993 = pneg %p609
        %p994 = pneg %p606
        %p995 = pneg %p630
        %p996 = pneg %p627
        %p997 = pneg %p651
        %p998 = pneg %p648
        %p999 = pneg %p672
        %p1000 = pneg %p669
        %p1001 = pneg %p693
        %p1002 = pneg %p690
        %p1003 = pneg %p714
        %p1004 = pneg %p711
        %p1005 = pneg %p735
        %p1006 = pneg %p732
        %p1007 = pneg %p756
        %p1008 = pneg %p753
        %p1009 = pneg %p777
        %p1010 = pneg %p774
        %p1011 = pneg %p798
        %p1012 = pneg %p795
        %s1013 = smul.u32 32, %s79
        %p1014 = scmp.lt.s32.totalorder %s1013, 63
        %s1015 = scalar_select %p1014, %s1013, 63
        %s1016 = smul.addr %s1015, 4
        %s1017 = scalar_lea.vmem %s1, %s1016
        %s1018 = smul.u32 32, %s79
        %s1019 = smul.u32 2, %s79
        %p1020 = scmp.lt.s32.totalorder %s1019, 3
        %s1021 = scalar_select %p1020, %s1019, 3
        %s1022 = smul.addr %s1021, 2
        %s1023 = scalar_lea.vmem %s3, %s1022
        %s1024 = smul.u32 2, %s79
        %p1026 = scmp.eq.s32.totalorder %s79, 0
        // Predicated region
        $region153: #{hyper_atloc_forward.1} parent=151 // pred_check
          %p1027 = pneg %p1026
        $region154: #{hyper_atloc_forward.1} parent=151 // pred_check_branch
          %1029 = sbr.rel (%p1027) target = $region156
        $region155: #{hyper_atloc_forward.1} parent=151 // pred_region
          %vm1030 = vcmask 254976
          %1031 = vst.msk [vmem:[#allocation2] sm:$0x3] %vm1030, 0.0
        $region156: #{hyper_atloc_forward.1} parent=151 // pred_fallthru
          _
        %v1032 = vld [vmem:[%s1017] sm:$0xf]
        %v1033 = vld [vmem:[%s1017 + $0x4] sm:$0xf]
        %v1034 = vld [vmem:[%s1017 + $0x8] sm:$0xf]
        %v1035 = vld [vmem:[%s1017 + $0xc] sm:$0xf]
        %v1036 = vld [vmem:[%s1017 + $0x10] sm:$0xf]
        %v1037 = vld [vmem:[%s1017 + $0x14] sm:$0xf]
        %v1038 = vld [vmem:[%s1017 + $0x18] sm:$0xf]
        %v1039 = vld [vmem:[%s1017 + $0x1c] sm:$0xf]
        %v1040 = vld [vmem:[%s1017 + $0x20] sm:$0xf]
        %v1041 = vld [vmem:[%s1017 + $0x24] sm:$0xf]
        %v1042 = vld [vmem:[%s1017 + $0x28] sm:$0xf]
        %v1043 = vld [vmem:[%s1017 + $0x2c] sm:$0xf]
        %v1044 = vld [vmem:[%s1017 + $0x30] sm:$0xf]
        %v1045 = vld [vmem:[%s1017 + $0x34] sm:$0xf]
        %v1046 = vld [vmem:[%s1017 + $0x38] sm:$0xf]
        %v1047 = vld [vmem:[%s1017 + $0x3c] sm:$0xf]
        %v1048 = vld [vmem:[%s1017 + $0x40] sm:$0xf]
        %v1049 = vld [vmem:[%s1017 + $0x44] sm:$0xf]
        %v1050 = vld [vmem:[%s1017 + $0x48] sm:$0xf]
        %v1051 = vld [vmem:[%s1017 + $0x4c] sm:$0xf]
        %v1052 = vld [vmem:[%s1017 + $0x50] sm:$0xf]
        %v1053 = vld [vmem:[%s1017 + $0x54] sm:$0xf]
        %v1054 = vld [vmem:[%s1017 + $0x58] sm:$0xf]
        %v1055 = vld [vmem:[%s1017 + $0x5c] sm:$0xf]
        %v1056 = vld [vmem:[%s1017 + $0x60] sm:$0xf]
        %v1057 = vld [vmem:[%s1017 + $0x64] sm:$0xf]
        %v1058 = vld [vmem:[%s1017 + $0x68] sm:$0xf]
        %v1059 = vld [vmem:[%s1017 + $0x6c] sm:$0xf]
        %v1060 = vld [vmem:[%s1017 + $0x70] sm:$0xf]
        %v1061 = vld [vmem:[%s1017 + $0x74] sm:$0xf]
        %v1062 = vld [vmem:[%s1017 + $0x78] sm:$0xf]
        %v1063 = vld [vmem:[%s1017 + $0x7c] sm:$0xf]
        %v1064 = vld [vmem:[%s5] sm:$0xf]
        %v1065 = vld [vmem:[%s5 + $0x4] sm:$0xf]
        %v1066 = vld [vmem:[%s5 + $0x8] sm:$0xf]
        %v1067 = vld [vmem:[%s5 + $0xc] sm:$0xf]
        %v1068 = vld [vmem:[%s7] sm:$0x1]
        %v1070 = vlaneseq
        %v1071 = vshrl.u32 %v1070, 7
        %v1072 = vsub.s32 0, %v1071
        %v1073 = vrot.slane %v1068, %v1072
        %v1107 = vunpack.c.l.b16 %v1032
        %v1108 = vunpack.c.l.b16 %v1033
        %v1109 = vunpack.c.l.b16 %v1034
        %v1110 = vunpack.c.l.b16 %v1035
        %v1111 = vunpack.c.l.b16 %v1036
        %v1112 = vunpack.c.l.b16 %v1037
        %v1113 = vunpack.c.l.b16 %v1038
        %v1114 = vunpack.c.l.b16 %v1039
        %v1115 = vunpack.c.l.b16 %v1040
        %v1116 = vunpack.c.l.b16 %v1041
        %v1117 = vunpack.c.l.b16 %v1042
        %v1118 = vunpack.c.l.b16 %v1043
        %v1119 = vunpack.c.l.b16 %v1044
        %v1120 = vunpack.c.l.b16 %v1045
        %v1121 = vunpack.c.l.b16 %v1046
        %v1122 = vunpack.c.l.b16 %v1047
        %v1123 = vunpack.c.l.b16 %v1048
        %v1124 = vunpack.c.l.b16 %v1049
        %v1125 = vunpack.c.l.b16 %v1050
        %v1126 = vunpack.c.l.b16 %v1051
        %v1127 = vunpack.c.l.b16 %v1052
        %v1128 = vunpack.c.l.b16 %v1053
        %v1129 = vunpack.c.l.b16 %v1054
        %v1130 = vunpack.c.l.b16 %v1055
        %v1131 = vunpack.c.l.b16 %v1056
        %v1132 = vunpack.c.l.b16 %v1057
        %v1133 = vunpack.c.l.b16 %v1058
        %v1134 = vunpack.c.l.b16 %v1059
        %v1135 = vunpack.c.l.b16 %v1060
        %v1136 = vunpack.c.l.b16 %v1061
        %v1137 = vunpack.c.l.b16 %v1062
        %v1138 = vunpack.c.l.b16 %v1063
        %v1139 = vpack.c.b16 %v1108, %v1107
        %v1140 = vpack.c.b16 %v1110, %v1109
        %v1141 = vpack.c.b16 %v1112, %v1111
        %v1142 = vpack.c.b16 %v1114, %v1113
        %v1143 = vpack.c.b16 %v1116, %v1115
        %v1144 = vpack.c.b16 %v1118, %v1117
        %v1145 = vpack.c.b16 %v1120, %v1119
        %v1146 = vpack.c.b16 %v1122, %v1121
        %v1147 = vpack.c.b16 %v1124, %v1123
        %v1148 = vpack.c.b16 %v1126, %v1125
        %v1149 = vpack.c.b16 %v1128, %v1127
        %v1150 = vpack.c.b16 %v1130, %v1129
        %v1151 = vpack.c.b16 %v1132, %v1131
        %v1152 = vpack.c.b16 %v1134, %v1133
        %v1153 = vpack.c.b16 %v1136, %v1135
        %v1154 = vpack.c.b16 %v1138, %v1137
        %v1159 = vunpack.c.l.b16 %v1064
        %v1160 = vunpack.c.l.b16 %v1065
        %v1161 = vunpack.c.l.b16 %v1066
        %v1162 = vunpack.c.l.b16 %v1067
        %v1163 = vpack.c.b16 %v1160, %v1159
        %v1164 = vpack.c.b16 %v1162, %v1161
        %vm1167 = vcmask 261120
        %v1169 = vsel %vm1167, %v1139, 0
        %v1172 = vsel %vm1167, %v1140, 0
        %v1175 = vsel %vm1167, %v1141, 0
        %v1178 = vsel %vm1167, %v1142, 0
        %v1181 = vsel %vm1167, %v1143, 0
        %v1184 = vsel %vm1167, %v1144, 0
        %v1187 = vsel %vm1167, %v1145, 0
        %v1190 = vsel %vm1167, %v1146, 0
        %v1193 = vsel %vm1167, %v1147, 0
        %v1196 = vsel %vm1167, %v1148, 0
        %v1199 = vsel %vm1167, %v1149, 0
        %v1202 = vsel %vm1167, %v1150, 0
        %v1205 = vsel %vm1167, %v1151, 0
        %v1208 = vsel %vm1167, %v1152, 0
        %v1211 = vsel %vm1167, %v1153, 0
        %v1214 = vsel %vm1167, %v1154, 0
        %1216 = vmatprep.subr.bf16.mxu0 0
        %1217 = vmatpush1.bf16.msra.mxu0 0
        %1218 = vmatprep.subr.bf16.mxu0 0
        %1219 = vmatpush1.bf16.msra.mxu0 0
        %1220 = vmatprep.subr.bf16.mxu0 0
        %1221 = vmatpush1.bf16.msra.mxu0 0
        %1222 = vmatprep.subr.bf16.mxu0 0
        %1223 = vmatpush1.bf16.msra.mxu0 0
        %1224 = vmatprep.subr.bf16.mxu0 0
        %1225 = vmatpush1.bf16.msra.mxu0 0
        %1226 = vmatprep.subr.bf16.mxu0 0
        %1227 = vmatpush1.bf16.msra.mxu0 0
        %1228 = vmatprep.subr.bf16.mxu0 0
        %1229 = vmatpush1.bf16.msra.mxu0 %v1164
        %1230 = vmatprep.subr.bf16.mxu0 0
        %1231 = vmatpush1.bf16.msra.mxu0 %v1163
        %1232 = vmatprep.subr.bf16.mxu0 0
        %1233 = vmatpush2.bf16.msra.mxu0 0
        %1234 = vmatprep.subr.bf16.mxu0 0
        %1235 = vmatpush2.bf16.msra.mxu0 0
        %1236 = vmatprep.subr.bf16.mxu0 0
        %1237 = vmatpush2.bf16.msra.mxu0 0
        %1238 = vmatprep.subr.bf16.mxu0 0
        %1239 = vmatpush2.bf16.msra.mxu0 0
        %1240 = vmatprep.subr.bf16.mxu0 0
        %1241 = vmatpush2.bf16.msra.mxu0 0
        %1242 = vmatprep.subr.bf16.mxu0 0
        %1243 = vmatpush2.bf16.msra.mxu0 0
        %1244 = vmatprep.subr.bf16.mxu0 0
        %1245 = vmatpush2.bf16.msra.mxu0 0
        %1246 = vmatprep.subr.bf16.mxu0 0
        %1247 = vmatpush2.bf16.msra.mxu0 0
        %1248 = vmatprep.mubr.bf16.mxu0 0
        %1249 = vmatmul.mubr.bf16.gmra.mxu0 %v1169
        %v1250 = vpop.f32.mrf.mxu0
        %v1251 = vadd.f32 %v1073, %v1250
        %v1252 = vpop.f32.mrf.mxu0
        %v1253 = vpop.f32.mrf.mxu0
        %v1254 = vadd.f32 %v1073, %v1253
        %v1255 = vpop.f32.mrf.mxu0
        %1256 = vmatprep.mubr.bf16.mxu0 0
        %1257 = vmatmul.mubr.bf16.gmra.mxu0 %v1172
        %v1258 = vpop.f32.mrf.mxu0
        %v1259 = vadd.f32 %v1073, %v1258
        %v1260 = vpop.f32.mrf.mxu0
        %v1261 = vpop.f32.mrf.mxu0
        %v1262 = vadd.f32 %v1073, %v1261
        %v1263 = vpop.f32.mrf.mxu0
        %1264 = vmatprep.mubr.bf16.mxu0 0
        %1265 = vmatmul.mubr.bf16.gmra.mxu0 %v1175
        %v1266 = vpop.f32.mrf.mxu0
        %v1267 = vadd.f32 %v1073, %v1266
        %v1268 = vpop.f32.mrf.mxu0
        %v1269 = vpop.f32.mrf.mxu0
        %v1270 = vadd.f32 %v1073, %v1269
        %v1271 = vpop.f32.mrf.mxu0
        %1272 = vmatprep.mubr.bf16.mxu0 0
        %1273 = vmatmul.mubr.bf16.gmra.mxu0 %v1178
        %v1274 = vpop.f32.mrf.mxu0
        %v1275 = vadd.f32 %v1073, %v1274
        %v1276 = vpop.f32.mrf.mxu0
        %v1277 = vpop.f32.mrf.mxu0
        %v1278 = vadd.f32 %v1073, %v1277
        %v1279 = vpop.f32.mrf.mxu0
        %1280 = vmatprep.mubr.bf16.mxu0 0
        %1281 = vmatmul.mubr.bf16.gmra.mxu0 %v1181
        %v1282 = vpop.f32.mrf.mxu0
        %v1283 = vadd.f32 %v1073, %v1282
        %v1284 = vpop.f32.mrf.mxu0
        %v1285 = vpop.f32.mrf.mxu0
        %v1286 = vadd.f32 %v1073, %v1285
        %v1287 = vpop.f32.mrf.mxu0
        %1288 = vmatprep.mubr.bf16.mxu0 0
        %1289 = vmatmul.mubr.bf16.gmra.mxu0 %v1184
        %v1290 = vpop.f32.mrf.mxu0
        %v1291 = vadd.f32 %v1073, %v1290
        %v1292 = vpop.f32.mrf.mxu0
        %v1293 = vpop.f32.mrf.mxu0
        %v1294 = vadd.f32 %v1073, %v1293
        %v1295 = vpop.f32.mrf.mxu0
        %1296 = vmatprep.mubr.bf16.mxu0 0
        %1297 = vmatmul.mubr.bf16.gmra.mxu0 %v1187
        %v1298 = vpop.f32.mrf.mxu0
        %v1299 = vadd.f32 %v1073, %v1298
        %v1300 = vpop.f32.mrf.mxu0
        %v1301 = vpop.f32.mrf.mxu0
        %v1302 = vadd.f32 %v1073, %v1301
        %v1303 = vpop.f32.mrf.mxu0
        %1304 = vmatprep.mubr.bf16.mxu0 0
        %1305 = vmatmul.mubr.bf16.gmra.mxu0 %v1190
        %v1306 = vpop.f32.mrf.mxu0
        %v1307 = vadd.f32 %v1073, %v1306
        %v1308 = vpop.f32.mrf.mxu0
        %v1309 = vpop.f32.mrf.mxu0
        %v1310 = vadd.f32 %v1073, %v1309
        %v1311 = vpop.f32.mrf.mxu0
        %1312 = vmatprep.mubr.bf16.mxu0 0
        %1313 = vmatmul.mubr.bf16.gmra.mxu0 %v1193
        %v1314 = vpop.f32.mrf.mxu0
        %v1315 = vadd.f32 %v1073, %v1314
        %v1316 = vpop.f32.mrf.mxu0
        %v1317 = vpop.f32.mrf.mxu0
        %v1318 = vadd.f32 %v1073, %v1317
        %v1319 = vpop.f32.mrf.mxu0
        %1320 = vmatprep.mubr.bf16.mxu0 0
        %1321 = vmatmul.mubr.bf16.gmra.mxu0 %v1196
        %v1322 = vpop.f32.mrf.mxu0
        %v1323 = vadd.f32 %v1073, %v1322
        %v1324 = vpop.f32.mrf.mxu0
        %v1325 = vpop.f32.mrf.mxu0
        %v1326 = vadd.f32 %v1073, %v1325
        %v1327 = vpop.f32.mrf.mxu0
        %1328 = vmatprep.mubr.bf16.mxu0 0
        %1329 = vmatmul.mubr.bf16.gmra.mxu0 %v1199
        %v1330 = vpop.f32.mrf.mxu0
        %v1331 = vadd.f32 %v1073, %v1330
        %v1332 = vpop.f32.mrf.mxu0
        %v1333 = vpop.f32.mrf.mxu0
        %v1334 = vadd.f32 %v1073, %v1333
        %v1335 = vpop.f32.mrf.mxu0
        %1336 = vmatprep.mubr.bf16.mxu0 0
        %1337 = vmatmul.mubr.bf16.gmra.mxu0 %v1202
        %v1338 = vpop.f32.mrf.mxu0
        %v1339 = vadd.f32 %v1073, %v1338
        %v1340 = vpop.f32.mrf.mxu0
        %v1341 = vpop.f32.mrf.mxu0
        %v1342 = vadd.f32 %v1073, %v1341
        %v1343 = vpop.f32.mrf.mxu0
        %1344 = vmatprep.mubr.bf16.mxu0 0
        %1345 = vmatmul.mubr.bf16.gmra.mxu0 %v1205
        %v1346 = vpop.f32.mrf.mxu0
        %v1347 = vadd.f32 %v1073, %v1346
        %v1348 = vpop.f32.mrf.mxu0
        %v1349 = vpop.f32.mrf.mxu0
        %v1350 = vadd.f32 %v1073, %v1349
        %v1351 = vpop.f32.mrf.mxu0
        %1352 = vmatprep.mubr.bf16.mxu0 0
        %1353 = vmatmul.mubr.bf16.gmra.mxu0 %v1208
        %v1354 = vpop.f32.mrf.mxu0
        %v1355 = vadd.f32 %v1073, %v1354
        %v1356 = vpop.f32.mrf.mxu0
        %v1357 = vpop.f32.mrf.mxu0
        %v1358 = vadd.f32 %v1073, %v1357
        %v1359 = vpop.f32.mrf.mxu0
        %1360 = vmatprep.mubr.bf16.mxu0 0
        %1361 = vmatmul.mubr.bf16.gmra.mxu0 %v1211
        %v1362 = vpop.f32.mrf.mxu0
        %v1363 = vadd.f32 %v1073, %v1362
        %v1364 = vpop.f32.mrf.mxu0
        %v1365 = vpop.f32.mrf.mxu0
        %v1366 = vadd.f32 %v1073, %v1365
        %v1367 = vpop.f32.mrf.mxu0
        %1368 = vmatprep.mubr.bf16.mxu0 0
        %1369 = vmatmul.mubr.bf16.gmra.mxu0 %v1214
        %v1370 = vpop.f32.mrf.mxu0
        %v1371 = vadd.f32 %v1073, %v1370
        %v1372 = vpop.f32.mrf.mxu0
        %v1373 = vpop.f32.mrf.mxu0
        %v1374 = vadd.f32 %v1073, %v1373
        %v1375 = vpop.f32.mrf.mxu0
        %1376 = vdwg.mxu0
        %v1377 = vmax.f32 %v1251, 0.0
        %v1378 = vmax.f32 %v1254, 0.0
        %v1379 = vmax.f32 %v1259, 0.0
        %v1380 = vmax.f32 %v1262, 0.0
        %v1381 = vmax.f32 %v1267, 0.0
        %v1382 = vmax.f32 %v1270, 0.0
        %v1383 = vmax.f32 %v1275, 0.0
        %v1384 = vmax.f32 %v1278, 0.0
        %v1385 = vmax.f32 %v1283, 0.0
        %v1386 = vmax.f32 %v1286, 0.0
        %v1387 = vmax.f32 %v1291, 0.0
        %v1388 = vmax.f32 %v1294, 0.0
        %v1389 = vmax.f32 %v1299, 0.0
        %v1390 = vmax.f32 %v1302, 0.0
        %v1391 = vmax.f32 %v1307, 0.0
        %v1392 = vmax.f32 %v1310, 0.0
        %v1393 = vmax.f32 %v1315, 0.0
        %v1394 = vmax.f32 %v1318, 0.0
        %v1395 = vmax.f32 %v1323, 0.0
        %v1396 = vmax.f32 %v1326, 0.0
        %v1397 = vmax.f32 %v1331, 0.0
        %v1398 = vmax.f32 %v1334, 0.0
        %v1399 = vmax.f32 %v1339, 0.0
        %v1400 = vmax.f32 %v1342, 0.0
        %v1401 = vmax.f32 %v1347, 0.0
        %v1402 = vmax.f32 %v1350, 0.0
        %v1403 = vmax.f32 %v1355, 0.0
        %v1404 = vmax.f32 %v1358, 0.0
        %v1405 = vmax.f32 %v1363, 0.0
        %v1406 = vmax.f32 %v1366, 0.0
        %v1407 = vmax.f32 %v1371, 0.0
        %v1408 = vmax.f32 %v1374, 0.0
        %v1409 = vld [vmem:[#allocation2] sm:$0x3]
        %v1410 = vld [vmem:[%s1023] sm:$0xf]
        %v1413 = vunpack.c.l.s4 1983009808
        %v1414 = vunpack.c.0.s8 %v1413
        %v1415 = vlaneseq
        %v1416 = vshrl.u32 %v1415, 7
        %v1417 = vsub.s32 %v1414, %v1416
        %v1418 = vrot.slane %v1410, %v1417
        %v1419 = vcombine.high %v1418, %v1418
        %1422 = vmatprep.subr.mxu0 0.0
        %1423 = vmatpush1.msra.mxu0 %v1392
        %1424 = vmatprep.subr.mxu0 0.0
        %1425 = vmatpush1.msra.mxu0 %v1391
        %1426 = vmatprep.subr.mxu0 0.0
        %1427 = vmatpush1.msra.mxu0 %v1390
        %1428 = vmatprep.subr.mxu0 0.0
        %1429 = vmatpush1.msra.mxu0 %v1389
        %1430 = vmatprep.subr.mxu0 0.0
        %1431 = vmatpush1.msra.mxu0 %v1388
        %1432 = vmatprep.subr.mxu0 0.0
        %1433 = vmatpush1.msra.mxu0 %v1387
        %1434 = vmatprep.subr.mxu0 0.0
        %1435 = vmatpush1.msra.mxu0 %v1386
        %1436 = vmatprep.subr.mxu0 0.0
        %1437 = vmatpush1.msra.mxu0 %v1385
        %1438 = vmatprep.subr.mxu0 0.0
        %1439 = vmatpush1.msra.mxu0 %v1384
        %1440 = vmatprep.subr.mxu0 0.0
        %1441 = vmatpush1.msra.mxu0 %v1383
        %1442 = vmatprep.subr.mxu0 0.0
        %1443 = vmatpush1.msra.mxu0 %v1382
        %1444 = vmatprep.subr.mxu0 0.0
        %1445 = vmatpush1.msra.mxu0 %v1381
        %1446 = vmatprep.subr.mxu0 0.0
        %1447 = vmatpush1.msra.mxu0 %v1380
        %1448 = vmatprep.subr.mxu0 0.0
        %1449 = vmatpush1.msra.mxu0 %v1379
        %1450 = vmatprep.subr.mxu0 0.0
        %1451 = vmatpush1.msra.mxu0 %v1378
        %1452 = vmatprep.subr.mxu0 0.0
        %1453 = vmatpush1.msra.mxu0 %v1377
        %1454 = vmatprep.subr.mxu0 0.0
        %1455 = vmatpush2.msra.mxu0 %v1408
        %1456 = vmatprep.subr.mxu0 0.0
        %1457 = vmatpush2.msra.mxu0 %v1407
        %1458 = vmatprep.subr.mxu0 0.0
        %1459 = vmatpush2.msra.mxu0 %v1406
        %1460 = vmatprep.subr.mxu0 0.0
        %1461 = vmatpush2.msra.mxu0 %v1405
        %1462 = vmatprep.subr.mxu0 0.0
        %1463 = vmatpush2.msra.mxu0 %v1404
        %1464 = vmatprep.subr.mxu0 0.0
        %1465 = vmatpush2.msra.mxu0 %v1403
        %1466 = vmatprep.subr.mxu0 0.0
        %1467 = vmatpush2.msra.mxu0 %v1402
        %1468 = vmatprep.subr.mxu0 0.0
        %1469 = vmatpush2.msra.mxu0 %v1401
        %1470 = vmatprep.subr.mxu0 0.0
        %1471 = vmatpush2.msra.mxu0 %v1400
        %1472 = vmatprep.subr.mxu0 0.0
        %1473 = vmatpush2.msra.mxu0 %v1399
        %1474 = vmatprep.subr.mxu0 0.0
        %1475 = vmatpush2.msra.mxu0 %v1398
        %1476 = vmatprep.subr.mxu0 0.0
        %1477 = vmatpush2.msra.mxu0 %v1397
        %1478 = vmatprep.subr.mxu0 0.0
        %1479 = vmatpush2.msra.mxu0 %v1396
        %1480 = vmatprep.subr.mxu0 0.0
        %1481 = vmatpush2.msra.mxu0 %v1395
        %1482 = vmatprep.subr.mxu0 0.0
        %1483 = vmatpush2.msra.mxu0 %v1394
        %1484 = vmatprep.subr.mxu0 0.0
        %1485 = vmatpush2.msra.mxu0 %v1393
        %1486 = vmatprep.mubr.f32.mxu0 %v1419
        %1487 = vmatmul.mubr.f32.gmra.mxu0 %v1418
        %v1488 = vpop.f32.mrf.mxu0
        %v1489 = vadd.f32 0.0, %v1488
        %v1490 = vpop.f32.mrf.mxu0
        %1491 = vdwg.mxu0
        %v1492 = vadd.f32 %v1409, %v1489
        %vm1493 = vcmask 254976
        %1494 = vst.msk [vmem:[#allocation2] sm:$0x3] %vm1493, %v1492
        %p1495 = scmp.eq.s32.totalorder %s79, 1
        // Predicated region
        $region157: #{hyper_atloc_forward.1} parent=151 // pred_check
          %p1496 = pneg %p1495
        $region158: #{hyper_atloc_forward.1} parent=151 // pred_check_branch
          %1498 = sbr.rel (%p1496) target = $region160
        $region159: #{hyper_atloc_forward.1} parent=151 // pred_region
          %v1499 = vld [vmem:[#allocation2] sm:$0x3]
          %v1500 = vpack.c.bf16 %v1499, %v1499
          %v1501 = vld [vmem:[%s9] sm:$0xf]
          %v1502 = vld [vmem:[%s9 + $0x4] sm:$0xf]
          %v1503 = vld [vmem:[%s9 + $0x8] sm:$0xf]
          %v1504 = vld [vmem:[%s9 + $0xc] sm:$0xf]
          %v1505 = vld [vmem:[%s11] sm:$0x1]
          %v1507 = vlaneseq
          %v1508 = vshrl.u32 %v1507, 7
          %v1509 = vsub.s32 0, %v1508
          %v1510 = vrot.slane %v1505, %v1509
          %v1516 = vunpack.c.l.b16 %v1501
          %v1517 = vunpack.c.l.b16 %v1502
          %v1518 = vunpack.c.l.b16 %v1503
          %v1519 = vunpack.c.l.b16 %v1504
          %v1520 = vpack.c.b16 %v1517, %v1516
          %v1521 = vpack.c.b16 %v1519, %v1518
          %v1525 = vsel %vm1167, %v1500, 0
          %1527 = vmatprep.subr.bf16.mxu0 0
          %1528 = vmatpush1.bf16.msra.mxu0 0
          %1529 = vmatprep.subr.bf16.mxu0 0
          %1530 = vmatpush1.bf16.msra.mxu0 0
          %1531 = vmatprep.subr.bf16.mxu0 0
          %1532 = vmatpush1.bf16.msra.mxu0 0
          %1533 = vmatprep.subr.bf16.mxu0 0
          %1534 = vmatpush1.bf16.msra.mxu0 0
          %1535 = vmatprep.subr.bf16.mxu0 0
          %1536 = vmatpush1.bf16.msra.mxu0 0
          %1537 = vmatprep.subr.bf16.mxu0 0
          %1538 = vmatpush1.bf16.msra.mxu0 0
          %1539 = vmatprep.subr.bf16.mxu0 0
          %1540 = vmatpush1.bf16.msra.mxu0 %v1521
          %1541 = vmatprep.subr.bf16.mxu0 0
          %1542 = vmatpush1.bf16.msra.mxu0 %v1520
          %1543 = vmatprep.subr.bf16.mxu0 0
          %1544 = vmatpush2.bf16.msra.mxu0 0
          %1545 = vmatprep.subr.bf16.mxu0 0
          %1546 = vmatpush2.bf16.msra.mxu0 0
          %1547 = vmatprep.subr.bf16.mxu0 0
          %1548 = vmatpush2.bf16.msra.mxu0 0
          %1549 = vmatprep.subr.bf16.mxu0 0
          %1550 = vmatpush2.bf16.msra.mxu0 0
          %1551 = vmatprep.subr.bf16.mxu0 0
          %1552 = vmatpush2.bf16.msra.mxu0 0
          %1553 = vmatprep.subr.bf16.mxu0 0
          %1554 = vmatpush2.bf16.msra.mxu0 0
          %1555 = vmatprep.subr.bf16.mxu0 0
          %1556 = vmatpush2.bf16.msra.mxu0 0
          %1557 = vmatprep.subr.bf16.mxu0 0
          %1558 = vmatpush2.bf16.msra.mxu0 0
          %1559 = vmatprep.mubr.bf16.mxu0 0
          %1560 = vmatmul.mubr.bf16.gmra.mxu0 %v1525
          %v1561 = vpop.f32.mrf.mxu0
          %v1562 = vadd.f32 %v1510, %v1561
          %v1563 = vpop.f32.mrf.mxu0
          %v1564 = vpop.f32.mrf.mxu0
          %v1565 = vpop.f32.mrf.mxu0
          %1566 = vdwg.mxu0
          %v1567 = vmax.f32 %v1562, 0.0
          %v1568 = vpack.c.bf16 %v1567, %v1567
          %v1569 = vld [vmem:[%s13] sm:$0xf]
          %v1570 = vld [vmem:[%s13 + $0x4] sm:$0xf]
          %v1571 = vld [vmem:[%s13 + $0x8] sm:$0xf]
          %v1572 = vld [vmem:[%s13 + $0xc] sm:$0xf]
          %v1573 = vld [vmem:[%s13 + $0x10] sm:$0xf]
          %v1574 = vld [vmem:[%s13 + $0x14] sm:$0xf]
          %v1575 = vld [vmem:[%s13 + $0x18] sm:$0xf]
          %v1576 = vld [vmem:[%s13 + $0x1c] sm:$0xf]
          %v1577 = vld [vmem:[%s15] sm:$0x1]
          %v1579 = vlaneseq
          %v1580 = vshrl.u32 %v1579, 7
          %v1581 = vsub.s32 0, %v1580
          %v1582 = vrot.slane %v1577, %v1581
          %v1592 = vunpack.c.l.b16 %v1569
          %v1593 = vunpack.c.l.b16 %v1570
          %v1594 = vunpack.c.l.b16 %v1571
          %v1595 = vunpack.c.l.b16 %v1572
          %v1596 = vunpack.c.l.b16 %v1573
          %v1597 = vunpack.c.l.b16 %v1574
          %v1598 = vunpack.c.l.b16 %v1575
          %v1599 = vunpack.c.l.b16 %v1576
          %v1600 = vpack.c.b16 %v1593, %v1592
          %v1601 = vpack.c.b16 %v1595, %v1594
          %v1602 = vpack.c.b16 %v1597, %v1596
          %v1603 = vpack.c.b16 %v1599, %v1598
          %vm1608 = vcmask 523264
          %v1610 = vsel %vm1608, %v1568, 0
          %1612 = vmatprep.subr.bf16.mxu0 0
          %1613 = vmatpush1.bf16.msra.mxu0 0
          %1614 = vmatprep.subr.bf16.mxu0 0
          %1615 = vmatpush1.bf16.msra.mxu0 0
          %1616 = vmatprep.subr.bf16.mxu0 0
          %1617 = vmatpush1.bf16.msra.mxu0 0
          %1618 = vmatprep.subr.bf16.mxu0 0
          %1619 = vmatpush1.bf16.msra.mxu0 0
          %1620 = vmatprep.subr.bf16.mxu0 0
          %1621 = vmatpush1.bf16.msra.mxu0 %v1603
          %1622 = vmatprep.subr.bf16.mxu0 0
          %1623 = vmatpush1.bf16.msra.mxu0 %v1602
          %1624 = vmatprep.subr.bf16.mxu0 0
          %1625 = vmatpush1.bf16.msra.mxu0 %v1601
          %1626 = vmatprep.subr.bf16.mxu0 0
          %1627 = vmatpush1.bf16.msra.mxu0 %v1600
          %1628 = vmatprep.subr.bf16.mxu0 0
          %1629 = vmatpush2.bf16.msra.mxu0 0
          %1630 = vmatprep.subr.bf16.mxu0 0
          %1631 = vmatpush2.bf16.msra.mxu0 0
          %1632 = vmatprep.subr.bf16.mxu0 0
          %1633 = vmatpush2.bf16.msra.mxu0 0
          %1634 = vmatprep.subr.bf16.mxu0 0
          %1635 = vmatpush2.bf16.msra.mxu0 0
          %1636 = vmatprep.subr.bf16.mxu0 0
          %1637 = vmatpush2.bf16.msra.mxu0 0
          %1638 = vmatprep.subr.bf16.mxu0 0
          %1639 = vmatpush2.bf16.msra.mxu0 0
          %1640 = vmatprep.subr.bf16.mxu0 0
          %1641 = vmatpush2.bf16.msra.mxu0 0
          %1642 = vmatprep.subr.bf16.mxu0 0
          %1643 = vmatpush2.bf16.msra.mxu0 0
          %1644 = vmatprep.mubr.bf16.mxu0 0
          %1645 = vmatmul.mubr.bf16.gmra.mxu0 %v1610
          %v1646 = vpop.f32.mrf.mxu0
          %v1647 = vadd.f32 %v1582, %v1646
          %v1648 = vpop.f32.mrf.mxu0
          %v1649 = vpop.f32.mrf.mxu0
          %v1650 = vpop.f32.mrf.mxu0
          %1651 = vdwg.mxu0
          %v1652 = vld [vmem:[%s17] sm:$0xf]
          %v1653 = vld [vmem:[%s17 + $0x4] sm:$0xf]
          %v1654 = vld [vmem:[%s17 + $0x8] sm:$0xf]
          %v1655 = vld [vmem:[%s17 + $0xc] sm:$0xf]
          %v1656 = vld [vmem:[%s17 + $0x10] sm:$0xf]
          %v1657 = vld [vmem:[%s17 + $0x14] sm:$0xf]
          %v1658 = vld [vmem:[%s17 + $0x18] sm:$0xf]
          %v1659 = vld [vmem:[%s17 + $0x1c] sm:$0xf]
          %v1660 = vld [vmem:[%s19] sm:$0x1]
          %v1662 = vlaneseq
          %v1663 = vshrl.u32 %v1662, 7
          %v1664 = vsub.s32 0, %v1663
          %v1665 = vrot.slane %v1660, %v1664
          %v1675 = vunpack.c.l.b16 %v1652
          %v1676 = vunpack.c.l.b16 %v1653
          %v1677 = vunpack.c.l.b16 %v1654
          %v1678 = vunpack.c.l.b16 %v1655
          %v1679 = vunpack.c.l.b16 %v1656
          %v1680 = vunpack.c.l.b16 %v1657
          %v1681 = vunpack.c.l.b16 %v1658
          %v1682 = vunpack.c.l.b16 %v1659
          %v1683 = vpack.c.b16 %v1676, %v1675
          %v1684 = vpack.c.b16 %v1678, %v1677
          %v1685 = vpack.c.b16 %v1680, %v1679
          %v1686 = vpack.c.b16 %v1682, %v1681
          %1691 = vmatprep.subr.bf16.mxu0 0
          %1692 = vmatpush1.bf16.msra.mxu0 0
          %1693 = vmatprep.subr.bf16.mxu0 0
          %1694 = vmatpush1.bf16.msra.mxu0 0
          %1695 = vmatprep.subr.bf16.mxu0 0
          %1696 = vmatpush1.bf16.msra.mxu0 0
          %1697 = vmatprep.subr.bf16.mxu0 0
          %1698 = vmatpush1.bf16.msra.mxu0 0
          %1699 = vmatprep.subr.bf16.mxu0 0
          %1700 = vmatpush1.bf16.msra.mxu0 %v1686
          %1701 = vmatprep.subr.bf16.mxu0 0
          %1702 = vmatpush1.bf16.msra.mxu0 %v1685
          %1703 = vmatprep.subr.bf16.mxu0 0
          %1704 = vmatpush1.bf16.msra.mxu0 %v1684
          %1705 = vmatprep.subr.bf16.mxu0 0
          %1706 = vmatpush1.bf16.msra.mxu0 %v1683
          %1707 = vmatprep.subr.bf16.mxu0 0
          %1708 = vmatpush2.bf16.msra.mxu0 0
          %1709 = vmatprep.subr.bf16.mxu0 0
          %1710 = vmatpush2.bf16.msra.mxu0 0
          %1711 = vmatprep.subr.bf16.mxu0 0
          %1712 = vmatpush2.bf16.msra.mxu0 0
          %1713 = vmatprep.subr.bf16.mxu0 0
          %1714 = vmatpush2.bf16.msra.mxu0 0
          %1715 = vmatprep.subr.bf16.mxu0 0
          %1716 = vmatpush2.bf16.msra.mxu0 0
          %1717 = vmatprep.subr.bf16.mxu0 0
          %1718 = vmatpush2.bf16.msra.mxu0 0
          %1719 = vmatprep.subr.bf16.mxu0 0
          %1720 = vmatpush2.bf16.msra.mxu0 0
          %1721 = vmatprep.subr.bf16.mxu0 0
          %1722 = vmatpush2.bf16.msra.mxu0 0
          %1723 = vmatprep.mubr.bf16.mxu0 0
          %1724 = vmatmul.mubr.bf16.gmra.mxu0 %v1610
          %v1725 = vpop.f32.mrf.mxu0
          %v1726 = vadd.f32 %v1665, %v1725
          %v1727 = vpop.f32.mrf.mxu0
          %v1728 = vpop.f32.mrf.mxu0
          %v1729 = vpop.f32.mrf.mxu0
          %1730 = vdwg.mxu0
          %v1731 = vld [vmem:[%s21] sm:$0xf]
          %v1732 = vld [vmem:[%s21 + $0x4] sm:$0xf]
          %v1733 = vld [vmem:[%s21 + $0x8] sm:$0xf]
          %v1734 = vld [vmem:[%s21 + $0xc] sm:$0xf]
          %v1735 = vld [vmem:[%s21 + $0x10] sm:$0xf]
          %v1736 = vld [vmem:[%s21 + $0x14] sm:$0xf]
          %v1737 = vld [vmem:[%s21 + $0x18] sm:$0xf]
          %v1738 = vld [vmem:[%s21 + $0x1c] sm:$0xf]
          %v1739 = vld [vmem:[%s23] sm:$0x1]
          %v1741 = vlaneseq
          %v1742 = vshrl.u32 %v1741, 7
          %v1743 = vsub.s32 0, %v1742
          %v1744 = vrot.slane %v1739, %v1743
          %v1754 = vunpack.c.l.b16 %v1731
          %v1755 = vunpack.c.l.b16 %v1732
          %v1756 = vunpack.c.l.b16 %v1733
          %v1757 = vunpack.c.l.b16 %v1734
          %v1758 = vunpack.c.l.b16 %v1735
          %v1759 = vunpack.c.l.b16 %v1736
          %v1760 = vunpack.c.l.b16 %v1737
          %v1761 = vunpack.c.l.b16 %v1738
          %v1762 = vpack.c.b16 %v1755, %v1754
          %v1763 = vpack.c.b16 %v1757, %v1756
          %v1764 = vpack.c.b16 %v1759, %v1758
          %v1765 = vpack.c.b16 %v1761, %v1760
          %1770 = vmatprep.subr.bf16.mxu0 0
          %1771 = vmatpush1.bf16.msra.mxu0 0
          %1772 = vmatprep.subr.bf16.mxu0 0
          %1773 = vmatpush1.bf16.msra.mxu0 0
          %1774 = vmatprep.subr.bf16.mxu0 0
          %1775 = vmatpush1.bf16.msra.mxu0 0
          %1776 = vmatprep.subr.bf16.mxu0 0
          %1777 = vmatpush1.bf16.msra.mxu0 0
          %1778 = vmatprep.subr.bf16.mxu0 0
          %1779 = vmatpush1.bf16.msra.mxu0 %v1765
          %1780 = vmatprep.subr.bf16.mxu0 0
          %1781 = vmatpush1.bf16.msra.mxu0 %v1764
          %1782 = vmatprep.subr.bf16.mxu0 0
          %1783 = vmatpush1.bf16.msra.mxu0 %v1763
          %1784 = vmatprep.subr.bf16.mxu0 0
          %1785 = vmatpush1.bf16.msra.mxu0 %v1762
          %1786 = vmatprep.subr.bf16.mxu0 0
          %1787 = vmatpush2.bf16.msra.mxu0 0
          %1788 = vmatprep.subr.bf16.mxu0 0
          %1789 = vmatpush2.bf16.msra.mxu0 0
          %1790 = vmatprep.subr.bf16.mxu0 0
          %1791 = vmatpush2.bf16.msra.mxu0 0
          %1792 = vmatprep.subr.bf16.mxu0 0
          %1793 = vmatpush2.bf16.msra.mxu0 0
          %1794 = vmatprep.subr.bf16.mxu0 0
          %1795 = vmatpush2.bf16.msra.mxu0 0
          %1796 = vmatprep.subr.bf16.mxu0 0
          %1797 = vmatpush2.bf16.msra.mxu0 0
          %1798 = vmatprep.subr.bf16.mxu0 0
          %1799 = vmatpush2.bf16.msra.mxu0 0
          %1800 = vmatprep.subr.bf16.mxu0 0
          %1801 = vmatpush2.bf16.msra.mxu0 0
          %1802 = vmatprep.mubr.bf16.mxu0 0
          %1803 = vmatmul.mubr.bf16.gmra.mxu0 %v1610
          %v1804 = vpop.f32.mrf.mxu0
          %v1805 = vadd.f32 %v1744, %v1804
          %v1806 = vpop.f32.mrf.mxu0
          %v1807 = vpop.f32.mrf.mxu0
          %v1808 = vpop.f32.mrf.mxu0
          %1809 = vdwg.mxu0
          %v1810 = vlaneseq
          %v1811 = vshrl.u32 %v1810, 7
          %v1812 = vsub.s32 0, %v1811
          %v1813 = vrot.slane %v1805, %v1812
          %1815 = vbcast.lane.b32.xlu0 %v1813, 256
          %v1816 = vpop.permute.xlu0 %1815
          %v1817 = vlaneseq
          %v1818 = vshrl.u32 %v1817, 7
          %v1819 = vsub.s32 1, %v1818
          %v1820 = vrot.slane %v1805, %v1819
          %1822 = vbcast.lane.b32.xlu0 %v1820, 256
          %v1823 = vpop.permute.xlu0 %1822
          %v1826 = vunpack.c.l.s4 1966171168
          %v1827 = vunpack.c.0.s8 %v1826
          %v1828 = vlaneseq
          %v1829 = vshrl.u32 %v1828, 7
          %v1830 = vsub.s32 %v1827, %v1829
          %v1831 = vrot.slane %v1726, %v1830
          %v1832 = vcombine.high %v1831, %v1831
          %v1834 = vunpack.c.l.s4 1966171168
          %v1835 = vunpack.c.0.s8 %v1834
          %v1836 = vlaneseq
          %v1837 = vshrl.u32 %v1836, 7
          %v1838 = vsub.s32 %v1835, %v1837
          %v1839 = vrot.slane %v1831, %v1838
          %v1841 = vunpack.c.l.s4 1966171168
          %v1842 = vunpack.c.0.s8 %v1841
          %v1843 = vlaneseq
          %v1844 = vshrl.u32 %v1843, 7
          %v1845 = vsub.s32 %v1842, %v1844
          %v1846 = vrot.slane %v1832, %v1845
          %v1847 = vlaneseq
          %v1848 = vshrl.u32 %v1847, 7
          %v1849 = vsub.s32 0, %v1848
          %v1850 = vrot.slane %v1839, %v1849
          %v1851 = vlaneseq
          %v1852 = vshrl.u32 %v1851, 7
          %v1853 = vsub.s32 0, %v1852
          %v1854 = vrot.slane %v1846, %v1853
          %v1857 = vmul.f32 %v1816, %v1850
          %v1858 = vmul.f32 %v1823, %v1854
          %vm1859 = vcmask 64512
          %v1860 = vsel %vm1859, %v1857, -inf
          %1861 = vmax.xlane.f32.xlu0 %v1860
          %v1862 = vpop.xlane.xlu0 %1861
          %v1863 = vsel %vm1859, %v1858, -inf
          %1864 = vmax.xlane.f32.xlu0 %v1863
          %v1865 = vpop.xlane.xlu0 %1864
          %v1866 = vsub.f32 %v1857, %v1862
          %v1867 = vsub.f32 %v1858, %v1865
          %v1868 = vmul.f32 %v1866, 1.442695
          %v1869 = vpow.pop %v1868
          %v1870 = vmul.f32 %v1867, 1.442695
          %v1871 = vpow.pop %v1870
          %v1872 = vsel %vm1859, %v1869, 0.0
          %1873 = vadd.xlane.f32.xlu0 %v1872
          %v1874 = vpop.xlane.xlu0 %1873
          %v1875 = vsel %vm1859, %v1871, 0.0
          %1876 = vadd.xlane.f32.xlu0 %v1875
          %v1877 = vpop.xlane.xlu0 %1876
          %v1878 = vrcp.pop %v1874
          %v1879 = vmul.f32 %v1869, %v1878
          %v1880 = vrcp.pop %v1877
          %v1881 = vmul.f32 %v1871, %v1880
          %v1882 = vlaneseq
          %v1883 = vshrl.u32 %v1882, 7
          %v1884 = vsub.s32 0, %v1883
          %v1885 = vrot.slane %v1647, %v1884
          %1887 = vbcast.lane.b32.xlu0 %v1885, 256
          %v1888 = vpop.permute.xlu0 %1887
          %v1889 = vlaneseq
          %v1890 = vshrl.u32 %v1889, 7
          %v1891 = vsub.s32 1, %v1890
          %v1892 = vrot.slane %v1647, %v1891
          %1894 = vbcast.lane.b32.xlu0 %v1892, 256
          %v1895 = vpop.permute.xlu0 %1894
          %v1897 = vsel %vm1859, %v1879, 0
          %1899 = vmatprep.subr.mxu0 0.0
          %1900 = vmatpush1.msra.mxu0 0.0
          %1901 = vmatprep.subr.mxu0 0.0
          %1902 = vmatpush1.msra.mxu0 0.0
          %1903 = vmatprep.subr.mxu0 0.0
          %1904 = vmatpush1.msra.mxu0 0.0
          %1905 = vmatprep.subr.mxu0 0.0
          %1906 = vmatpush1.msra.mxu0 0.0
          %1907 = vmatprep.subr.mxu0 0.0
          %1908 = vmatpush1.msra.mxu0 0.0
          %1909 = vmatprep.subr.mxu0 0.0
          %1910 = vmatpush1.msra.mxu0 0.0
          %1911 = vmatprep.subr.mxu0 0.0
          %1912 = vmatpush1.msra.mxu0 0.0
          %1913 = vmatprep.subr.mxu0 0.0
          %1914 = vmatpush1.msra.mxu0 0.0
          %1915 = vmatprep.subr.mxu0 0.0
          %1916 = vmatpush1.msra.mxu0 0.0
          %1917 = vmatprep.subr.mxu0 0.0
          %1918 = vmatpush1.msra.mxu0 0.0
          %1919 = vmatprep.subr.mxu0 0.0
          %1920 = vmatpush1.msra.mxu0 0.0
          %1921 = vmatprep.subr.mxu0 0.0
          %1922 = vmatpush1.msra.mxu0 0.0
          %1923 = vmatprep.subr.mxu0 0.0
          %1924 = vmatpush1.msra.mxu0 0.0
          %1925 = vmatprep.subr.mxu0 0.0
          %1926 = vmatpush1.msra.mxu0 0.0
          %1927 = vmatprep.subr.mxu0 0.0
          %1928 = vmatpush1.msra.mxu0 0.0
          %1929 = vmatprep.subr.mxu0 0.0
          %1930 = vmatpush1.msra.mxu0 %v1888
          %1931 = vmatprep.subr.mxu0 0.0
          %1932 = vmatpush2.msra.mxu0 0.0
          %1933 = vmatprep.subr.mxu0 0.0
          %1934 = vmatpush2.msra.mxu0 0.0
          %1935 = vmatprep.subr.mxu0 0.0
          %1936 = vmatpush2.msra.mxu0 0.0
          %1937 = vmatprep.subr.mxu0 0.0
          %1938 = vmatpush2.msra.mxu0 0.0
          %1939 = vmatprep.subr.mxu0 0.0
          %1940 = vmatpush2.msra.mxu0 0.0
          %1941 = vmatprep.subr.mxu0 0.0
          %1942 = vmatpush2.msra.mxu0 0.0
          %1943 = vmatprep.subr.mxu0 0.0
          %1944 = vmatpush2.msra.mxu0 0.0
          %1945 = vmatprep.subr.mxu0 0.0
          %1946 = vmatpush2.msra.mxu0 0.0
          %1947 = vmatprep.subr.mxu0 0.0
          %1948 = vmatpush2.msra.mxu0 0.0
          %1949 = vmatprep.subr.mxu0 0.0
          %1950 = vmatpush2.msra.mxu0 0.0
          %1951 = vmatprep.subr.mxu0 0.0
          %1952 = vmatpush2.msra.mxu0 0.0
          %1953 = vmatprep.subr.mxu0 0.0
          %1954 = vmatpush2.msra.mxu0 0.0
          %1955 = vmatprep.subr.mxu0 0.0
          %1956 = vmatpush2.msra.mxu0 0.0
          %1957 = vmatprep.subr.mxu0 0.0
          %1958 = vmatpush2.msra.mxu0 0.0
          %1959 = vmatprep.subr.mxu0 0.0
          %1960 = vmatpush2.msra.mxu0 0.0
          %1961 = vmatprep.subr.mxu0 0.0
          %1962 = vmatpush2.msra.mxu0 0.0
          %1963 = vmatprep.mubr.f32.mxu0 0.0
          %1964 = vmatmul.mubr.f32.gmra.mxu0 %v1897
          %v1965 = vpop.f32.mrf.mxu0
          %v1966 = vadd.f32 0.0, %v1965
          %v1967 = vpop.f32.mrf.mxu0
          %1968 = vdwg.mxu0
          %v1970 = vsel %vm1859, %v1881, 0
          %1972 = vmatprep.subr.mxu0 0.0
          %1973 = vmatpush1.msra.mxu0 0.0
          %1974 = vmatprep.subr.mxu0 0.0
          %1975 = vmatpush1.msra.mxu0 0.0
          %1976 = vmatprep.subr.mxu0 0.0
          %1977 = vmatpush1.msra.mxu0 0.0
          %1978 = vmatprep.subr.mxu0 0.0
          %1979 = vmatpush1.msra.mxu0 0.0
          %1980 = vmatprep.subr.mxu0 0.0
          %1981 = vmatpush1.msra.mxu0 0.0
          %1982 = vmatprep.subr.mxu0 0.0
          %1983 = vmatpush1.msra.mxu0 0.0
          %1984 = vmatprep.subr.mxu0 0.0
          %1985 = vmatpush1.msra.mxu0 0.0
          %1986 = vmatprep.subr.mxu0 0.0
          %1987 = vmatpush1.msra.mxu0 0.0
          %1988 = vmatprep.subr.mxu0 0.0
          %1989 = vmatpush1.msra.mxu0 0.0
          %1990 = vmatprep.subr.mxu0 0.0
          %1991 = vmatpush1.msra.mxu0 0.0
          %1992 = vmatprep.subr.mxu0 0.0
          %1993 = vmatpush1.msra.mxu0 0.0
          %1994 = vmatprep.subr.mxu0 0.0
          %1995 = vmatpush1.msra.mxu0 0.0
          %1996 = vmatprep.subr.mxu0 0.0
          %1997 = vmatpush1.msra.mxu0 0.0
          %1998 = vmatprep.subr.mxu0 0.0
          %1999 = vmatpush1.msra.mxu0 0.0
          %2000 = vmatprep.subr.mxu0 0.0
          %2001 = vmatpush1.msra.mxu0 0.0
          %2002 = vmatprep.subr.mxu0 0.0
          %2003 = vmatpush1.msra.mxu0 %v1895
          %2004 = vmatprep.subr.mxu0 0.0
          %2005 = vmatpush2.msra.mxu0 0.0
          %2006 = vmatprep.subr.mxu0 0.0
          %2007 = vmatpush2.msra.mxu0 0.0
          %2008 = vmatprep.subr.mxu0 0.0
          %2009 = vmatpush2.msra.mxu0 0.0
          %2010 = vmatprep.subr.mxu0 0.0
          %2011 = vmatpush2.msra.mxu0 0.0
          %2012 = vmatprep.subr.mxu0 0.0
          %2013 = vmatpush2.msra.mxu0 0.0
          %2014 = vmatprep.subr.mxu0 0.0
          %2015 = vmatpush2.msra.mxu0 0.0
          %2016 = vmatprep.subr.mxu0 0.0
          %2017 = vmatpush2.msra.mxu0 0.0
          %2018 = vmatprep.subr.mxu0 0.0
          %2019 = vmatpush2.msra.mxu0 0.0
          %2020 = vmatprep.subr.mxu0 0.0
          %2021 = vmatpush2.msra.mxu0 0.0
          %2022 = vmatprep.subr.mxu0 0.0
          %2023 = vmatpush2.msra.mxu0 0.0
          %2024 = vmatprep.subr.mxu0 0.0
          %2025 = vmatpush2.msra.mxu0 0.0
          %2026 = vmatprep.subr.mxu0 0.0
          %2027 = vmatpush2.msra.mxu0 0.0
          %2028 = vmatprep.subr.mxu0 0.0
          %2029 = vmatpush2.msra.mxu0 0.0
          %2030 = vmatprep.subr.mxu0 0.0
          %2031 = vmatpush2.msra.mxu0 0.0
          %2032 = vmatprep.subr.mxu0 0.0
          %2033 = vmatpush2.msra.mxu0 0.0
          %2034 = vmatprep.subr.mxu0 0.0
          %2035 = vmatpush2.msra.mxu0 0.0
          %2036 = vmatprep.mubr.f32.mxu0 0.0
          %2037 = vmatmul.mubr.f32.gmra.mxu0 %v1970
          %v2038 = vpop.f32.mrf.mxu0
          %v2039 = vadd.f32 0.0, %v2038
          %v2040 = vpop.f32.mrf.mxu0
          %2041 = vdwg.mxu0
          %v2042 = vpack.c.bf16 %v1966, %v1966
          %v2043 = vpack.c.bf16 %v2039, %v2039
          %v2044 = vld [vmem:[%s25] sm:$0xf]
          %v2045 = vld [vmem:[%s27] sm:$0x1]
          %v2047 = vlaneseq
          %v2048 = vshrl.u32 %v2047, 7
          %v2049 = vsub.s32 0, %v2048
          %v2050 = vrot.slane %v2045, %v2049
          %v2054 = vunpack.c.l.b16 %v2042
          %v2055 = vunpack.c.l.b16 %v2043
          %2056 = vset.pattern.permute.xlu0 0
          %2057 = vperm.xlu0 %2056, %v2054
          %v2058 = vpop.permute.xlu0 %2057
          %2059 = vset.pattern.permute.xlu0 0
          %2060 = vperm.xlu0 %2059, %v2055
          %v2061 = vpop.permute.xlu0 %2060
          %v2062 = vlaneseq
          %v2063 = vand.u32 %v2062, 127
          %v2064 = vlaneseq
          %v2065 = vshrl.u32 %v2064, 7
          %v2066 = vsub.s32 %v2063, %v2065
          %v2067 = vrot.slane %v2058, %v2066
          %v2068 = vlaneseq
          %v2069 = vshrl.u32 %v2068, 7
          %v2070 = vsub.s32 %v2063, %v2069
          %v2071 = vrot.slane %v2061, %v2070
          %vm2072 = vcmask 1041409
          %v2073 = vsel %vm2072, %v2071, %v2067
          %v2074 = vpack.c.b16 %v2073, %v2073
          %v2076 = vsel %vm1859, %v2074, 0
          %vm2078 = vcmask 1043456
          %v2080 = vsel %vm2078, %v2044, 0
          %2082 = vmatprep.subr.bf16.mxu0 0
          %2083 = vmatpush1.bf16.msra.mxu0 0
          %2084 = vmatprep.subr.bf16.mxu0 0
          %2085 = vmatpush1.bf16.msra.mxu0 0
          %2086 = vmatprep.subr.bf16.mxu0 0
          %2087 = vmatpush1.bf16.msra.mxu0 0
          %2088 = vmatprep.subr.bf16.mxu0 0
          %2089 = vmatpush1.bf16.msra.mxu0 0
          %2090 = vmatprep.subr.bf16.mxu0 0
          %2091 = vmatpush1.bf16.msra.mxu0 0
          %2092 = vmatprep.subr.bf16.mxu0 0
          %2093 = vmatpush1.bf16.msra.mxu0 0
          %2094 = vmatprep.subr.bf16.mxu0 0
          %2095 = vmatpush1.bf16.msra.mxu0 0
          %2096 = vmatprep.subr.bf16.mxu0 0
          %2097 = vmatpush1.bf16.msra.mxu0 %v2080
          %2098 = vmatprep.subr.bf16.mxu0 0
          %2099 = vmatpush2.bf16.msra.mxu0 0
          %2100 = vmatprep.subr.bf16.mxu0 0
          %2101 = vmatpush2.bf16.msra.mxu0 0
          %2102 = vmatprep.subr.bf16.mxu0 0
          %2103 = vmatpush2.bf16.msra.mxu0 0
          %2104 = vmatprep.subr.bf16.mxu0 0
          %2105 = vmatpush2.bf16.msra.mxu0 0
          %2106 = vmatprep.subr.bf16.mxu0 0
          %2107 = vmatpush2.bf16.msra.mxu0 0
          %2108 = vmatprep.subr.bf16.mxu0 0
          %2109 = vmatpush2.bf16.msra.mxu0 0
          %2110 = vmatprep.subr.bf16.mxu0 0
          %2111 = vmatpush2.bf16.msra.mxu0 0
          %2112 = vmatprep.subr.bf16.mxu0 0
          %2113 = vmatpush2.bf16.msra.mxu0 0
          %2114 = vmatprep.mubr.bf16.mxu0 0
          %2115 = vmatmul.mubr.bf16.gmra.mxu0 %v2076
          %v2116 = vpop.f32.mrf.mxu0
          %v2117 = vadd.f32 %v2050, %v2116
          %v2118 = vpop.f32.mrf.mxu0
          %v2119 = vpop.f32.mrf.mxu0
          %v2120 = vpop.f32.mrf.mxu0
          %2121 = vdwg.mxu0
          %v2122 = vadd.f32 %v2117, %v1567
          %v2123 = vld [vmem:[%s29] sm:$0xff]
          %v2124 = vld [vmem:[%s29 + $0x8] sm:$0xff]
          %v2125 = vld [vmem:[%s29 + $0x10] sm:$0xff]
          %v2126 = vld [vmem:[%s29 + $0x18] sm:$0xff]
          %v2127 = vld [vmem:[%s29 + $0x20] sm:$0xff]
          %v2128 = vld [vmem:[%s29 + $0x28] sm:$0xff]
          %v2129 = vld [vmem:[%s29 + $0x30] sm:$0xff]
          %v2130 = vld [vmem:[%s29 + $0x38] sm:$0xff]
          %v2131 = vld [vmem:[%s31] sm:$0x1]
          %v2133 = vlaneseq
          %v2134 = vshrl.u32 %v2133, 7
          %v2135 = vsub.s32 0, %v2134
          %v2136 = vrot.slane %v2131, %v2135
          %v2139 = vsel %vm1608, %v2122, 0
          %2141 = vmatprep.subr.mxu0 0.0
          %2142 = vmatpush1.msra.mxu0 0.0
          %2143 = vmatprep.subr.mxu0 0.0
          %2144 = vmatpush1.msra.mxu0 0.0
          %2145 = vmatprep.subr.mxu0 0.0
          %2146 = vmatpush1.msra.mxu0 0.0
          %2147 = vmatprep.subr.mxu0 0.0
          %2148 = vmatpush1.msra.mxu0 0.0
          %2149 = vmatprep.subr.mxu0 0.0
          %2150 = vmatpush1.msra.mxu0 0.0
          %2151 = vmatprep.subr.mxu0 0.0
          %2152 = vmatpush1.msra.mxu0 0.0
          %2153 = vmatprep.subr.mxu0 0.0
          %2154 = vmatpush1.msra.mxu0 0.0
          %2155 = vmatprep.subr.mxu0 0.0
          %2156 = vmatpush1.msra.mxu0 0.0
          %2157 = vmatprep.subr.mxu0 0.0
          %2158 = vmatpush1.msra.mxu0 %v2130
          %2159 = vmatprep.subr.mxu0 0.0
          %2160 = vmatpush1.msra.mxu0 %v2129
          %2161 = vmatprep.subr.mxu0 0.0
          %2162 = vmatpush1.msra.mxu0 %v2128
          %2163 = vmatprep.subr.mxu0 0.0
          %2164 = vmatpush1.msra.mxu0 %v2127
          %2165 = vmatprep.subr.mxu0 0.0
          %2166 = vmatpush1.msra.mxu0 %v2126
          %2167 = vmatprep.subr.mxu0 0.0
          %2168 = vmatpush1.msra.mxu0 %v2125
          %2169 = vmatprep.subr.mxu0 0.0
          %2170 = vmatpush1.msra.mxu0 %v2124
          %2171 = vmatprep.subr.mxu0 0.0
          %2172 = vmatpush1.msra.mxu0 %v2123
          %2173 = vmatprep.subr.mxu0 0.0
          %2174 = vmatpush2.msra.mxu0 0.0
          %2175 = vmatprep.subr.mxu0 0.0
          %2176 = vmatpush2.msra.mxu0 0.0
          %2177 = vmatprep.subr.mxu0 0.0
          %2178 = vmatpush2.msra.mxu0 0.0
          %2179 = vmatprep.subr.mxu0 0.0
          %2180 = vmatpush2.msra.mxu0 0.0
          %2181 = vmatprep.subr.mxu0 0.0
          %2182 = vmatpush2.msra.mxu0 0.0
          %2183 = vmatprep.subr.mxu0 0.0
          %2184 = vmatpush2.msra.mxu0 0.0
          %2185 = vmatprep.subr.mxu0 0.0
          %2186 = vmatpush2.msra.mxu0 0.0
          %2187 = vmatprep.subr.mxu0 0.0
          %2188 = vmatpush2.msra.mxu0 0.0
          %2189 = vmatprep.subr.mxu0 0.0
          %2190 = vmatpush2.msra.mxu0 0.0
          %2191 = vmatprep.subr.mxu0 0.0
          %2192 = vmatpush2.msra.mxu0 0.0
          %2193 = vmatprep.subr.mxu0 0.0
          %2194 = vmatpush2.msra.mxu0 0.0
          %2195 = vmatprep.subr.mxu0 0.0
          %2196 = vmatpush2.msra.mxu0 0.0
          %2197 = vmatprep.subr.mxu0 0.0
          %2198 = vmatpush2.msra.mxu0 0.0
          %2199 = vmatprep.subr.mxu0 0.0
          %2200 = vmatpush2.msra.mxu0 0.0
          %2201 = vmatprep.subr.mxu0 0.0
          %2202 = vmatpush2.msra.mxu0 0.0
          %2203 = vmatprep.subr.mxu0 0.0
          %2204 = vmatpush2.msra.mxu0 0.0
          %2205 = vmatprep.mubr.f32.mxu0 0.0
          %2206 = vmatmul.mubr.f32.gmra.mxu0 %v2139
          %v2207 = vpop.f32.mrf.mxu0
          %v2208 = vadd.f32 %v2136, %v2207
          %v2209 = vpop.f32.mrf.mxu0
          %2210 = vdwg.mxu0
          %v2211 = vld [vmem:[%s33] sm:$0xff]
          %v2212 = vld [vmem:[%s33 + $0x8] sm:$0xff]
          %v2213 = vld [vmem:[%s33 + $0x10] sm:$0xff]
          %v2214 = vld [vmem:[%s33 + $0x18] sm:$0xff]
          %v2215 = vld [vmem:[%s35] sm:$0x1]
          %v2217 = vlaneseq
          %v2218 = vshrl.u32 %v2217, 7
          %v2219 = vsub.s32 0, %v2218
          %v2220 = vrot.slane %v2215, %v2219
          %v2223 = vsel %vm1167, %v2208, 0
          %2225 = vmatprep.subr.mxu0 0.0
          %2226 = vmatpush1.msra.mxu0 0.0
          %2227 = vmatprep.subr.mxu0 0.0
          %2228 = vmatpush1.msra.mxu0 0.0
          %2229 = vmatprep.subr.mxu0 0.0
          %2230 = vmatpush1.msra.mxu0 0.0
          %2231 = vmatprep.subr.mxu0 0.0
          %2232 = vmatpush1.msra.mxu0 0.0
          %2233 = vmatprep.subr.mxu0 0.0
          %2234 = vmatpush1.msra.mxu0 0.0
          %2235 = vmatprep.subr.mxu0 0.0
          %2236 = vmatpush1.msra.mxu0 0.0
          %2237 = vmatprep.subr.mxu0 0.0
          %2238 = vmatpush1.msra.mxu0 0.0
          %2239 = vmatprep.subr.mxu0 0.0
          %2240 = vmatpush1.msra.mxu0 0.0
          %2241 = vmatprep.subr.mxu0 0.0
          %2242 = vmatpush1.msra.mxu0 0.0
          %2243 = vmatprep.subr.mxu0 0.0
          %2244 = vmatpush1.msra.mxu0 0.0
          %2245 = vmatprep.subr.mxu0 0.0
          %2246 = vmatpush1.msra.mxu0 0.0
          %2247 = vmatprep.subr.mxu0 0.0
          %2248 = vmatpush1.msra.mxu0 0.0
          %2249 = vmatprep.subr.mxu0 0.0
          %2250 = vmatpush1.msra.mxu0 %v2214
          %2251 = vmatprep.subr.mxu0 0.0
          %2252 = vmatpush1.msra.mxu0 %v2213
          %2253 = vmatprep.subr.mxu0 0.0
          %2254 = vmatpush1.msra.mxu0 %v2212
          %2255 = vmatprep.subr.mxu0 0.0
          %2256 = vmatpush1.msra.mxu0 %v2211
          %2257 = vmatprep.subr.mxu0 0.0
          %2258 = vmatpush2.msra.mxu0 0.0
          %2259 = vmatprep.subr.mxu0 0.0
          %2260 = vmatpush2.msra.mxu0 0.0
          %2261 = vmatprep.subr.mxu0 0.0
          %2262 = vmatpush2.msra.mxu0 0.0
          %2263 = vmatprep.subr.mxu0 0.0
          %2264 = vmatpush2.msra.mxu0 0.0
          %2265 = vmatprep.subr.mxu0 0.0
          %2266 = vmatpush2.msra.mxu0 0.0
          %2267 = vmatprep.subr.mxu0 0.0
          %2268 = vmatpush2.msra.mxu0 0.0
          %2269 = vmatprep.subr.mxu0 0.0
          %2270 = vmatpush2.msra.mxu0 0.0
          %2271 = vmatprep.subr.mxu0 0.0
          %2272 = vmatpush2.msra.mxu0 0.0
          %2273 = vmatprep.subr.mxu0 0.0
          %2274 = vmatpush2.msra.mxu0 0.0
          %2275 = vmatprep.subr.mxu0 0.0
          %2276 = vmatpush2.msra.mxu0 0.0
          %2277 = vmatprep.subr.mxu0 0.0
          %2278 = vmatpush2.msra.mxu0 0.0
          %2279 = vmatprep.subr.mxu0 0.0
          %2280 = vmatpush2.msra.mxu0 0.0
          %2281 = vmatprep.subr.mxu0 0.0
          %2282 = vmatpush2.msra.mxu0 0.0
          %2283 = vmatprep.subr.mxu0 0.0
          %2284 = vmatpush2.msra.mxu0 0.0
          %2285 = vmatprep.subr.mxu0 0.0
          %2286 = vmatpush2.msra.mxu0 0.0
          %2287 = vmatprep.subr.mxu0 0.0
          %2288 = vmatpush2.msra.mxu0 0.0
          %2289 = vmatprep.mubr.f32.mxu0 0.0
          %2290 = vmatmul.mubr.f32.gmra.mxu0 %v2223
          %v2291 = vpop.f32.mrf.mxu0
          %v2292 = vadd.f32 %v2220, %v2291
          %v2293 = vpop.f32.mrf.mxu0
          %2294 = vdwg.mxu0
          %v2295 = vsub.f32 0.0, %v2292
          %v2296 = vmul.f32 %v2295, 1.442695
          %v2297 = vpow.pop %v2296
          %v2298 = vadd.f32 %v2297, 1.0
          %v2299 = vrcp.pop %v2298
          %v2300 = vmul.f32 1.0, %v2299
          %v2301 = vmul.f32 %v2292, %v2300
          %v2302 = vld [vmem:[%s37] sm:$0xff]
          %v2303 = vld [vmem:[%s37 + $0x8] sm:$0xff]
          %v2304 = vld [vmem:[%s37 + $0x10] sm:$0xff]
          %v2305 = vld [vmem:[%s37 + $0x18] sm:$0xff]
          %v2306 = vld [vmem:[%s37 + $0x20] sm:$0xff]
          %v2307 = vld [vmem:[%s37 + $0x28] sm:$0xff]
          %v2308 = vld [vmem:[%s37 + $0x30] sm:$0xff]
          %v2309 = vld [vmem:[%s37 + $0x38] sm:$0xff]
          %v2310 = vld [vmem:[%s37 + $0x40] sm:$0xff]
          %v2311 = vld [vmem:[%s37 + $0x48] sm:$0xff]
          %v2312 = vld [vmem:[%s37 + $0x50] sm:$0xff]
          %v2313 = vld [vmem:[%s37 + $0x58] sm:$0xff]
          %v2314 = vld [vmem:[%s37 + $0x60] sm:$0xff]
          %v2315 = vld [vmem:[%s37 + $0x68] sm:$0xff]
          %v2316 = vld [vmem:[%s37 + $0x70] sm:$0xff]
          %v2317 = vld [vmem:[%s37 + $0x78] sm:$0xff]
          %v2318 = vld [vmem:[%s37 + $0x80] sm:$0xff]
          %v2319 = vld [vmem:[%s37 + $0x88] sm:$0xff]
          %v2320 = vld [vmem:[%s37 + $0x90] sm:$0xff]
          %v2321 = vld [vmem:[%s37 + $0x98] sm:$0xff]
          %v2322 = vld [vmem:[%s37 + $0xa0] sm:$0xff]
          %v2323 = vld [vmem:[%s37 + $0xa8] sm:$0xff]
          %v2324 = vld [vmem:[%s37 + $0xb0] sm:$0xff]
          %v2325 = vld [vmem:[%s37 + $0xb8] sm:$0xff]
          %v2326 = vld [vmem:[%s37 + $0xc0] sm:$0xff]
          %v2327 = vld [vmem:[%s37 + $0xc8] sm:$0xff]
          %v2328 = vld [vmem:[%s37 + $0xd0] sm:$0xff]
          %v2329 = vld [vmem:[%s37 + $0xd8] sm:$0xff]
          %v2330 = vld [vmem:[%s37 + $0xe0] sm:$0xff]
          %v2331 = vld [vmem:[%s37 + $0xe8] sm:$0xff]
          %v2332 = vld [vmem:[%s37 + $0xf0] sm:$0xff]
          %v2333 = vld [vmem:[%s37 + $0xf8] sm:$0xff]
          %v2334 = vld [vmem:[%s39] sm:$0xff]
          %v2336 = vlaneseq
          %v2337 = vshrl.u32 %v2336, 7
          %v2338 = vsub.s32 0, %v2337
          %v2339 = vrot.slane %v2334, %v2338
          %v2340 = vlaneseq
          %v2341 = vshrl.u32 %v2340, 7
          %v2342 = vsub.s32 1, %v2341
          %v2343 = vrot.slane %v2334, %v2342
          %v2344 = vlaneseq
          %v2345 = vshrl.u32 %v2344, 7
          %v2346 = vsub.s32 2, %v2345
          %v2347 = vrot.slane %v2334, %v2346
          %v2348 = vlaneseq
          %v2349 = vshrl.u32 %v2348, 7
          %v2350 = vsub.s32 3, %v2349
          %v2351 = vrot.slane %v2334, %v2350
          %v2352 = vlaneseq
          %v2353 = vshrl.u32 %v2352, 7
          %v2354 = vsub.s32 4, %v2353
          %v2355 = vrot.slane %v2334, %v2354
          %v2356 = vlaneseq
          %v2357 = vshrl.u32 %v2356, 7
          %v2358 = vsub.s32 5, %v2357
          %v2359 = vrot.slane %v2334, %v2358
          %v2360 = vlaneseq
          %v2361 = vshrl.u32 %v2360, 7
          %v2362 = vsub.s32 6, %v2361
          %v2363 = vrot.slane %v2334, %v2362
          %v2364 = vlaneseq
          %v2365 = vshrl.u32 %v2364, 7
          %v2366 = vsub.s32 7, %v2365
          %v2367 = vrot.slane %v2334, %v2366
          %v2377 = vsel %vm1167, %v2301, 0
          %2379 = vmatprep.subr.mxu0 0.0
          %2380 = vmatpush1.msra.mxu0 0.0
          %2381 = vmatprep.subr.mxu0 0.0
          %2382 = vmatpush1.msra.mxu0 0.0
          %2383 = vmatprep.subr.mxu0 0.0
          %2384 = vmatpush1.msra.mxu0 0.0
          %2385 = vmatprep.subr.mxu0 0.0
          %2386 = vmatpush1.msra.mxu0 0.0
          %2387 = vmatprep.subr.mxu0 0.0
          %2388 = vmatpush1.msra.mxu0 0.0
          %2389 = vmatprep.subr.mxu0 0.0
          %2390 = vmatpush1.msra.mxu0 0.0
          %2391 = vmatprep.subr.mxu0 0.0
          %2392 = vmatpush1.msra.mxu0 0.0
          %2393 = vmatprep.subr.mxu0 0.0
          %2394 = vmatpush1.msra.mxu0 0.0
          %2395 = vmatprep.subr.mxu0 0.0
          %2396 = vmatpush1.msra.mxu0 0.0
          %2397 = vmatprep.subr.mxu0 0.0
          %2398 = vmatpush1.msra.mxu0 0.0
          %2399 = vmatprep.subr.mxu0 0.0
          %2400 = vmatpush1.msra.mxu0 0.0
          %2401 = vmatprep.subr.mxu0 0.0
          %2402 = vmatpush1.msra.mxu0 0.0
          %2403 = vmatprep.subr.mxu0 %v2327
          %2404 = vmatpush1.msra.mxu0 %v2326
          %2405 = vmatprep.subr.mxu0 %v2319
          %2406 = vmatpush1.msra.mxu0 %v2318
          %2407 = vmatprep.subr.mxu0 %v2311
          %2408 = vmatpush1.msra.mxu0 %v2310
          %2409 = vmatprep.subr.mxu0 %v2303
          %2410 = vmatpush1.msra.mxu0 %v2302
          %2411 = vmatprep.subr.mxu0 0.0
          %2412 = vmatpush2.msra.mxu0 0.0
          %2413 = vmatprep.subr.mxu0 0.0
          %2414 = vmatpush2.msra.mxu0 0.0
          %2415 = vmatprep.subr.mxu0 0.0
          %2416 = vmatpush2.msra.mxu0 0.0
          %2417 = vmatprep.subr.mxu0 0.0
          %2418 = vmatpush2.msra.mxu0 0.0
          %2419 = vmatprep.subr.mxu0 0.0
          %2420 = vmatpush2.msra.mxu0 0.0
          %2421 = vmatprep.subr.mxu0 0.0
          %2422 = vmatpush2.msra.mxu0 0.0
          %2423 = vmatprep.subr.mxu0 0.0
          %2424 = vmatpush2.msra.mxu0 0.0
          %2425 = vmatprep.subr.mxu0 0.0
          %2426 = vmatpush2.msra.mxu0 0.0
          %2427 = vmatprep.subr.mxu0 0.0
          %2428 = vmatpush2.msra.mxu0 0.0
          %2429 = vmatprep.subr.mxu0 0.0
          %2430 = vmatpush2.msra.mxu0 0.0
          %2431 = vmatprep.subr.mxu0 0.0
          %2432 = vmatpush2.msra.mxu0 0.0
          %2433 = vmatprep.subr.mxu0 0.0
          %2434 = vmatpush2.msra.mxu0 0.0
          %2435 = vmatprep.subr.mxu0 0.0
          %2436 = vmatpush2.msra.mxu0 0.0
          %2437 = vmatprep.subr.mxu0 0.0
          %2438 = vmatpush2.msra.mxu0 0.0
          %2439 = vmatprep.subr.mxu0 0.0
          %2440 = vmatpush2.msra.mxu0 0.0
          %2441 = vmatprep.subr.mxu0 0.0
          %2442 = vmatpush2.msra.mxu0 0.0
          %2443 = vmatprep.mubr.f32.mxu0 0.0
          %2444 = vmatmul.mubr.f32.gmra.mxu0 %v2377
          %v2445 = vpop.f32.mrf.mxu0
          %v2446 = vadd.f32 %v2339, %v2445
          %v2447 = vpop.f32.mrf.mxu0
          %v2448 = vadd.f32 %v2343, %v2447
          %2449 = vdwg.mxu0
          %2450 = vmatprep.subr.mxu0 0.0
          %2451 = vmatpush1.msra.mxu0 0.0
          %2452 = vmatprep.subr.mxu0 0.0
          %2453 = vmatpush1.msra.mxu0 0.0
          %2454 = vmatprep.subr.mxu0 0.0
          %2455 = vmatpush1.msra.mxu0 0.0
          %2456 = vmatprep.subr.mxu0 0.0
          %2457 = vmatpush1.msra.mxu0 0.0
          %2458 = vmatprep.subr.mxu0 0.0
          %2459 = vmatpush1.msra.mxu0 0.0
          %2460 = vmatprep.subr.mxu0 0.0
          %2461 = vmatpush1.msra.mxu0 0.0
          %2462 = vmatprep.subr.mxu0 0.0
          %2463 = vmatpush1.msra.mxu0 0.0
          %2464 = vmatprep.subr.mxu0 0.0
          %2465 = vmatpush1.msra.mxu0 0.0
          %2466 = vmatprep.subr.mxu0 0.0
          %2467 = vmatpush1.msra.mxu0 0.0
          %2468 = vmatprep.subr.mxu0 0.0
          %2469 = vmatpush1.msra.mxu0 0.0
          %2470 = vmatprep.subr.mxu0 0.0
          %2471 = vmatpush1.msra.mxu0 0.0
          %2472 = vmatprep.subr.mxu0 0.0
          %2473 = vmatpush1.msra.mxu0 0.0
          %2474 = vmatprep.subr.mxu0 %v2329
          %2475 = vmatpush1.msra.mxu0 %v2328
          %2476 = vmatprep.subr.mxu0 %v2321
          %2477 = vmatpush1.msra.mxu0 %v2320
          %2478 = vmatprep.subr.mxu0 %v2313
          %2479 = vmatpush1.msra.mxu0 %v2312
          %2480 = vmatprep.subr.mxu0 %v2305
          %2481 = vmatpush1.msra.mxu0 %v2304
          %2482 = vmatprep.subr.mxu0 0.0
          %2483 = vmatpush2.msra.mxu0 0.0
          %2484 = vmatprep.subr.mxu0 0.0
          %2485 = vmatpush2.msra.mxu0 0.0
          %2486 = vmatprep.subr.mxu0 0.0
          %2487 = vmatpush2.msra.mxu0 0.0
          %2488 = vmatprep.subr.mxu0 0.0
          %2489 = vmatpush2.msra.mxu0 0.0
          %2490 = vmatprep.subr.mxu0 0.0
          %2491 = vmatpush2.msra.mxu0 0.0
          %2492 = vmatprep.subr.mxu0 0.0
          %2493 = vmatpush2.msra.mxu0 0.0
          %2494 = vmatprep.subr.mxu0 0.0
          %2495 = vmatpush2.msra.mxu0 0.0
          %2496 = vmatprep.subr.mxu0 0.0
          %2497 = vmatpush2.msra.mxu0 0.0
          %2498 = vmatprep.subr.mxu0 0.0
          %2499 = vmatpush2.msra.mxu0 0.0
          %2500 = vmatprep.subr.mxu0 0.0
          %2501 = vmatpush2.msra.mxu0 0.0
          %2502 = vmatprep.subr.mxu0 0.0
          %2503 = vmatpush2.msra.mxu0 0.0
          %2504 = vmatprep.subr.mxu0 0.0
          %2505 = vmatpush2.msra.mxu0 0.0
          %2506 = vmatprep.subr.mxu0 0.0
          %2507 = vmatpush2.msra.mxu0 0.0
          %2508 = vmatprep.subr.mxu0 0.0
          %2509 = vmatpush2.msra.mxu0 0.0
          %2510 = vmatprep.subr.mxu0 0.0
          %2511 = vmatpush2.msra.mxu0 0.0
          %2512 = vmatprep.subr.mxu0 0.0
          %2513 = vmatpush2.msra.mxu0 0.0
          %2514 = vmatprep.mubr.f32.mxu0 0.0
          %2515 = vmatmul.mubr.f32.gmra.mxu0 %v2377
          %v2516 = vpop.f32.mrf.mxu0
          %v2517 = vadd.f32 %v2347, %v2516
          %v2518 = vpop.f32.mrf.mxu0
          %v2519 = vadd.f32 %v2351, %v2518
          %2520 = vdwg.mxu0
          %2521 = vmatprep.subr.mxu0 0.0
          %2522 = vmatpush1.msra.mxu0 0.0
          %2523 = vmatprep.subr.mxu0 0.0
          %2524 = vmatpush1.msra.mxu0 0.0
          %2525 = vmatprep.subr.mxu0 0.0
          %2526 = vmatpush1.msra.mxu0 0.0
          %2527 = vmatprep.subr.mxu0 0.0
          %2528 = vmatpush1.msra.mxu0 0.0
          %2529 = vmatprep.subr.mxu0 0.0
          %2530 = vmatpush1.msra.mxu0 0.0
          %2531 = vmatprep.subr.mxu0 0.0
          %2532 = vmatpush1.msra.mxu0 0.0
          %2533 = vmatprep.subr.mxu0 0.0
          %2534 = vmatpush1.msra.mxu0 0.0
          %2535 = vmatprep.subr.mxu0 0.0
          %2536 = vmatpush1.msra.mxu0 0.0
          %2537 = vmatprep.subr.mxu0 0.0
          %2538 = vmatpush1.msra.mxu0 0.0
          %2539 = vmatprep.subr.mxu0 0.0
          %2540 = vmatpush1.msra.mxu0 0.0
          %2541 = vmatprep.subr.mxu0 0.0
          %2542 = vmatpush1.msra.mxu0 0.0
          %2543 = vmatprep.subr.mxu0 0.0
          %2544 = vmatpush1.msra.mxu0 0.0
          %2545 = vmatprep.subr.mxu0 %v2331
          %2546 = vmatpush1.msra.mxu0 %v2330
          %2547 = vmatprep.subr.mxu0 %v2323
          %2548 = vmatpush1.msra.mxu0 %v2322
          %2549 = vmatprep.subr.mxu0 %v2315
          %2550 = vmatpush1.msra.mxu0 %v2314
          %2551 = vmatprep.subr.mxu0 %v2307
          %2552 = vmatpush1.msra.mxu0 %v2306
          %2553 = vmatprep.subr.mxu0 0.0
          %2554 = vmatpush2.msra.mxu0 0.0
          %2555 = vmatprep.subr.mxu0 0.0
          %2556 = vmatpush2.msra.mxu0 0.0
          %2557 = vmatprep.subr.mxu0 0.0
          %2558 = vmatpush2.msra.mxu0 0.0
          %2559 = vmatprep.subr.mxu0 0.0
          %2560 = vmatpush2.msra.mxu0 0.0
          %2561 = vmatprep.subr.mxu0 0.0
          %2562 = vmatpush2.msra.mxu0 0.0
          %2563 = vmatprep.subr.mxu0 0.0
          %2564 = vmatpush2.msra.mxu0 0.0
          %2565 = vmatprep.subr.mxu0 0.0
          %2566 = vmatpush2.msra.mxu0 0.0
          %2567 = vmatprep.subr.mxu0 0.0
          %2568 = vmatpush2.msra.mxu0 0.0
          %2569 = vmatprep.subr.mxu0 0.0
          %2570 = vmatpush2.msra.mxu0 0.0
          %2571 = vmatprep.subr.mxu0 0.0
          %2572 = vmatpush2.msra.mxu0 0.0
          %2573 = vmatprep.subr.mxu0 0.0
          %2574 = vmatpush2.msra.mxu0 0.0
          %2575 = vmatprep.subr.mxu0 0.0
          %2576 = vmatpush2.msra.mxu0 0.0
          %2577 = vmatprep.subr.mxu0 0.0
          %2578 = vmatpush2.msra.mxu0 0.0
          %2579 = vmatprep.subr.mxu0 0.0
          %2580 = vmatpush2.msra.mxu0 0.0
          %2581 = vmatprep.subr.mxu0 0.0
          %2582 = vmatpush2.msra.mxu0 0.0
          %2583 = vmatprep.subr.mxu0 0.0
          %2584 = vmatpush2.msra.mxu0 0.0
          %2585 = vmatprep.mubr.f32.mxu0 0.0
          %2586 = vmatmul.mubr.f32.gmra.mxu0 %v2377
          %v2587 = vpop.f32.mrf.mxu0
          %v2588 = vadd.f32 %v2355, %v2587
          %v2589 = vpop.f32.mrf.mxu0
          %v2590 = vadd.f32 %v2359, %v2589
          %2591 = vdwg.mxu0
          %2592 = vmatprep.subr.mxu0 0.0
          %2593 = vmatpush1.msra.mxu0 0.0
          %2594 = vmatprep.subr.mxu0 0.0
          %2595 = vmatpush1.msra.mxu0 0.0
          %2596 = vmatprep.subr.mxu0 0.0
          %2597 = vmatpush1.msra.mxu0 0.0
          %2598 = vmatprep.subr.mxu0 0.0
          %2599 = vmatpush1.msra.mxu0 0.0
          %2600 = vmatprep.subr.mxu0 0.0
          %2601 = vmatpush1.msra.mxu0 0.0
          %2602 = vmatprep.subr.mxu0 0.0
          %2603 = vmatpush1.msra.mxu0 0.0
          %2604 = vmatprep.subr.mxu0 0.0
          %2605 = vmatpush1.msra.mxu0 0.0
          %2606 = vmatprep.subr.mxu0 0.0
          %2607 = vmatpush1.msra.mxu0 0.0
          %2608 = vmatprep.subr.mxu0 0.0
          %2609 = vmatpush1.msra.mxu0 0.0
          %2610 = vmatprep.subr.mxu0 0.0
          %2611 = vmatpush1.msra.mxu0 0.0
          %2612 = vmatprep.subr.mxu0 0.0
          %2613 = vmatpush1.msra.mxu0 0.0
          %2614 = vmatprep.subr.mxu0 0.0
          %2615 = vmatpush1.msra.mxu0 0.0
          %2616 = vmatprep.subr.mxu0 %v2333
          %2617 = vmatpush1.msra.mxu0 %v2332
          %2618 = vmatprep.subr.mxu0 %v2325
          %2619 = vmatpush1.msra.mxu0 %v2324
          %2620 = vmatprep.subr.mxu0 %v2317
          %2621 = vmatpush1.msra.mxu0 %v2316
          %2622 = vmatprep.subr.mxu0 %v2309
          %2623 = vmatpush1.msra.mxu0 %v2308
          %2624 = vmatprep.subr.mxu0 0.0
          %2625 = vmatpush2.msra.mxu0 0.0
          %2626 = vmatprep.subr.mxu0 0.0
          %2627 = vmatpush2.msra.mxu0 0.0
          %2628 = vmatprep.subr.mxu0 0.0
          %2629 = vmatpush2.msra.mxu0 0.0
          %2630 = vmatprep.subr.mxu0 0.0
          %2631 = vmatpush2.msra.mxu0 0.0
          %2632 = vmatprep.subr.mxu0 0.0
          %2633 = vmatpush2.msra.mxu0 0.0
          %2634 = vmatprep.subr.mxu0 0.0
          %2635 = vmatpush2.msra.mxu0 0.0
          %2636 = vmatprep.subr.mxu0 0.0
          %2637 = vmatpush2.msra.mxu0 0.0
          %2638 = vmatprep.subr.mxu0 0.0
          %2639 = vmatpush2.msra.mxu0 0.0
          %2640 = vmatprep.subr.mxu0 0.0
          %2641 = vmatpush2.msra.mxu0 0.0
          %2642 = vmatprep.subr.mxu0 0.0
          %2643 = vmatpush2.msra.mxu0 0.0
          %2644 = vmatprep.subr.mxu0 0.0
          %2645 = vmatpush2.msra.mxu0 0.0
          %2646 = vmatprep.subr.mxu0 0.0
          %2647 = vmatpush2.msra.mxu0 0.0
          %2648 = vmatprep.subr.mxu0 0.0
          %2649 = vmatpush2.msra.mxu0 0.0
          %2650 = vmatprep.subr.mxu0 0.0
          %2651 = vmatpush2.msra.mxu0 0.0
          %2652 = vmatprep.subr.mxu0 0.0
          %2653 = vmatpush2.msra.mxu0 0.0
          %2654 = vmatprep.subr.mxu0 0.0
          %2655 = vmatpush2.msra.mxu0 0.0
          %2656 = vmatprep.mubr.f32.mxu0 0.0
          %2657 = vmatmul.mubr.f32.gmra.mxu0 %v2377
          %v2658 = vpop.f32.mrf.mxu0
          %v2659 = vadd.f32 %v2363, %v2658
          %v2660 = vpop.f32.mrf.mxu0
          %v2661 = vadd.f32 %v2367, %v2660
          %2662 = vdwg.mxu0
          %v2663 = vld [vmem:[%s41] sm:$0xff]
          %v2664 = vld [vmem:[%s41 + $0x8] sm:$0xff]
          %v2665 = vld [vmem:[%s41 + $0x10] sm:$0xff]
          %v2666 = vld [vmem:[%s41 + $0x18] sm:$0xff]
          %v2667 = vld [vmem:[%s41 + $0x20] sm:$0xff]
          %v2668 = vld [vmem:[%s41 + $0x28] sm:$0xff]
          %v2669 = vld [vmem:[%s41 + $0x30] sm:$0xff]
          %v2670 = vld [vmem:[%s41 + $0x38] sm:$0xff]
          %v2671 = vld [vmem:[%s43] sm:$0x1]
          %v2673 = vlaneseq
          %v2674 = vshrl.u32 %v2673, 7
          %v2675 = vsub.s32 0, %v2674
          %v2676 = vrot.slane %v2671, %v2675
          %2678 = vmatprep.subr.mxu0 0.0
          %2679 = vmatpush1.msra.mxu0 0.0
          %2680 = vmatprep.subr.mxu0 0.0
          %2681 = vmatpush1.msra.mxu0 0.0
          %2682 = vmatprep.subr.mxu0 0.0
          %2683 = vmatpush1.msra.mxu0 0.0
          %2684 = vmatprep.subr.mxu0 0.0
          %2685 = vmatpush1.msra.mxu0 0.0
          %2686 = vmatprep.subr.mxu0 0.0
          %2687 = vmatpush1.msra.mxu0 0.0
          %2688 = vmatprep.subr.mxu0 0.0
          %2689 = vmatpush1.msra.mxu0 0.0
          %2690 = vmatprep.subr.mxu0 0.0
          %2691 = vmatpush1.msra.mxu0 0.0
          %2692 = vmatprep.subr.mxu0 0.0
          %2693 = vmatpush1.msra.mxu0 0.0
          %2694 = vmatprep.subr.mxu0 0.0
          %2695 = vmatpush1.msra.mxu0 %v2670
          %2696 = vmatprep.subr.mxu0 0.0
          %2697 = vmatpush1.msra.mxu0 %v2669
          %2698 = vmatprep.subr.mxu0 0.0
          %2699 = vmatpush1.msra.mxu0 %v2668
          %2700 = vmatprep.subr.mxu0 0.0
          %2701 = vmatpush1.msra.mxu0 %v2667
          %2702 = vmatprep.subr.mxu0 0.0
          %2703 = vmatpush1.msra.mxu0 %v2666
          %2704 = vmatprep.subr.mxu0 0.0
          %2705 = vmatpush1.msra.mxu0 %v2665
          %2706 = vmatprep.subr.mxu0 0.0
          %2707 = vmatpush1.msra.mxu0 %v2664
          %2708 = vmatprep.subr.mxu0 0.0
          %2709 = vmatpush1.msra.mxu0 %v2663
          %2710 = vmatprep.subr.mxu0 0.0
          %2711 = vmatpush2.msra.mxu0 0.0
          %2712 = vmatprep.subr.mxu0 0.0
          %2713 = vmatpush2.msra.mxu0 0.0
          %2714 = vmatprep.subr.mxu0 0.0
          %2715 = vmatpush2.msra.mxu0 0.0
          %2716 = vmatprep.subr.mxu0 0.0
          %2717 = vmatpush2.msra.mxu0 0.0
          %2718 = vmatprep.subr.mxu0 0.0
          %2719 = vmatpush2.msra.mxu0 0.0
          %2720 = vmatprep.subr.mxu0 0.0
          %2721 = vmatpush2.msra.mxu0 0.0
          %2722 = vmatprep.subr.mxu0 0.0
          %2723 = vmatpush2.msra.mxu0 0.0
          %2724 = vmatprep.subr.mxu0 0.0
          %2725 = vmatpush2.msra.mxu0 0.0
          %2726 = vmatprep.subr.mxu0 0.0
          %2727 = vmatpush2.msra.mxu0 0.0
          %2728 = vmatprep.subr.mxu0 0.0
          %2729 = vmatpush2.msra.mxu0 0.0
          %2730 = vmatprep.subr.mxu0 0.0
          %2731 = vmatpush2.msra.mxu0 0.0
          %2732 = vmatprep.subr.mxu0 0.0
          %2733 = vmatpush2.msra.mxu0 0.0
          %2734 = vmatprep.subr.mxu0 0.0
          %2735 = vmatpush2.msra.mxu0 0.0
          %2736 = vmatprep.subr.mxu0 0.0
          %2737 = vmatpush2.msra.mxu0 0.0
          %2738 = vmatprep.subr.mxu0 0.0
          %2739 = vmatpush2.msra.mxu0 0.0
          %2740 = vmatprep.subr.mxu0 0.0
          %2741 = vmatpush2.msra.mxu0 0.0
          %2742 = vmatprep.mubr.f32.mxu0 0.0
          %2743 = vmatmul.mubr.f32.gmra.mxu0 %v2139
          %v2744 = vpop.f32.mrf.mxu0
          %v2745 = vadd.f32 %v2676, %v2744
          %v2746 = vpop.f32.mrf.mxu0
          %2747 = vdwg.mxu0
          %v2748 = vcombine.low %v2446, %v2517
          %v2750 = vunpack.c.l.s4 1983009808
          %v2751 = vunpack.c.0.s8 %v2750
          %v2752 = vlaneseq
          %v2753 = vshrl.u32 %v2752, 7
          %v2754 = vsub.s32 %v2751, %v2753
          %v2755 = vrot.slane %v2748, %v2754
          %v2756 = vcombine.low %v2448, %v2519
          %v2758 = vunpack.c.l.s4 1983009808
          %v2759 = vunpack.c.0.s8 %v2758
          %v2760 = vlaneseq
          %v2761 = vshrl.u32 %v2760, 7
          %v2762 = vsub.s32 %v2759, %v2761
          %v2763 = vrot.slane %v2756, %v2762
          %v2764 = vcombine.low %v2588, %v2659
          %v2766 = vunpack.c.l.s4 1983009808
          %v2767 = vunpack.c.0.s8 %v2766
          %v2768 = vlaneseq
          %v2769 = vshrl.u32 %v2768, 7
          %v2770 = vsub.s32 %v2767, %v2769
          %v2771 = vrot.slane %v2764, %v2770
          %v2772 = vcombine.low %v2590, %v2661
          %v2774 = vunpack.c.l.s4 1983009808
          %v2775 = vunpack.c.0.s8 %v2774
          %v2776 = vlaneseq
          %v2777 = vshrl.u32 %v2776, 7
          %v2778 = vsub.s32 %v2775, %v2777
          %v2779 = vrot.slane %v2772, %v2778
          %v2780 = vcombine.low %v2755, %v2763
          %v2782 = vunpack.c.l.s4 1934713408
          %v2783 = vunpack.c.0.s8 %v2782
          %v2784 = vlaneseq
          %v2785 = vshrl.u32 %v2784, 7
          %v2786 = vsub.s32 %v2783, %v2785
          %v2787 = vrot.slane %v2780, %v2786
          %v2788 = vcombine.low %v2771, %v2779
          %v2790 = vunpack.c.l.s4 1934713408
          %v2791 = vunpack.c.0.s8 %v2790
          %v2792 = vlaneseq
          %v2793 = vshrl.u32 %v2792, 7
          %v2794 = vsub.s32 %v2791, %v2793
          %v2795 = vrot.slane %v2788, %v2794
          %v2796 = vcombine.low %v2787, %v2795
          %v2797 = vcombine.high %v2787, %v2795
          %v2800 = vunpack.c.l.s4 1966171168
          %v2801 = vunpack.c.0.s8 %v2800
          %v2802 = vlaneseq
          %v2803 = vshrl.u32 %v2802, 7
          %v2804 = vsub.s32 %v2801, %v2803
          %v2805 = vrot.slane %v2745, %v2804
          %v2806 = vcombine.high %v2805, %v2805
          %v2808 = vunpack.c.l.s4 1966171168
          %v2809 = vunpack.c.0.s8 %v2808
          %v2810 = vlaneseq
          %v2811 = vshrl.u32 %v2810, 7
          %v2812 = vsub.s32 %v2809, %v2811
          %v2813 = vrot.slane %v2805, %v2812
          %v2815 = vunpack.c.l.s4 1966171168
          %v2816 = vunpack.c.0.s8 %v2815
          %v2817 = vlaneseq
          %v2818 = vshrl.u32 %v2817, 7
          %v2819 = vsub.s32 %v2816, %v2818
          %v2820 = vrot.slane %v2806, %v2819
          %v2821 = vlaneseq
          %v2822 = vshrl.u32 %v2821, 7
          %v2823 = vsub.s32 0, %v2822
          %v2824 = vrot.slane %v2813, %v2823
          %v2825 = vlaneseq
          %v2826 = vshrl.u32 %v2825, 7
          %v2827 = vsub.s32 0, %v2826
          %v2828 = vrot.slane %v2820, %v2827
          %v2831 = vmul.f32 %v2796, %v2824
          %v2832 = vmul.f32 %v2797, %v2828
          %2833 = vadd.xlane.f32.xlu0 %v2831
          %v2834 = vpop.xlane.xlu0 %2833
          %2835 = vadd.xlane.f32.xlu0 %v2832
          %v2836 = vpop.xlane.xlu0 %2835
          %v2837 = vld [vmem:[%s45] sm:$0xff]
          %v2838 = vld [vmem:[%s45 + $0x8] sm:$0xff]
          %v2839 = vld [vmem:[%s45 + $0x10] sm:$0xff]
          %v2840 = vld [vmem:[%s45 + $0x18] sm:$0xff]
          %v2841 = vld [vmem:[%s45 + $0x20] sm:$0xff]
          %v2842 = vld [vmem:[%s45 + $0x28] sm:$0xff]
          %v2843 = vld [vmem:[%s45 + $0x30] sm:$0xff]
          %v2844 = vld [vmem:[%s45 + $0x38] sm:$0xff]
          %v2845 = vld [vmem:[%s47] sm:$0x1]
          %v2847 = vlaneseq
          %v2848 = vshrl.u32 %v2847, 7
          %v2849 = vsub.s32 0, %v2848
          %v2850 = vrot.slane %v2845, %v2849
          %2852 = vmatprep.subr.mxu0 0.0
          %2853 = vmatpush1.msra.mxu0 0.0
          %2854 = vmatprep.subr.mxu0 0.0
          %2855 = vmatpush1.msra.mxu0 0.0
          %2856 = vmatprep.subr.mxu0 0.0
          %2857 = vmatpush1.msra.mxu0 0.0
          %2858 = vmatprep.subr.mxu0 0.0
          %2859 = vmatpush1.msra.mxu0 0.0
          %2860 = vmatprep.subr.mxu0 0.0
          %2861 = vmatpush1.msra.mxu0 0.0
          %2862 = vmatprep.subr.mxu0 0.0
          %2863 = vmatpush1.msra.mxu0 0.0
          %2864 = vmatprep.subr.mxu0 0.0
          %2865 = vmatpush1.msra.mxu0 0.0
          %2866 = vmatprep.subr.mxu0 0.0
          %2867 = vmatpush1.msra.mxu0 0.0
          %2868 = vmatprep.subr.mxu0 0.0
          %2869 = vmatpush1.msra.mxu0 %v2844
          %2870 = vmatprep.subr.mxu0 0.0
          %2871 = vmatpush1.msra.mxu0 %v2843
          %2872 = vmatprep.subr.mxu0 0.0
          %2873 = vmatpush1.msra.mxu0 %v2842
          %2874 = vmatprep.subr.mxu0 0.0
          %2875 = vmatpush1.msra.mxu0 %v2841
          %2876 = vmatprep.subr.mxu0 0.0
          %2877 = vmatpush1.msra.mxu0 %v2840
          %2878 = vmatprep.subr.mxu0 0.0
          %2879 = vmatpush1.msra.mxu0 %v2839
          %2880 = vmatprep.subr.mxu0 0.0
          %2881 = vmatpush1.msra.mxu0 %v2838
          %2882 = vmatprep.subr.mxu0 0.0
          %2883 = vmatpush1.msra.mxu0 %v2837
          %2884 = vmatprep.subr.mxu0 0.0
          %2885 = vmatpush2.msra.mxu0 0.0
          %2886 = vmatprep.subr.mxu0 0.0
          %2887 = vmatpush2.msra.mxu0 0.0
          %2888 = vmatprep.subr.mxu0 0.0
          %2889 = vmatpush2.msra.mxu0 0.0
          %2890 = vmatprep.subr.mxu0 0.0
          %2891 = vmatpush2.msra.mxu0 0.0
          %2892 = vmatprep.subr.mxu0 0.0
          %2893 = vmatpush2.msra.mxu0 0.0
          %2894 = vmatprep.subr.mxu0 0.0
          %2895 = vmatpush2.msra.mxu0 0.0
          %2896 = vmatprep.subr.mxu0 0.0
          %2897 = vmatpush2.msra.mxu0 0.0
          %2898 = vmatprep.subr.mxu0 0.0
          %2899 = vmatpush2.msra.mxu0 0.0
          %2900 = vmatprep.subr.mxu0 0.0
          %2901 = vmatpush2.msra.mxu0 0.0
          %2902 = vmatprep.subr.mxu0 0.0
          %2903 = vmatpush2.msra.mxu0 0.0
          %2904 = vmatprep.subr.mxu0 0.0
          %2905 = vmatpush2.msra.mxu0 0.0
          %2906 = vmatprep.subr.mxu0 0.0
          %2907 = vmatpush2.msra.mxu0 0.0
          %2908 = vmatprep.subr.mxu0 0.0
          %2909 = vmatpush2.msra.mxu0 0.0
          %2910 = vmatprep.subr.mxu0 0.0
          %2911 = vmatpush2.msra.mxu0 0.0
          %2912 = vmatprep.subr.mxu0 0.0
          %2913 = vmatpush2.msra.mxu0 0.0
          %2914 = vmatprep.subr.mxu0 0.0
          %2915 = vmatpush2.msra.mxu0 0.0
          %2916 = vmatprep.mubr.f32.mxu0 0.0
          %2917 = vmatmul.mubr.f32.gmra.mxu0 %v2139
          %v2918 = vpop.f32.mrf.mxu0
          %v2919 = vadd.f32 %v2850, %v2918
          %v2920 = vpop.f32.mrf.mxu0
          %2921 = vdwg.mxu0
          %v2922 = vld [vmem:[%s49] sm:$0xff]
          %v2923 = vld [vmem:[%s49 + $0x8] sm:$0xff]
          %v2924 = vld [vmem:[%s49 + $0x10] sm:$0xff]
          %v2925 = vld [vmem:[%s49 + $0x18] sm:$0xff]
          %v2926 = vld [vmem:[%s51] sm:$0x1]
          %v2928 = vlaneseq
          %v2929 = vshrl.u32 %v2928, 7
          %v2930 = vsub.s32 0, %v2929
          %v2931 = vrot.slane %v2926, %v2930
          %v2934 = vsel %vm1167, %v2919, 0
          %2936 = vmatprep.subr.mxu0 0.0
          %2937 = vmatpush1.msra.mxu0 0.0
          %2938 = vmatprep.subr.mxu0 0.0
          %2939 = vmatpush1.msra.mxu0 0.0
          %2940 = vmatprep.subr.mxu0 0.0
          %2941 = vmatpush1.msra.mxu0 0.0
          %2942 = vmatprep.subr.mxu0 0.0
          %2943 = vmatpush1.msra.mxu0 0.0
          %2944 = vmatprep.subr.mxu0 0.0
          %2945 = vmatpush1.msra.mxu0 0.0
          %2946 = vmatprep.subr.mxu0 0.0
          %2947 = vmatpush1.msra.mxu0 0.0
          %2948 = vmatprep.subr.mxu0 0.0
          %2949 = vmatpush1.msra.mxu0 0.0
          %2950 = vmatprep.subr.mxu0 0.0
          %2951 = vmatpush1.msra.mxu0 0.0
          %2952 = vmatprep.subr.mxu0 0.0
          %2953 = vmatpush1.msra.mxu0 0.0
          %2954 = vmatprep.subr.mxu0 0.0
          %2955 = vmatpush1.msra.mxu0 0.0
          %2956 = vmatprep.subr.mxu0 0.0
          %2957 = vmatpush1.msra.mxu0 0.0
          %2958 = vmatprep.subr.mxu0 0.0
          %2959 = vmatpush1.msra.mxu0 0.0
          %2960 = vmatprep.subr.mxu0 0.0
          %2961 = vmatpush1.msra.mxu0 %v2925
          %2962 = vmatprep.subr.mxu0 0.0
          %2963 = vmatpush1.msra.mxu0 %v2924
          %2964 = vmatprep.subr.mxu0 0.0
          %2965 = vmatpush1.msra.mxu0 %v2923
          %2966 = vmatprep.subr.mxu0 0.0
          %2967 = vmatpush1.msra.mxu0 %v2922
          %2968 = vmatprep.subr.mxu0 0.0
          %2969 = vmatpush2.msra.mxu0 0.0
          %2970 = vmatprep.subr.mxu0 0.0
          %2971 = vmatpush2.msra.mxu0 0.0
          %2972 = vmatprep.subr.mxu0 0.0
          %2973 = vmatpush2.msra.mxu0 0.0
          %2974 = vmatprep.subr.mxu0 0.0
          %2975 = vmatpush2.msra.mxu0 0.0
          %2976 = vmatprep.subr.mxu0 0.0
          %2977 = vmatpush2.msra.mxu0 0.0
          %2978 = vmatprep.subr.mxu0 0.0
          %2979 = vmatpush2.msra.mxu0 0.0
          %2980 = vmatprep.subr.mxu0 0.0
          %2981 = vmatpush2.msra.mxu0 0.0
          %2982 = vmatprep.subr.mxu0 0.0
          %2983 = vmatpush2.msra.mxu0 0.0
          %2984 = vmatprep.subr.mxu0 0.0
          %2985 = vmatpush2.msra.mxu0 0.0
          %2986 = vmatprep.subr.mxu0 0.0
          %2987 = vmatpush2.msra.mxu0 0.0
          %2988 = vmatprep.subr.mxu0 0.0
          %2989 = vmatpush2.msra.mxu0 0.0
          %2990 = vmatprep.subr.mxu0 0.0
          %2991 = vmatpush2.msra.mxu0 0.0
          %2992 = vmatprep.subr.mxu0 0.0
          %2993 = vmatpush2.msra.mxu0 0.0
          %2994 = vmatprep.subr.mxu0 0.0
          %2995 = vmatpush2.msra.mxu0 0.0
          %2996 = vmatprep.subr.mxu0 0.0
          %2997 = vmatpush2.msra.mxu0 0.0
          %2998 = vmatprep.subr.mxu0 0.0
          %2999 = vmatpush2.msra.mxu0 0.0
          %3000 = vmatprep.mubr.f32.mxu0 0.0
          %3001 = vmatmul.mubr.f32.gmra.mxu0 %v2934
          %v3002 = vpop.f32.mrf.mxu0
          %v3003 = vadd.f32 %v2931, %v3002
          %v3004 = vpop.f32.mrf.mxu0
          %3005 = vdwg.mxu0
          %v3006 = vsub.f32 0.0, %v3003
          %v3007 = vmul.f32 %v3006, 1.442695
          %v3008 = vpow.pop %v3007
          %v3009 = vadd.f32 %v3008, 1.0
          %v3010 = vrcp.pop %v3009
          %v3011 = vmul.f32 1.0, %v3010
          %v3012 = vmul.f32 %v3003, %v3011
          %v3013 = vld [vmem:[%s53] sm:$0xff]
          %v3014 = vld [vmem:[%s53 + $0x8] sm:$0xff]
          %v3015 = vld [vmem:[%s53 + $0x10] sm:$0xff]
          %v3016 = vld [vmem:[%s53 + $0x18] sm:$0xff]
          %v3017 = vld [vmem:[%s53 + $0x20] sm:$0xff]
          %v3018 = vld [vmem:[%s53 + $0x28] sm:$0xff]
          %v3019 = vld [vmem:[%s53 + $0x30] sm:$0xff]
          %v3020 = vld [vmem:[%s53 + $0x38] sm:$0xff]
          %v3021 = vld [vmem:[%s53 + $0x40] sm:$0xff]
          %v3022 = vld [vmem:[%s53 + $0x48] sm:$0xff]
          %v3023 = vld [vmem:[%s53 + $0x50] sm:$0xff]
          %v3024 = vld [vmem:[%s53 + $0x58] sm:$0xff]
          %v3025 = vld [vmem:[%s53 + $0x60] sm:$0xff]
          %v3026 = vld [vmem:[%s53 + $0x68] sm:$0xff]
          %v3027 = vld [vmem:[%s53 + $0x70] sm:$0xff]
          %v3028 = vld [vmem:[%s53 + $0x78] sm:$0xff]
          %v3029 = vld [vmem:[%s53 + $0x80] sm:$0xff]
          %v3030 = vld [vmem:[%s53 + $0x88] sm:$0xff]
          %v3031 = vld [vmem:[%s53 + $0x90] sm:$0xff]
          %v3032 = vld [vmem:[%s53 + $0x98] sm:$0xff]
          %v3033 = vld [vmem:[%s53 + $0xa0] sm:$0xff]
          %v3034 = vld [vmem:[%s53 + $0xa8] sm:$0xff]
          %v3035 = vld [vmem:[%s53 + $0xb0] sm:$0xff]
          %v3036 = vld [vmem:[%s53 + $0xb8] sm:$0xff]
          %v3037 = vld [vmem:[%s53 + $0xc0] sm:$0xff]
          %v3038 = vld [vmem:[%s53 + $0xc8] sm:$0xff]
          %v3039 = vld [vmem:[%s53 + $0xd0] sm:$0xff]
          %v3040 = vld [vmem:[%s53 + $0xd8] sm:$0xff]
          %v3041 = vld [vmem:[%s53 + $0xe0] sm:$0xff]
          %v3042 = vld [vmem:[%s53 + $0xe8] sm:$0xff]
          %v3043 = vld [vmem:[%s53 + $0xf0] sm:$0xff]
          %v3044 = vld [vmem:[%s53 + $0xf8] sm:$0xff]
          %v3045 = vld [vmem:[%s55] sm:$0xff]
          %v3047 = vlaneseq
          %v3048 = vshrl.u32 %v3047, 7
          %v3049 = vsub.s32 0, %v3048
          %v3050 = vrot.slane %v3045, %v3049
          %v3051 = vlaneseq
          %v3052 = vshrl.u32 %v3051, 7
          %v3053 = vsub.s32 1, %v3052
          %v3054 = vrot.slane %v3045, %v3053
          %v3055 = vlaneseq
          %v3056 = vshrl.u32 %v3055, 7
          %v3057 = vsub.s32 2, %v3056
          %v3058 = vrot.slane %v3045, %v3057
          %v3059 = vlaneseq
          %v3060 = vshrl.u32 %v3059, 7
          %v3061 = vsub.s32 3, %v3060
          %v3062 = vrot.slane %v3045, %v3061
          %v3063 = vlaneseq
          %v3064 = vshrl.u32 %v3063, 7
          %v3065 = vsub.s32 4, %v3064
          %v3066 = vrot.slane %v3045, %v3065
          %v3067 = vlaneseq
          %v3068 = vshrl.u32 %v3067, 7
          %v3069 = vsub.s32 5, %v3068
          %v3070 = vrot.slane %v3045, %v3069
          %v3071 = vlaneseq
          %v3072 = vshrl.u32 %v3071, 7
          %v3073 = vsub.s32 6, %v3072
          %v3074 = vrot.slane %v3045, %v3073
          %v3075 = vlaneseq
          %v3076 = vshrl.u32 %v3075, 7
          %v3077 = vsub.s32 7, %v3076
          %v3078 = vrot.slane %v3045, %v3077
          %v3088 = vsel %vm1167, %v3012, 0
          %3090 = vmatprep.subr.mxu0 0.0
          %3091 = vmatpush1.msra.mxu0 0.0
          %3092 = vmatprep.subr.mxu0 0.0
          %3093 = vmatpush1.msra.mxu0 0.0
          %3094 = vmatprep.subr.mxu0 0.0
          %3095 = vmatpush1.msra.mxu0 0.0
          %3096 = vmatprep.subr.mxu0 0.0
          %3097 = vmatpush1.msra.mxu0 0.0
          %3098 = vmatprep.subr.mxu0 0.0
          %3099 = vmatpush1.msra.mxu0 0.0
          %3100 = vmatprep.subr.mxu0 0.0
          %3101 = vmatpush1.msra.mxu0 0.0
          %3102 = vmatprep.subr.mxu0 0.0
          %3103 = vmatpush1.msra.mxu0 0.0
          %3104 = vmatprep.subr.mxu0 0.0
          %3105 = vmatpush1.msra.mxu0 0.0
          %3106 = vmatprep.subr.mxu0 0.0
          %3107 = vmatpush1.msra.mxu0 0.0
          %3108 = vmatprep.subr.mxu0 0.0
          %3109 = vmatpush1.msra.mxu0 0.0
          %3110 = vmatprep.subr.mxu0 0.0
          %3111 = vmatpush1.msra.mxu0 0.0
          %3112 = vmatprep.subr.mxu0 0.0
          %3113 = vmatpush1.msra.mxu0 0.0
          %3114 = vmatprep.subr.mxu0 %v3038
          %3115 = vmatpush1.msra.mxu0 %v3037
          %3116 = vmatprep.subr.mxu0 %v3030
          %3117 = vmatpush1.msra.mxu0 %v3029
          %3118 = vmatprep.subr.mxu0 %v3022
          %3119 = vmatpush1.msra.mxu0 %v3021
          %3120 = vmatprep.subr.mxu0 %v3014
          %3121 = vmatpush1.msra.mxu0 %v3013
          %3122 = vmatprep.subr.mxu0 0.0
          %3123 = vmatpush2.msra.mxu0 0.0
          %3124 = vmatprep.subr.mxu0 0.0
          %3125 = vmatpush2.msra.mxu0 0.0
          %3126 = vmatprep.subr.mxu0 0.0
          %3127 = vmatpush2.msra.mxu0 0.0
          %3128 = vmatprep.subr.mxu0 0.0
          %3129 = vmatpush2.msra.mxu0 0.0
          %3130 = vmatprep.subr.mxu0 0.0
          %3131 = vmatpush2.msra.mxu0 0.0
          %3132 = vmatprep.subr.mxu0 0.0
          %3133 = vmatpush2.msra.mxu0 0.0
          %3134 = vmatprep.subr.mxu0 0.0
          %3135 = vmatpush2.msra.mxu0 0.0
          %3136 = vmatprep.subr.mxu0 0.0
          %3137 = vmatpush2.msra.mxu0 0.0
          %3138 = vmatprep.subr.mxu0 0.0
          %3139 = vmatpush2.msra.mxu0 0.0
          %3140 = vmatprep.subr.mxu0 0.0
          %3141 = vmatpush2.msra.mxu0 0.0
          %3142 = vmatprep.subr.mxu0 0.0
          %3143 = vmatpush2.msra.mxu0 0.0
          %3144 = vmatprep.subr.mxu0 0.0
          %3145 = vmatpush2.msra.mxu0 0.0
          %3146 = vmatprep.subr.mxu0 0.0
          %3147 = vmatpush2.msra.mxu0 0.0
          %3148 = vmatprep.subr.mxu0 0.0
          %3149 = vmatpush2.msra.mxu0 0.0
          %3150 = vmatprep.subr.mxu0 0.0
          %3151 = vmatpush2.msra.mxu0 0.0
          %3152 = vmatprep.subr.mxu0 0.0
          %3153 = vmatpush2.msra.mxu0 0.0
          %3154 = vmatprep.mubr.f32.mxu0 0.0
          %3155 = vmatmul.mubr.f32.gmra.mxu0 %v3088
          %v3156 = vpop.f32.mrf.mxu0
          %v3157 = vadd.f32 %v3050, %v3156
          %v3158 = vpop.f32.mrf.mxu0
          %v3159 = vadd.f32 %v3054, %v3158
          %3160 = vdwg.mxu0
          %3161 = vmatprep.subr.mxu0 0.0
          %3162 = vmatpush1.msra.mxu0 0.0
          %3163 = vmatprep.subr.mxu0 0.0
          %3164 = vmatpush1.msra.mxu0 0.0
          %3165 = vmatprep.subr.mxu0 0.0
          %3166 = vmatpush1.msra.mxu0 0.0
          %3167 = vmatprep.subr.mxu0 0.0
          %3168 = vmatpush1.msra.mxu0 0.0
          %3169 = vmatprep.subr.mxu0 0.0
          %3170 = vmatpush1.msra.mxu0 0.0
          %3171 = vmatprep.subr.mxu0 0.0
          %3172 = vmatpush1.msra.mxu0 0.0
          %3173 = vmatprep.subr.mxu0 0.0
          %3174 = vmatpush1.msra.mxu0 0.0
          %3175 = vmatprep.subr.mxu0 0.0
          %3176 = vmatpush1.msra.mxu0 0.0
          %3177 = vmatprep.subr.mxu0 0.0
          %3178 = vmatpush1.msra.mxu0 0.0
          %3179 = vmatprep.subr.mxu0 0.0
          %3180 = vmatpush1.msra.mxu0 0.0
          %3181 = vmatprep.subr.mxu0 0.0
          %3182 = vmatpush1.msra.mxu0 0.0
          %3183 = vmatprep.subr.mxu0 0.0
          %3184 = vmatpush1.msra.mxu0 0.0
          %3185 = vmatprep.subr.mxu0 %v3040
          %3186 = vmatpush1.msra.mxu0 %v3039
          %3187 = vmatprep.subr.mxu0 %v3032
          %3188 = vmatpush1.msra.mxu0 %v3031
          %3189 = vmatprep.subr.mxu0 %v3024
          %3190 = vmatpush1.msra.mxu0 %v3023
          %3191 = vmatprep.subr.mxu0 %v3016
          %3192 = vmatpush1.msra.mxu0 %v3015
          %3193 = vmatprep.subr.mxu0 0.0
          %3194 = vmatpush2.msra.mxu0 0.0
          %3195 = vmatprep.subr.mxu0 0.0
          %3196 = vmatpush2.msra.mxu0 0.0
          %3197 = vmatprep.subr.mxu0 0.0
          %3198 = vmatpush2.msra.mxu0 0.0
          %3199 = vmatprep.subr.mxu0 0.0
          %3200 = vmatpush2.msra.mxu0 0.0
          %3201 = vmatprep.subr.mxu0 0.0
          %3202 = vmatpush2.msra.mxu0 0.0
          %3203 = vmatprep.subr.mxu0 0.0
          %3204 = vmatpush2.msra.mxu0 0.0
          %3205 = vmatprep.subr.mxu0 0.0
          %3206 = vmatpush2.msra.mxu0 0.0
          %3207 = vmatprep.subr.mxu0 0.0
          %3208 = vmatpush2.msra.mxu0 0.0
          %3209 = vmatprep.subr.mxu0 0.0
          %3210 = vmatpush2.msra.mxu0 0.0
          %3211 = vmatprep.subr.mxu0 0.0
          %3212 = vmatpush2.msra.mxu0 0.0
          %3213 = vmatprep.subr.mxu0 0.0
          %3214 = vmatpush2.msra.mxu0 0.0
          %3215 = vmatprep.subr.mxu0 0.0
          %3216 = vmatpush2.msra.mxu0 0.0
          %3217 = vmatprep.subr.mxu0 0.0
          %3218 = vmatpush2.msra.mxu0 0.0
          %3219 = vmatprep.subr.mxu0 0.0
          %3220 = vmatpush2.msra.mxu0 0.0
          %3221 = vmatprep.subr.mxu0 0.0
          %3222 = vmatpush2.msra.mxu0 0.0
          %3223 = vmatprep.subr.mxu0 0.0
          %3224 = vmatpush2.msra.mxu0 0.0
          %3225 = vmatprep.mubr.f32.mxu0 0.0
          %3226 = vmatmul.mubr.f32.gmra.mxu0 %v3088
          %v3227 = vpop.f32.mrf.mxu0
          %v3228 = vadd.f32 %v3058, %v3227
          %v3229 = vpop.f32.mrf.mxu0
          %v3230 = vadd.f32 %v3062, %v3229
          %3231 = vdwg.mxu0
          %3232 = vmatprep.subr.mxu0 0.0
          %3233 = vmatpush1.msra.mxu0 0.0
          %3234 = vmatprep.subr.mxu0 0.0
          %3235 = vmatpush1.msra.mxu0 0.0
          %3236 = vmatprep.subr.mxu0 0.0
          %3237 = vmatpush1.msra.mxu0 0.0
          %3238 = vmatprep.subr.mxu0 0.0
          %3239 = vmatpush1.msra.mxu0 0.0
          %3240 = vmatprep.subr.mxu0 0.0
          %3241 = vmatpush1.msra.mxu0 0.0
          %3242 = vmatprep.subr.mxu0 0.0
          %3243 = vmatpush1.msra.mxu0 0.0
          %3244 = vmatprep.subr.mxu0 0.0
          %3245 = vmatpush1.msra.mxu0 0.0
          %3246 = vmatprep.subr.mxu0 0.0
          %3247 = vmatpush1.msra.mxu0 0.0
          %3248 = vmatprep.subr.mxu0 0.0
          %3249 = vmatpush1.msra.mxu0 0.0
          %3250 = vmatprep.subr.mxu0 0.0
          %3251 = vmatpush1.msra.mxu0 0.0
          %3252 = vmatprep.subr.mxu0 0.0
          %3253 = vmatpush1.msra.mxu0 0.0
          %3254 = vmatprep.subr.mxu0 0.0
          %3255 = vmatpush1.msra.mxu0 0.0
          %3256 = vmatprep.subr.mxu0 %v3042
          %3257 = vmatpush1.msra.mxu0 %v3041
          %3258 = vmatprep.subr.mxu0 %v3034
          %3259 = vmatpush1.msra.mxu0 %v3033
          %3260 = vmatprep.subr.mxu0 %v3026
          %3261 = vmatpush1.msra.mxu0 %v3025
          %3262 = vmatprep.subr.mxu0 %v3018
          %3263 = vmatpush1.msra.mxu0 %v3017
          %3264 = vmatprep.subr.mxu0 0.0
          %3265 = vmatpush2.msra.mxu0 0.0
          %3266 = vmatprep.subr.mxu0 0.0
          %3267 = vmatpush2.msra.mxu0 0.0
          %3268 = vmatprep.subr.mxu0 0.0
          %3269 = vmatpush2.msra.mxu0 0.0
          %3270 = vmatprep.subr.mxu0 0.0
          %3271 = vmatpush2.msra.mxu0 0.0
          %3272 = vmatprep.subr.mxu0 0.0
          %3273 = vmatpush2.msra.mxu0 0.0
          %3274 = vmatprep.subr.mxu0 0.0
          %3275 = vmatpush2.msra.mxu0 0.0
          %3276 = vmatprep.subr.mxu0 0.0
          %3277 = vmatpush2.msra.mxu0 0.0
          %3278 = vmatprep.subr.mxu0 0.0
          %3279 = vmatpush2.msra.mxu0 0.0
          %3280 = vmatprep.subr.mxu0 0.0
          %3281 = vmatpush2.msra.mxu0 0.0
          %3282 = vmatprep.subr.mxu0 0.0
          %3283 = vmatpush2.msra.mxu0 0.0
          %3284 = vmatprep.subr.mxu0 0.0
          %3285 = vmatpush2.msra.mxu0 0.0
          %3286 = vmatprep.subr.mxu0 0.0
          %3287 = vmatpush2.msra.mxu0 0.0
          %3288 = vmatprep.subr.mxu0 0.0
          %3289 = vmatpush2.msra.mxu0 0.0
          %3290 = vmatprep.subr.mxu0 0.0
          %3291 = vmatpush2.msra.mxu0 0.0
          %3292 = vmatprep.subr.mxu0 0.0
          %3293 = vmatpush2.msra.mxu0 0.0
          %3294 = vmatprep.subr.mxu0 0.0
          %3295 = vmatpush2.msra.mxu0 0.0
          %3296 = vmatprep.mubr.f32.mxu0 0.0
          %3297 = vmatmul.mubr.f32.gmra.mxu0 %v3088
          %v3298 = vpop.f32.mrf.mxu0
          %v3299 = vadd.f32 %v3066, %v3298
          %v3300 = vpop.f32.mrf.mxu0
          %v3301 = vadd.f32 %v3070, %v3300
          %3302 = vdwg.mxu0
          %3303 = vmatprep.subr.mxu0 0.0
          %3304 = vmatpush1.msra.mxu0 0.0
          %3305 = vmatprep.subr.mxu0 0.0
          %3306 = vmatpush1.msra.mxu0 0.0
          %3307 = vmatprep.subr.mxu0 0.0
          %3308 = vmatpush1.msra.mxu0 0.0
          %3309 = vmatprep.subr.mxu0 0.0
          %3310 = vmatpush1.msra.mxu0 0.0
          %3311 = vmatprep.subr.mxu0 0.0
          %3312 = vmatpush1.msra.mxu0 0.0
          %3313 = vmatprep.subr.mxu0 0.0
          %3314 = vmatpush1.msra.mxu0 0.0
          %3315 = vmatprep.subr.mxu0 0.0
          %3316 = vmatpush1.msra.mxu0 0.0
          %3317 = vmatprep.subr.mxu0 0.0
          %3318 = vmatpush1.msra.mxu0 0.0
          %3319 = vmatprep.subr.mxu0 0.0
          %3320 = vmatpush1.msra.mxu0 0.0
          %3321 = vmatprep.subr.mxu0 0.0
          %3322 = vmatpush1.msra.mxu0 0.0
          %3323 = vmatprep.subr.mxu0 0.0
          %3324 = vmatpush1.msra.mxu0 0.0
          %3325 = vmatprep.subr.mxu0 0.0
          %3326 = vmatpush1.msra.mxu0 0.0
          %3327 = vmatprep.subr.mxu0 %v3044
          %3328 = vmatpush1.msra.mxu0 %v3043
          %3329 = vmatprep.subr.mxu0 %v3036
          %3330 = vmatpush1.msra.mxu0 %v3035
          %3331 = vmatprep.subr.mxu0 %v3028
          %3332 = vmatpush1.msra.mxu0 %v3027
          %3333 = vmatprep.subr.mxu0 %v3020
          %3334 = vmatpush1.msra.mxu0 %v3019
          %3335 = vmatprep.subr.mxu0 0.0
          %3336 = vmatpush2.msra.mxu0 0.0
          %3337 = vmatprep.subr.mxu0 0.0
          %3338 = vmatpush2.msra.mxu0 0.0
          %3339 = vmatprep.subr.mxu0 0.0
          %3340 = vmatpush2.msra.mxu0 0.0
          %3341 = vmatprep.subr.mxu0 0.0
          %3342 = vmatpush2.msra.mxu0 0.0
          %3343 = vmatprep.subr.mxu0 0.0
          %3344 = vmatpush2.msra.mxu0 0.0
          %3345 = vmatprep.subr.mxu0 0.0
          %3346 = vmatpush2.msra.mxu0 0.0
          %3347 = vmatprep.subr.mxu0 0.0
          %3348 = vmatpush2.msra.mxu0 0.0
          %3349 = vmatprep.subr.mxu0 0.0
          %3350 = vmatpush2.msra.mxu0 0.0
          %3351 = vmatprep.subr.mxu0 0.0
          %3352 = vmatpush2.msra.mxu0 0.0
          %3353 = vmatprep.subr.mxu0 0.0
          %3354 = vmatpush2.msra.mxu0 0.0
          %3355 = vmatprep.subr.mxu0 0.0
          %3356 = vmatpush2.msra.mxu0 0.0
          %3357 = vmatprep.subr.mxu0 0.0
          %3358 = vmatpush2.msra.mxu0 0.0
          %3359 = vmatprep.subr.mxu0 0.0
          %3360 = vmatpush2.msra.mxu0 0.0
          %3361 = vmatprep.subr.mxu0 0.0
          %3362 = vmatpush2.msra.mxu0 0.0
          %3363 = vmatprep.subr.mxu0 0.0
          %3364 = vmatpush2.msra.mxu0 0.0
          %3365 = vmatprep.subr.mxu0 0.0
          %3366 = vmatpush2.msra.mxu0 0.0
          %3367 = vmatprep.mubr.f32.mxu0 0.0
          %3368 = vmatmul.mubr.f32.gmra.mxu0 %v3088
          %v3369 = vpop.f32.mrf.mxu0
          %v3370 = vadd.f32 %v3074, %v3369
          %v3371 = vpop.f32.mrf.mxu0
          %v3372 = vadd.f32 %v3078, %v3371
          %3373 = vdwg.mxu0
          %v3374 = vld [vmem:[%s57] sm:$0xff]
          %v3375 = vld [vmem:[%s57 + $0x8] sm:$0xff]
          %v3376 = vld [vmem:[%s57 + $0x10] sm:$0xff]
          %v3377 = vld [vmem:[%s57 + $0x18] sm:$0xff]
          %v3378 = vld [vmem:[%s57 + $0x20] sm:$0xff]
          %v3379 = vld [vmem:[%s57 + $0x28] sm:$0xff]
          %v3380 = vld [vmem:[%s57 + $0x30] sm:$0xff]
          %v3381 = vld [vmem:[%s57 + $0x38] sm:$0xff]
          %v3382 = vld [vmem:[%s59] sm:$0x1]
          %v3384 = vlaneseq
          %v3385 = vshrl.u32 %v3384, 7
          %v3386 = vsub.s32 0, %v3385
          %v3387 = vrot.slane %v3382, %v3386
          %3389 = vmatprep.subr.mxu0 0.0
          %3390 = vmatpush1.msra.mxu0 0.0
          %3391 = vmatprep.subr.mxu0 0.0
          %3392 = vmatpush1.msra.mxu0 0.0
          %3393 = vmatprep.subr.mxu0 0.0
          %3394 = vmatpush1.msra.mxu0 0.0
          %3395 = vmatprep.subr.mxu0 0.0
          %3396 = vmatpush1.msra.mxu0 0.0
          %3397 = vmatprep.subr.mxu0 0.0
          %3398 = vmatpush1.msra.mxu0 0.0
          %3399 = vmatprep.subr.mxu0 0.0
          %3400 = vmatpush1.msra.mxu0 0.0
          %3401 = vmatprep.subr.mxu0 0.0
          %3402 = vmatpush1.msra.mxu0 0.0
          %3403 = vmatprep.subr.mxu0 0.0
          %3404 = vmatpush1.msra.mxu0 0.0
          %3405 = vmatprep.subr.mxu0 0.0
          %3406 = vmatpush1.msra.mxu0 %v3381
          %3407 = vmatprep.subr.mxu0 0.0
          %3408 = vmatpush1.msra.mxu0 %v3380
          %3409 = vmatprep.subr.mxu0 0.0
          %3410 = vmatpush1.msra.mxu0 %v3379
          %3411 = vmatprep.subr.mxu0 0.0
          %3412 = vmatpush1.msra.mxu0 %v3378
          %3413 = vmatprep.subr.mxu0 0.0
          %3414 = vmatpush1.msra.mxu0 %v3377
          %3415 = vmatprep.subr.mxu0 0.0
          %3416 = vmatpush1.msra.mxu0 %v3376
          %3417 = vmatprep.subr.mxu0 0.0
          %3418 = vmatpush1.msra.mxu0 %v3375
          %3419 = vmatprep.subr.mxu0 0.0
          %3420 = vmatpush1.msra.mxu0 %v3374
          %3421 = vmatprep.subr.mxu0 0.0
          %3422 = vmatpush2.msra.mxu0 0.0
          %3423 = vmatprep.subr.mxu0 0.0
          %3424 = vmatpush2.msra.mxu0 0.0
          %3425 = vmatprep.subr.mxu0 0.0
          %3426 = vmatpush2.msra.mxu0 0.0
          %3427 = vmatprep.subr.mxu0 0.0
          %3428 = vmatpush2.msra.mxu0 0.0
          %3429 = vmatprep.subr.mxu0 0.0
          %3430 = vmatpush2.msra.mxu0 0.0
          %3431 = vmatprep.subr.mxu0 0.0
          %3432 = vmatpush2.msra.mxu0 0.0
          %3433 = vmatprep.subr.mxu0 0.0
          %3434 = vmatpush2.msra.mxu0 0.0
          %3435 = vmatprep.subr.mxu0 0.0
          %3436 = vmatpush2.msra.mxu0 0.0
          %3437 = vmatprep.subr.mxu0 0.0
          %3438 = vmatpush2.msra.mxu0 0.0
          %3439 = vmatprep.subr.mxu0 0.0
          %3440 = vmatpush2.msra.mxu0 0.0
          %3441 = vmatprep.subr.mxu0 0.0
          %3442 = vmatpush2.msra.mxu0 0.0
          %3443 = vmatprep.subr.mxu0 0.0
          %3444 = vmatpush2.msra.mxu0 0.0
          %3445 = vmatprep.subr.mxu0 0.0
          %3446 = vmatpush2.msra.mxu0 0.0
          %3447 = vmatprep.subr.mxu0 0.0
          %3448 = vmatpush2.msra.mxu0 0.0
          %3449 = vmatprep.subr.mxu0 0.0
          %3450 = vmatpush2.msra.mxu0 0.0
          %3451 = vmatprep.subr.mxu0 0.0
          %3452 = vmatpush2.msra.mxu0 0.0
          %3453 = vmatprep.mubr.f32.mxu0 0.0
          %3454 = vmatmul.mubr.f32.gmra.mxu0 %v2139
          %v3455 = vpop.f32.mrf.mxu0
          %v3456 = vadd.f32 %v3387, %v3455
          %v3457 = vpop.f32.mrf.mxu0
          %3458 = vdwg.mxu0
          %v3459 = vcombine.low %v3157, %v3228
          %v3461 = vunpack.c.l.s4 1983009808
          %v3462 = vunpack.c.0.s8 %v3461
          %v3463 = vlaneseq
          %v3464 = vshrl.u32 %v3463, 7
          %v3465 = vsub.s32 %v3462, %v3464
          %v3466 = vrot.slane %v3459, %v3465
          %v3467 = vcombine.low %v3159, %v3230
          %v3469 = vunpack.c.l.s4 1983009808
          %v3470 = vunpack.c.0.s8 %v3469
          %v3471 = vlaneseq
          %v3472 = vshrl.u32 %v3471, 7
          %v3473 = vsub.s32 %v3470, %v3472
          %v3474 = vrot.slane %v3467, %v3473
          %v3475 = vcombine.low %v3299, %v3370
          %v3477 = vunpack.c.l.s4 1983009808
          %v3478 = vunpack.c.0.s8 %v3477
          %v3479 = vlaneseq
          %v3480 = vshrl.u32 %v3479, 7
          %v3481 = vsub.s32 %v3478, %v3480
          %v3482 = vrot.slane %v3475, %v3481
          %v3483 = vcombine.low %v3301, %v3372
          %v3485 = vunpack.c.l.s4 1983009808
          %v3486 = vunpack.c.0.s8 %v3485
          %v3487 = vlaneseq
          %v3488 = vshrl.u32 %v3487, 7
          %v3489 = vsub.s32 %v3486, %v3488
          %v3490 = vrot.slane %v3483, %v3489
          %v3491 = vcombine.low %v3466, %v3474
          %v3493 = vunpack.c.l.s4 1934713408
          %v3494 = vunpack.c.0.s8 %v3493
          %v3495 = vlaneseq
          %v3496 = vshrl.u32 %v3495, 7
          %v3497 = vsub.s32 %v3494, %v3496
          %v3498 = vrot.slane %v3491, %v3497
          %v3499 = vcombine.low %v3482, %v3490
          %v3501 = vunpack.c.l.s4 1934713408
          %v3502 = vunpack.c.0.s8 %v3501
          %v3503 = vlaneseq
          %v3504 = vshrl.u32 %v3503, 7
          %v3505 = vsub.s32 %v3502, %v3504
          %v3506 = vrot.slane %v3499, %v3505
          %v3507 = vcombine.low %v3498, %v3506
          %v3508 = vcombine.high %v3498, %v3506
          %v3511 = vunpack.c.l.s4 1966171168
          %v3512 = vunpack.c.0.s8 %v3511
          %v3513 = vlaneseq
          %v3514 = vshrl.u32 %v3513, 7
          %v3515 = vsub.s32 %v3512, %v3514
          %v3516 = vrot.slane %v3456, %v3515
          %v3517 = vcombine.high %v3516, %v3516
          %v3519 = vunpack.c.l.s4 1966171168
          %v3520 = vunpack.c.0.s8 %v3519
          %v3521 = vlaneseq
          %v3522 = vshrl.u32 %v3521, 7
          %v3523 = vsub.s32 %v3520, %v3522
          %v3524 = vrot.slane %v3516, %v3523
          %v3526 = vunpack.c.l.s4 1966171168
          %v3527 = vunpack.c.0.s8 %v3526
          %v3528 = vlaneseq
          %v3529 = vshrl.u32 %v3528, 7
          %v3530 = vsub.s32 %v3527, %v3529
          %v3531 = vrot.slane %v3517, %v3530
          %v3532 = vlaneseq
          %v3533 = vshrl.u32 %v3532, 7
          %v3534 = vsub.s32 0, %v3533
          %v3535 = vrot.slane %v3524, %v3534
          %v3536 = vlaneseq
          %v3537 = vshrl.u32 %v3536, 7
          %v3538 = vsub.s32 0, %v3537
          %v3539 = vrot.slane %v3531, %v3538
          %v3542 = vmul.f32 %v3507, %v3535
          %v3543 = vmul.f32 %v3508, %v3539
          %3544 = vadd.xlane.f32.xlu0 %v3542
          %v3545 = vpop.xlane.xlu0 %3544
          %3546 = vadd.xlane.f32.xlu0 %v3543
          %v3547 = vpop.xlane.xlu0 %3546
          %v3548 = vld [vmem:[%s65] sm:$0x3]
          %v3549 = vmul.f32 %v2122, %v3548
          %v3550 = vld [vmem:[%s61] sm:$0xff]
          %v3551 = vld [vmem:[%s61 + $0x8] sm:$0xff]
          %v3552 = vld [vmem:[%s61 + $0x10] sm:$0xff]
          %v3553 = vld [vmem:[%s61 + $0x18] sm:$0xff]
          %v3554 = vld [vmem:[%s61 + $0x20] sm:$0xff]
          %v3555 = vld [vmem:[%s61 + $0x28] sm:$0xff]
          %v3556 = vld [vmem:[%s61 + $0x30] sm:$0xff]
          %v3557 = vld [vmem:[%s61 + $0x38] sm:$0xff]
          %v3558 = vld [vmem:[%s63] sm:$0x1]
          %v3560 = vlaneseq
          %v3561 = vshrl.u32 %v3560, 7
          %v3562 = vsub.s32 0, %v3561
          %v3563 = vrot.slane %v3558, %v3562
          %v3566 = vsel %vm1608, %v3549, 0
          %3568 = vmatprep.subr.mxu0 0.0
          %3569 = vmatpush1.msra.mxu0 0.0
          %3570 = vmatprep.subr.mxu0 0.0
          %3571 = vmatpush1.msra.mxu0 0.0
          %3572 = vmatprep.subr.mxu0 0.0
          %3573 = vmatpush1.msra.mxu0 0.0
          %3574 = vmatprep.subr.mxu0 0.0
          %3575 = vmatpush1.msra.mxu0 0.0
          %3576 = vmatprep.subr.mxu0 0.0
          %3577 = vmatpush1.msra.mxu0 0.0
          %3578 = vmatprep.subr.mxu0 0.0
          %3579 = vmatpush1.msra.mxu0 0.0
          %3580 = vmatprep.subr.mxu0 0.0
          %3581 = vmatpush1.msra.mxu0 0.0
          %3582 = vmatprep.subr.mxu0 0.0
          %3583 = vmatpush1.msra.mxu0 0.0
          %3584 = vmatprep.subr.mxu0 0.0
          %3585 = vmatpush1.msra.mxu0 %v3557
          %3586 = vmatprep.subr.mxu0 0.0
          %3587 = vmatpush1.msra.mxu0 %v3556
          %3588 = vmatprep.subr.mxu0 0.0
          %3589 = vmatpush1.msra.mxu0 %v3555
          %3590 = vmatprep.subr.mxu0 0.0
          %3591 = vmatpush1.msra.mxu0 %v3554
          %3592 = vmatprep.subr.mxu0 0.0
          %3593 = vmatpush1.msra.mxu0 %v3553
          %3594 = vmatprep.subr.mxu0 0.0
          %3595 = vmatpush1.msra.mxu0 %v3552
          %3596 = vmatprep.subr.mxu0 0.0
          %3597 = vmatpush1.msra.mxu0 %v3551
          %3598 = vmatprep.subr.mxu0 0.0
          %3599 = vmatpush1.msra.mxu0 %v3550
          %3600 = vmatprep.subr.mxu0 0.0
          %3601 = vmatpush2.msra.mxu0 0.0
          %3602 = vmatprep.subr.mxu0 0.0
          %3603 = vmatpush2.msra.mxu0 0.0
          %3604 = vmatprep.subr.mxu0 0.0
          %3605 = vmatpush2.msra.mxu0 0.0
          %3606 = vmatprep.subr.mxu0 0.0
          %3607 = vmatpush2.msra.mxu0 0.0
          %3608 = vmatprep.subr.mxu0 0.0
          %3609 = vmatpush2.msra.mxu0 0.0
          %3610 = vmatprep.subr.mxu0 0.0
          %3611 = vmatpush2.msra.mxu0 0.0
          %3612 = vmatprep.subr.mxu0 0.0
          %3613 = vmatpush2.msra.mxu0 0.0
          %3614 = vmatprep.subr.mxu0 0.0
          %3615 = vmatpush2.msra.mxu0 0.0
          %3616 = vmatprep.subr.mxu0 0.0
          %3617 = vmatpush2.msra.mxu0 0.0
          %3618 = vmatprep.subr.mxu0 0.0
          %3619 = vmatpush2.msra.mxu0 0.0
          %3620 = vmatprep.subr.mxu0 0.0
          %3621 = vmatpush2.msra.mxu0 0.0
          %3622 = vmatprep.subr.mxu0 0.0
          %3623 = vmatpush2.msra.mxu0 0.0
          %3624 = vmatprep.subr.mxu0 0.0
          %3625 = vmatpush2.msra.mxu0 0.0
          %3626 = vmatprep.subr.mxu0 0.0
          %3627 = vmatpush2.msra.mxu0 0.0
          %3628 = vmatprep.subr.mxu0 0.0
          %3629 = vmatpush2.msra.mxu0 0.0
          %3630 = vmatprep.subr.mxu0 0.0
          %3631 = vmatpush2.msra.mxu0 0.0
          %3632 = vmatprep.mubr.f32.mxu0 0.0
          %3633 = vmatmul.mubr.f32.gmra.mxu0 %v3566
          %v3634 = vpop.f32.mrf.mxu0
          %v3635 = vadd.f32 %v3563, %v3634
          %v3636 = vpop.f32.mrf.mxu0
          %3637 = vdwg.mxu0
          %v3640 = vlaneseq
          %v3641 = vshrl.u32 %v3640, 7
          %v3642 = vsub.s32 %v2063, %v3641
          %v3643 = vrot.slane %v2834, %v3642
          %v3644 = vlaneseq
          %v3645 = vshrl.u32 %v3644, 7
          %v3646 = vsub.s32 %v2063, %v3645
          %v3647 = vrot.slane %v2836, %v3646
          %v3648 = vsel %vm2072, %v3647, %v3643
          %v3650 = vadd.f32 %v3635, %v3648
          %v3653 = vlaneseq
          %v3654 = vshrl.u32 %v3653, 7
          %v3655 = vsub.s32 %v2063, %v3654
          %v3656 = vrot.slane %v3545, %v3655
          %v3657 = vlaneseq
          %v3658 = vshrl.u32 %v3657, 7
          %v3659 = vsub.s32 %v2063, %v3658
          %v3660 = vrot.slane %v3547, %v3659
          %v3661 = vsel %vm2072, %v3660, %v3656
          %v3663 = vadd.f32 %v3650, %v3661
          %vm3664 = vcmask 58368
          %3665 = vst.msk [vmem:[#allocation3] sm:$0x3] %vm3664, %v3663
        $region160: #{hyper_atloc_forward.1} parent=151 // pred_fallthru
          _
        // Predicated region
        $region161: #{hyper_atloc_forward.1} parent=151 // pred_check
          %p3666 = pneg %p795
        $region162: #{hyper_atloc_forward.1} parent=151 // pred_check_branch
          %3668 = sbr.rel (%p3666) target = $region164
        $region163: #{hyper_atloc_forward.1} parent=151 // pred_region
          %s3670 = ssub.s32 32, 32
          %3671 = vsyncadd [#allocation4], %s3670
          %s3673 = sshll.u32 [#allocation3], 4
          %s3674 = int_to_ptr.vmem [resolvable:$true] %s3673
          %3676 = dma.vmem_to_hbm [thread:$0]  %s3674, 32, %s67, [#allocation4]
        $region164: #{hyper_atloc_forward.1} parent=151 // pred_fallthru
          _
        // Predicated region
        $region165: #{hyper_atloc_forward.1} parent=151 // pred_check
          %p3677 = pneg %p795
        $region166: #{hyper_atloc_forward.1} parent=151 // pred_check_branch
          %3679 = sbr.rel (%p3677) target = $region168
        $region167: #{hyper_atloc_forward.1} parent=151 // pred_region
          %3680 = dma.done [#allocation4], 32
        $region168: #{hyper_atloc_forward.1} parent=151 // pred_fallthru
          _
      $region152: #{hyper_atloc_forward.1} parent=5 // pred_fallthru
        _
      %p3681 = scmp.le.s32.totalorder 2, %s74
      // Predicated region
      $region169: #{hyper_atloc_forward.1} parent=5 // pred_check
        %p3682 = pneg %p3681
      $region170: #{hyper_atloc_forward.1} parent=5 // pred_check_branch
        %3684 = sbr.rel (%p3682) target = $region172
      $region171: #{hyper_atloc_forward.1} parent=5 // pred_region
        %s3685 = ssub.s32 %s74, 2
      $region172: #{hyper_atloc_forward.1} parent=5 // pred_fallthru
        _
    $region6: #{hyper_atloc_forward.1} parent=1 // loop_footer
      %s78 = sadd.s32 1, %s74
    $region7: #{hyper_atloc_forward.1} parent=1 // loop_footer_branch
      %73 = sbr.rel target = $region3
    $region8: #{hyper_atloc_forward.1} parent=1 // loop_exit
      _
    %3686 = vsyncpa [#allocation4], 1
    %s3687 = scalar_lea.sflag [#allocation4], 1
    %3688 = vsyncpa %s3687, 1

</llo_original>
